<compile_context>
chip_gen: v7x
topology: tpu7x:2x2x1
jax: 0.10.0
libtpu: 0.0.40
codegen_flags: <defaults>
</compile_context>

<pallas_src>
import functools

import jax
import jax.numpy as jnp
from jax import lax
from jax.experimental import pallas as pl
from jax.experimental.pallas import tpu as pltpu

KH = KW = 3
PAD = 1
BN_EPS = 1e-5
PCONV_EPS = 1e-8
LANE = 128


def _round_up(x, m):
    return (x + m - 1) // m * m


def _pick_tile_rows(h, w, cin, cout_p):
    """Largest divisor TH of H whose double-buffered tiles stay well inside VMEM."""
    budget = 4 * 1024 * 1024  # conservative so it also fits v7x (64 MiB) / v5e scoped VMEM
    best = 1
    for th in range(1, h + 1):
        if h % th:
            continue
        rows = th * w
        tile_bytes = 4 * (
            2 * 2 * (th + 2 * PAD) * (w + 2 * PAD) * cin   # x & m halo tiles, dbl-buffered
            + 2 * 2 * rows * cout_p                        # conv out / pass-2 in+out
        )
        if tile_bytes <= budget:
            best = th
    return best


def _pconv_pass1_kernel(x_ref, m_ref, w_ref, conv_ref, um_ref, stat_ref,
                        *, slide_winsize, th, w_out):
    """Partial conv (masked conv + mask-ratio rescale) + per-tile BN partial stats."""
    x = x_ref[0]                                  # (TH+2, W+2, Cin) f32
    m = m_ref[0]                                  # (TH+2, W+2, Cin) f32
    cin = x.shape[-1]
    cout_p = conv_ref.shape[-1]
    rows = th * w_out

    # Mask multiply in f32; cast only at the dot (bf16 MXU path).
    xm = (x * m).astype(jnp.bfloat16)

    acc = jnp.zeros((rows, cout_p), jnp.float32)
    mtap = jnp.zeros((th, w_out, cin), jnp.float32)
    for kh in range(KH):
        for kw in range(KW):
            patch = xm[kh:kh + th, kw:kw + w_out, :].reshape(rows, cin)
            acc = acc + jnp.dot(patch, w_ref[kh * KW + kw],
                                preferred_element_type=jnp.float32)
            mtap = mtap + m[kh:kh + th, kw:kw + w_out, :]

    # Mask-update "conv" with an all-ones kernel == sum over taps and Cin.
    msum = jnp.sum(mtap.reshape(rows, cin), axis=-1, keepdims=True)   # (rows, 1)
    update_mask = jnp.clip(msum, 0.0, 1.0)
    mask_ratio = (slide_winsize
                  * pl.reciprocal(msum + PCONV_EPS, approx=True)) * update_mask
    conv = acc * mask_ratio                        # bias=False partial-conv output

    conv_ref[0] = conv
    um_ref[0] = update_mask                        # one column; broadcast in wrapper

    # Per-tile BN partial statistics (sum / sum of squares per out channel).
    s = jnp.sum(conv, axis=0, keepdims=True)
    ss = jnp.sum(conv * conv, axis=0, keepdims=True)
    stat_ref[0] = jnp.concatenate(
        [s, ss, jnp.zeros((6, cout_p), jnp.float32)], axis=0)


def _bn_relu_kernel(conv_ref, scale_ref, shift_ref, y_ref):
    """Pass 2: y = relu(conv * scale + shift), per-channel scale/shift."""
    y_ref[0] = jnp.maximum(conv_ref[0] * scale_ref[...] + shift_ref[...], 0.0)


@jax.jit
def pconv_bn_activ(images, masks, weight, gamma, beta):
    """images, masks: (N, Cin, H, W) f32; weight: (Cout, Cin, 3, 3) f32."""
    n, cin, h, w = images.shape
    cout = weight.shape[0]
    cout_p = _round_up(cout, LANE)

    th = _pick_tile_rows(h, w, cin, cout_p)
    n_h = h // th
    t = n * n_h
    rows = th * w
    thp, wp = th + 2 * PAD, w + 2 * PAD

    # NCHW -> NHWC, zero-pad, then cut into row tiles with a 2-row halo so the
    # Pallas grid sees disjoint blocks (tiny duplication vs 9x HBM im2col).
    x_nhwc = jnp.transpose(images, (0, 2, 3, 1))
    m_nhwc = jnp.transpose(masks, (0, 2, 3, 1))
    pad = ((0, 0), (PAD, PAD), (PAD, PAD), (0, 0))
    x_pad = jnp.pad(x_nhwc, pad)
    m_pad = jnp.pad(m_nhwc, pad)
    x_tiles = jnp.stack([x_pad[:, i * th:i * th + thp] for i in range(n_h)],
                        axis=1).reshape(t, thp, wp, cin)
    m_tiles = jnp.stack([m_pad[:, i * th:i * th + thp] for i in range(n_h)],
                        axis=1).reshape(t, thp, wp, cin)

    # weight (Cout, Cin, KH, KW) -> (KH*KW, Cin, Cout_p), lane-padded, bf16.
    w2 = jnp.transpose(weight, (2, 3, 1, 0))
    w2 = jnp.pad(w2, ((0, 0), (0, 0), (0, 0), (0, cout_p - cout)))
    w2 = w2.reshape(KH * KW, cin, cout_p).astype(jnp.bfloat16)

    slide_winsize = float(cin * KH * KW)   # multi_channel=True maskUpdater shape[1:]

    kern1 = functools.partial(_pconv_pass1_kernel,
                              slide_winsize=slide_winsize, th=th, w_out=w)
    conv, um, stats = pl.pallas_call(
        kern1,
        grid=(t,),
        in_specs=[
            pl.BlockSpec((1, thp, wp, cin), lambda i: (i, 0, 0, 0)),
            pl.BlockSpec((1, thp, wp, cin), lambda i: (i, 0, 0, 0)),
            pl.BlockSpec((KH * KW, cin, cout_p), lambda i: (0, 0, 0)),
        ],
        out_specs=(
            pl.BlockSpec((1, rows, cout_p), lambda i: (i, 0, 0)),
            pl.BlockSpec((1, rows, 1), lambda i: (i, 0, 0)),
            pl.BlockSpec((1, 8, cout_p), lambda i: (i, 0, 0)),
        ),
        out_shape=(
            jax.ShapeDtypeStruct((t, rows, cout_p), jnp.float32),
            jax.ShapeDtypeStruct((t, rows, 1), jnp.float32),
            jax.ShapeDtypeStruct((t, 8, cout_p), jnp.float32),
        ),
        compiler_params=pltpu.CompilerParams(
            dimension_semantics=("parallel",)),
    )(x_tiles, m_tiles, w2)

    # Finish BatchNorm2d (training-mode biased batch stats) on the tiny
    # per-channel reductions, then run the gridded normalize + ReLU pass.
    # TODO(synk): running_mean / running_var buffer updates (stateful BN
    # buffers) are not reproduced; only the forward output is.
    m_rows = float(n * h * w)
    total = jnp.sum(stats[:, 0, :], axis=0)
    total_sq = jnp.sum(stats[:, 1, :], axis=0)
    mean = total / m_rows
    var = jnp.maximum(total_sq / m_rows - mean * mean, 0.0)
    gamma_p = jnp.pad(gamma.astype(jnp.float32), (0, cout_p - cout))
    beta_p = jnp.pad(beta.astype(jnp.float32), (0, cout_p - cout))
    scale = (gamma_p * lax.rsqrt(var + BN_EPS)).reshape(1, cout_p)
    shift = (beta_p - mean * scale[0]).reshape(1, cout_p)

    y = pl.pallas_call(
        _bn_relu_kernel,
        grid=(t,),
        in_specs=[
            pl.BlockSpec((1, rows, cout_p), lambda i: (i, 0, 0)),
            pl.BlockSpec((1, cout_p), lambda i: (0, 0)),
            pl.BlockSpec((1, cout_p), lambda i: (0, 0)),
        ],
        out_specs=pl.BlockSpec((1, rows, cout_p), lambda i: (i, 0, 0)),
        out_shape=jax.ShapeDtypeStruct((t, rows, cout_p), jnp.float32),
        compiler_params=pltpu.CompilerParams(
            dimension_semantics=("parallel",)),
    )(conv, scale, shift)

    out = y.reshape(n, n_h, th, w, cout_p)[..., :cout]
    out = jnp.transpose(out.reshape(n, h, w, cout), (0, 3, 1, 2))     # -> NCHW
    update_mask = jnp.broadcast_to(um.reshape(n, 1, h, w), (n, cout, h, w))
    return out, update_mask


if __name__ == "__main__":
    key = jax.random.PRNGKey(0)
    k_img, k_mask, k_w = jax.random.split(key, 3)

    N, CIN, COUT, H, W = 2, 4, 8, 16, 16
    images = jax.random.normal(k_img, (N, CIN, H, W), jnp.float32)
    masks = (jax.random.uniform(k_mask, (N, CIN, H, W)) > 0.3).astype(jnp.float32)

    # Deterministic parameter init (Conv2d kaiming-uniform-style bound).
    fan_in = CIN * KH * KW
    bound = 1.0 / (fan_in ** 0.5)
    weight = jax.random.uniform(k_w, (COUT, CIN, KH, KW), jnp.float32,
                                minval=-bound, maxval=bound)
    gamma = jnp.ones((COUT,), jnp.float32)   # nn.BatchNorm2d default affine init
    beta = jnp.zeros((COUT,), jnp.float32)

    out, update_mask = pconv_bn_activ(images, masks, weight, gamma, beta)
    jax.block_until_ready((out, update_mask))
    assert out.shape == (N, COUT, H, W) and update_mask.shape == (N, COUT, H, W)
    assert bool(jnp.isfinite(out).all()) and bool(jnp.isfinite(update_mask).all())
    print("KERNEL_OK")
</pallas_src>

<mosaic_0001>
module attributes {stable_mosaic.version = 11 : i64} {
  func.func @_pconv_pass1_kernel(%arg0: i32, %arg1: memref<1x18x18x4xf32, #tpu.memory_space<vmem>>, %arg2: memref<1x18x18x4xf32, #tpu.memory_space<vmem>>, %arg3: memref<9x4x128xbf16, #tpu.memory_space<vmem>>, %arg4: memref<1x256x128xf32, #tpu.memory_space<vmem>>, %arg5: memref<1x256x1xf32, #tpu.memory_space<vmem>>, %arg6: memref<1x8x128xf32, #tpu.memory_space<vmem>>) attributes {dimension_semantics = [#tpu.dimension_semantics<parallel>], iteration_bounds = array<i64: 2>, scalar_prefetch = 0 : i64, scratch_operands = 0 : i64, tpu.core_type = #tpu.core_type<tc>, window_params = [{transform_indices = @transform_0, window_bounds = array<i64: 1, 18, 18, 4>}, {transform_indices = @transform_1, window_bounds = array<i64: 1, 18, 18, 4>}, {pipeline_mode = #tpu.pipeline_mode<synchronous>, transform_indices = @transform_2, window_bounds = array<i64: 9, 4, 128>}, {transform_indices = @transform_3, window_bounds = array<i64: 1, 256, 128>}, {transform_indices = @transform_4, window_bounds = array<i64: 1, 256, 1>}, {transform_indices = @transform_5, window_bounds = array<i64: 1, 8, 128>}]} {
    %c0 = arith.constant 0 : index
    %c0_0 = arith.constant 0 : index
    %c0_1 = arith.constant 0 : index
    %c0_2 = arith.constant 0 : index
    %0 = vector.load %arg1[%c0, %c0_0, %c0_1, %c0_2] : memref<1x18x18x4xf32, #tpu.memory_space<vmem>>, vector<1x18x18x4xf32>
    %1 = vector.shape_cast %0 : vector<1x18x18x4xf32> to vector<18x18x4xf32>
    %c0_3 = arith.constant 0 : index
    %c0_4 = arith.constant 0 : index
    %c0_5 = arith.constant 0 : index
    %c0_6 = arith.constant 0 : index
    %2 = vector.load %arg2[%c0_3, %c0_4, %c0_5, %c0_6] : memref<1x18x18x4xf32, #tpu.memory_space<vmem>>, vector<1x18x18x4xf32>
    %3 = vector.shape_cast %2 : vector<1x18x18x4xf32> to vector<18x18x4xf32>
    %4 = arith.mulf %1, %3 : vector<18x18x4xf32>
    %5 = arith.truncf %4 : vector<18x18x4xf32> to vector<18x18x4xbf16>
    %cst = arith.constant 0.000000e+00 : f32
    %6 = vector.broadcast %cst : f32 to vector<256x128xf32>
    %cst_7 = arith.constant 0.000000e+00 : f32
    %7 = vector.broadcast %cst_7 : f32 to vector<16x16x4xf32>
    %8 = vector.extract_strided_slice %5 {offsets = [0, 0, 0], sizes = [16, 16, 4], strides = [1, 1, 1]} : vector<18x18x4xbf16> to vector<16x16x4xbf16>
    %9 = vector.shape_cast %8 : vector<16x16x4xbf16> to vector<256x4xbf16>
    %c0_8 = arith.constant 0 : index
    %c0_9 = arith.constant 0 : index
    %c0_10 = arith.constant 0 : index
    %10 = vector.load %arg3[%c0_8, %c0_9, %c0_10] : memref<9x4x128xbf16, #tpu.memory_space<vmem>>, vector<1x4x128xbf16>
    %11 = vector.shape_cast %10 : vector<1x4x128xbf16> to vector<4x128xbf16>
    %cst_11 = arith.constant dense<0.000000e+00> : vector<256x128xf32>
    %12 = tpu.matmul %9, %11, %cst_11 {dimension_numbers = #tpu.dot_dimension_numbers<[1], [0], [0], [1], [0, 0, 1, 1], [], []>} : vector<256x4xbf16>, vector<4x128xbf16>, vector<256x128xf32> -> vector<256x128xf32>
    %13 = arith.addf %6, %12 : vector<256x128xf32>
    %14 = vector.extract_strided_slice %3 {offsets = [0, 0, 0], sizes = [16, 16, 4], strides = [1, 1, 1]} : vector<18x18x4xf32> to vector<16x16x4xf32>
    %15 = arith.addf %7, %14 : vector<16x16x4xf32>
    %16 = vector.extract_strided_slice %5 {offsets = [0, 1, 0], sizes = [16, 16, 4], strides = [1, 1, 1]} : vector<18x18x4xbf16> to vector<16x16x4xbf16>
    %17 = vector.shape_cast %16 : vector<16x16x4xbf16> to vector<256x4xbf16>
    %c1 = arith.constant 1 : index
    %c0_12 = arith.constant 0 : index
    %c0_13 = arith.constant 0 : index
    %18 = vector.load %arg3[%c1, %c0_12, %c0_13] : memref<9x4x128xbf16, #tpu.memory_space<vmem>>, vector<1x4x128xbf16>
    %19 = vector.shape_cast %18 : vector<1x4x128xbf16> to vector<4x128xbf16>
    %cst_14 = arith.constant dense<0.000000e+00> : vector<256x128xf32>
    %20 = tpu.matmul %17, %19, %cst_14 {dimension_numbers = #tpu.dot_dimension_numbers<[1], [0], [0], [1], [0, 0, 1, 1], [], []>} : vector<256x4xbf16>, vector<4x128xbf16>, vector<256x128xf32> -> vector<256x128xf32>
    %21 = arith.addf %13, %20 : vector<256x128xf32>
    %22 = vector.extract_strided_slice %3 {offsets = [0, 1, 0], sizes = [16, 16, 4], strides = [1, 1, 1]} : vector<18x18x4xf32> to vector<16x16x4xf32>
    %23 = arith.addf %15, %22 : vector<16x16x4xf32>
    %24 = vector.extract_strided_slice %5 {offsets = [0, 2, 0], sizes = [16, 16, 4], strides = [1, 1, 1]} : vector<18x18x4xbf16> to vector<16x16x4xbf16>
    %25 = vector.shape_cast %24 : vector<16x16x4xbf16> to vector<256x4xbf16>
    %c2 = arith.constant 2 : index
    %c0_15 = arith.constant 0 : index
    %c0_16 = arith.constant 0 : index
    %26 = vector.load %arg3[%c2, %c0_15, %c0_16] : memref<9x4x128xbf16, #tpu.memory_space<vmem>>, vector<1x4x128xbf16>
    %27 = vector.shape_cast %26 : vector<1x4x128xbf16> to vector<4x128xbf16>
    %cst_17 = arith.constant dense<0.000000e+00> : vector<256x128xf32>
    %28 = tpu.matmul %25, %27, %cst_17 {dimension_numbers = #tpu.dot_dimension_numbers<[1], [0], [0], [1], [0, 0, 1, 1], [], []>} : vector<256x4xbf16>, vector<4x128xbf16>, vector<256x128xf32> -> vector<256x128xf32>
    %29 = arith.addf %21, %28 : vector<256x128xf32>
    %30 = vector.extract_strided_slice %3 {offsets = [0, 2, 0], sizes = [16, 16, 4], strides = [1, 1, 1]} : vector<18x18x4xf32> to vector<16x16x4xf32>
    %31 = arith.addf %23, %30 : vector<16x16x4xf32>
    %32 = vector.extract_strided_slice %5 {offsets = [1, 0, 0], sizes = [16, 16, 4], strides = [1, 1, 1]} : vector<18x18x4xbf16> to vector<16x16x4xbf16>
    %33 = vector.shape_cast %32 : vector<16x16x4xbf16> to vector<256x4xbf16>
    %c3 = arith.constant 3 : index
    %c0_18 = arith.constant 0 : index
    %c0_19 = arith.constant 0 : index
    %34 = vector.load %arg3[%c3, %c0_18, %c0_19] : memref<9x4x128xbf16, #tpu.memory_space<vmem>>, vector<1x4x128xbf16>
    %35 = vector.shape_cast %34 : vector<1x4x128xbf16> to vector<4x128xbf16>
    %cst_20 = arith.constant dense<0.000000e+00> : vector<256x128xf32>
    %36 = tpu.matmul %33, %35, %cst_20 {dimension_numbers = #tpu.dot_dimension_numbers<[1], [0], [0], [1], [0, 0, 1, 1], [], []>} : vector<256x4xbf16>, vector<4x128xbf16>, vector<256x128xf32> -> vector<256x128xf32>
    %37 = arith.addf %29, %36 : vector<256x128xf32>
    %38 = vector.extract_strided_slice %3 {offsets = [1, 0, 0], sizes = [16, 16, 4], strides = [1, 1, 1]} : vector<18x18x4xf32> to vector<16x16x4xf32>
    %39 = arith.addf %31, %38 : vector<16x16x4xf32>
    %40 = vector.extract_strided_slice %5 {offsets = [1, 1, 0], sizes = [16, 16, 4], strides = [1, 1, 1]} : vector<18x18x4xbf16> to vector<16x16x4xbf16>
    %41 = vector.shape_cast %40 : vector<16x16x4xbf16> to vector<256x4xbf16>
    %c4 = arith.constant 4 : index
    %c0_21 = arith.constant 0 : index
    %c0_22 = arith.constant 0 : index
    %42 = vector.load %arg3[%c4, %c0_21, %c0_22] : memref<9x4x128xbf16, #tpu.memory_space<vmem>>, vector<1x4x128xbf16>
    %43 = vector.shape_cast %42 : vector<1x4x128xbf16> to vector<4x128xbf16>
    %cst_23 = arith.constant dense<0.000000e+00> : vector<256x128xf32>
    %44 = tpu.matmul %41, %43, %cst_23 {dimension_numbers = #tpu.dot_dimension_numbers<[1], [0], [0], [1], [0, 0, 1, 1], [], []>} : vector<256x4xbf16>, vector<4x128xbf16>, vector<256x128xf32> -> vector<256x128xf32>
    %45 = arith.addf %37, %44 : vector<256x128xf32>
    %46 = vector.extract_strided_slice %3 {offsets = [1, 1, 0], sizes = [16, 16, 4], strides = [1, 1, 1]} : vector<18x18x4xf32> to vector<16x16x4xf32>
    %47 = arith.addf %39, %46 : vector<16x16x4xf32>
    %48 = vector.extract_strided_slice %5 {offsets = [1, 2, 0], sizes = [16, 16, 4], strides = [1, 1, 1]} : vector<18x18x4xbf16> to vector<16x16x4xbf16>
    %49 = vector.shape_cast %48 : vector<16x16x4xbf16> to vector<256x4xbf16>
    %c5 = arith.constant 5 : index
    %c0_24 = arith.constant 0 : index
    %c0_25 = arith.constant 0 : index
    %50 = vector.load %arg3[%c5, %c0_24, %c0_25] : memref<9x4x128xbf16, #tpu.memory_space<vmem>>, vector<1x4x128xbf16>
    %51 = vector.shape_cast %50 : vector<1x4x128xbf16> to vector<4x128xbf16>
    %cst_26 = arith.constant dense<0.000000e+00> : vector<256x128xf32>
    %52 = tpu.matmul %49, %51, %cst_26 {dimension_numbers = #tpu.dot_dimension_numbers<[1], [0], [0], [1], [0, 0, 1, 1], [], []>} : vector<256x4xbf16>, vector<4x128xbf16>, vector<256x128xf32> -> vector<256x128xf32>
    %53 = arith.addf %45, %52 : vector<256x128xf32>
    %54 = vector.extract_strided_slice %3 {offsets = [1, 2, 0], sizes = [16, 16, 4], strides = [1, 1, 1]} : vector<18x18x4xf32> to vector<16x16x4xf32>
    %55 = arith.addf %47, %54 : vector<16x16x4xf32>
    %56 = vector.extract_strided_slice %5 {offsets = [2, 0, 0], sizes = [16, 16, 4], strides = [1, 1, 1]} : vector<18x18x4xbf16> to vector<16x16x4xbf16>
    %57 = vector.shape_cast %56 : vector<16x16x4xbf16> to vector<256x4xbf16>
    %c6 = arith.constant 6 : index
    %c0_27 = arith.constant 0 : index
    %c0_28 = arith.constant 0 : index
    %58 = vector.load %arg3[%c6, %c0_27, %c0_28] : memref<9x4x128xbf16, #tpu.memory_space<vmem>>, vector<1x4x128xbf16>
    %59 = vector.shape_cast %58 : vector<1x4x128xbf16> to vector<4x128xbf16>
    %cst_29 = arith.constant dense<0.000000e+00> : vector<256x128xf32>
    %60 = tpu.matmul %57, %59, %cst_29 {dimension_numbers = #tpu.dot_dimension_numbers<[1], [0], [0], [1], [0, 0, 1, 1], [], []>} : vector<256x4xbf16>, vector<4x128xbf16>, vector<256x128xf32> -> vector<256x128xf32>
    %61 = arith.addf %53, %60 : vector<256x128xf32>
    %62 = vector.extract_strided_slice %3 {offsets = [2, 0, 0], sizes = [16, 16, 4], strides = [1, 1, 1]} : vector<18x18x4xf32> to vector<16x16x4xf32>
    %63 = arith.addf %55, %62 : vector<16x16x4xf32>
    %64 = vector.extract_strided_slice %5 {offsets = [2, 1, 0], sizes = [16, 16, 4], strides = [1, 1, 1]} : vector<18x18x4xbf16> to vector<16x16x4xbf16>
    %65 = vector.shape_cast %64 : vector<16x16x4xbf16> to vector<256x4xbf16>
    %c7 = arith.constant 7 : index
    %c0_30 = arith.constant 0 : index
    %c0_31 = arith.constant 0 : index
    %66 = vector.load %arg3[%c7, %c0_30, %c0_31] : memref<9x4x128xbf16, #tpu.memory_space<vmem>>, vector<1x4x128xbf16>
    %67 = vector.shape_cast %66 : vector<1x4x128xbf16> to vector<4x128xbf16>
    %cst_32 = arith.constant dense<0.000000e+00> : vector<256x128xf32>
    %68 = tpu.matmul %65, %67, %cst_32 {dimension_numbers = #tpu.dot_dimension_numbers<[1], [0], [0], [1], [0, 0, 1, 1], [], []>} : vector<256x4xbf16>, vector<4x128xbf16>, vector<256x128xf32> -> vector<256x128xf32>
    %69 = arith.addf %61, %68 : vector<256x128xf32>
    %70 = vector.extract_strided_slice %3 {offsets = [2, 1, 0], sizes = [16, 16, 4], strides = [1, 1, 1]} : vector<18x18x4xf32> to vector<16x16x4xf32>
    %71 = arith.addf %63, %70 : vector<16x16x4xf32>
    %72 = vector.extract_strided_slice %5 {offsets = [2, 2, 0], sizes = [16, 16, 4], strides = [1, 1, 1]} : vector<18x18x4xbf16> to vector<16x16x4xbf16>
    %73 = vector.shape_cast %72 : vector<16x16x4xbf16> to vector<256x4xbf16>
    %c8 = arith.constant 8 : index
    %c0_33 = arith.constant 0 : index
    %c0_34 = arith.constant 0 : index
    %74 = vector.load %arg3[%c8, %c0_33, %c0_34] : memref<9x4x128xbf16, #tpu.memory_space<vmem>>, vector<1x4x128xbf16>
    %75 = vector.shape_cast %74 : vector<1x4x128xbf16> to vector<4x128xbf16>
    %cst_35 = arith.constant dense<0.000000e+00> : vector<256x128xf32>
    %76 = tpu.matmul %73, %75, %cst_35 {dimension_numbers = #tpu.dot_dimension_numbers<[1], [0], [0], [1], [0, 0, 1, 1], [], []>} : vector<256x4xbf16>, vector<4x128xbf16>, vector<256x128xf32> -> vector<256x128xf32>
    %77 = arith.addf %69, %76 : vector<256x128xf32>
    %78 = vector.extract_strided_slice %3 {offsets = [2, 2, 0], sizes = [16, 16, 4], strides = [1, 1, 1]} : vector<18x18x4xf32> to vector<16x16x4xf32>
    %79 = arith.addf %71, %78 : vector<16x16x4xf32>
    %80 = vector.shape_cast %79 : vector<16x16x4xf32> to vector<256x4xf32>
    %cst_36 = arith.constant dense<0.000000e+00> : vector<256xf32>
    %81 = vector.multi_reduction <add>, %80, %cst_36 [1] : vector<256x4xf32> to vector<256xf32>
    %82 = vector.shape_cast %81 : vector<256xf32> to vector<256x1xf32>
    %cst_37 = arith.constant 0.000000e+00 : f32
    %cst_38 = arith.constant 1.000000e+00 : f32
    %83 = vector.broadcast %cst_37 : f32 to vector<256x1xf32>
    %84 = arith.maximumf %83, %82 : vector<256x1xf32>
    %85 = vector.broadcast %cst_38 : f32 to vector<256x1xf32>
    %86 = arith.minimumf %85, %84 : vector<256x1xf32>
    %cst_39 = arith.constant 9.99999993E-9 : f32
    %87 = vector.broadcast %cst_39 : f32 to vector<256x1xf32>
    %88 = arith.addf %82, %87 : vector<256x1xf32>
    %89 = tpu.reciprocal %88 {approx = true} : vector<256x1xf32> -> vector<256x1xf32>
    %cst_40 = arith.constant 3.600000e+01 : f32
    %90 = vector.broadcast %cst_40 : f32 to vector<256x1xf32>
    %91 = arith.mulf %90, %89 : vector<256x1xf32>
    %92 = arith.mulf %91, %86 : vector<256x1xf32>
    %93 = vector.broadcast %92 : vector<256x1xf32> to vector<256x128xf32>
    %94 = arith.mulf %77, %93 : vector<256x128xf32>
    %c0_41 = arith.constant 0 : index
    %c0_42 = arith.constant 0 : index
    %c0_43 = arith.constant 0 : index
    %95 = vector.load %arg4[%c0_41, %c0_42, %c0_43] : memref<1x256x128xf32, #tpu.memory_space<vmem>>, vector<1x256x128xf32>
    %96 = vector.shape_cast %95 : vector<1x256x128xf32> to vector<256x128xf32>
    %97 = vector.shape_cast %94 : vector<256x128xf32> to vector<1x256x128xf32>
    tpu.vector_store %arg4[%c0_41, %c0_42, %c0_43], %97 {strides = array<i32>} : memref<1x256x128xf32, #tpu.memory_space<vmem>>, vector<1x256x128xf32>,
    %c0_44 = arith.constant 0 : index
    %c0_45 = arith.constant 0 : index
    %c0_46 = arith.constant 0 : index
    %98 = vector.load %arg5[%c0_44, %c0_45, %c0_46] : memref<1x256x1xf32, #tpu.memory_space<vmem>>, vector<1x256x1xf32>
    %99 = vector.shape_cast %98 : vector<1x256x1xf32> to vector<256x1xf32>
    %100 = vector.shape_cast %86 : vector<256x1xf32> to vector<1x256x1xf32>
    tpu.vector_store %arg5[%c0_44, %c0_45, %c0_46], %100 {strides = array<i32>} : memref<1x256x1xf32, #tpu.memory_space<vmem>>, vector<1x256x1xf32>,
    %cst_47 = arith.constant dense<0.000000e+00> : vector<128xf32>
    %101 = vector.multi_reduction <add>, %94, %cst_47 [0] : vector<256x128xf32> to vector<128xf32>
    %102 = vector.shape_cast %101 : vector<128xf32> to vector<1x128xf32>
    %103 = arith.mulf %94, %94 : vector<256x128xf32>
    %cst_48 = arith.constant dense<0.000000e+00> : vector<128xf32>
    %104 = vector.multi_reduction <add>, %103, %cst_48 [0] : vector<256x128xf32> to vector<128xf32>
    %105 = vector.shape_cast %104 : vector<128xf32> to vector<1x128xf32>
    %cst_49 = arith.constant 0.000000e+00 : f32
    %106 = vector.broadcast %cst_49 : f32 to vector<6x128xf32>
    %107 = tpu.concatenate %102, %105, %106 in 0 : vector<1x128xf32>, vector<1x128xf32>, vector<6x128xf32> -> vector<8x128xf32>
    %c0_50 = arith.constant 0 : index
    %c0_51 = arith.constant 0 : index
    %c0_52 = arith.constant 0 : index
    %108 = vector.load %arg6[%c0_50, %c0_51, %c0_52] : memref<1x8x128xf32, #tpu.memory_space<vmem>>, vector<1x8x128xf32>
    %109 = vector.shape_cast %108 : vector<1x8x128xf32> to vector<8x128xf32>
    %110 = vector.shape_cast %107 : vector<8x128xf32> to vector<1x8x128xf32>
    tpu.vector_store %arg6[%c0_50, %c0_51, %c0_52], %110 {strides = array<i32>} : memref<1x8x128xf32, #tpu.memory_space<vmem>>, vector<1x8x128xf32>,
    return
  }
  func.func @transform_0(%arg0: i32) -> (i32, i32, i32, i32) {
    %c0_i32 = arith.constant 0 : i32
    %c0_i32_0 = arith.constant 0 : i32
    %c0_i32_1 = arith.constant 0 : i32
    %c0_i32_2 = arith.constant 0 : i32
    return %arg0, %c0_i32, %c0_i32_0, %c0_i32_1 : i32, i32, i32, i32
  }
  func.func @transform_1(%arg0: i32) -> (i32, i32, i32, i32) {
    %c0_i32 = arith.constant 0 : i32
    %c0_i32_0 = arith.constant 0 : i32
    %c0_i32_1 = arith.constant 0 : i32
    %c0_i32_2 = arith.constant 0 : i32
    return %arg0, %c0_i32, %c0_i32_0, %c0_i32_1 : i32, i32, i32, i32
  }
  func.func @transform_2(%arg0: i32) -> (i32, i32, i32) {
    %c0_i32 = arith.constant 0 : i32
    %c0_i32_0 = arith.constant 0 : i32
    %c0_i32_1 = arith.constant 0 : i32
    %c0_i32_2 = arith.constant 0 : i32
    return %c0_i32, %c0_i32_0, %c0_i32_1 : i32, i32, i32
  }
  func.func @transform_3(%arg0: i32) -> (i32, i32, i32) {
    %c0_i32 = arith.constant 0 : i32
    %c0_i32_0 = arith.constant 0 : i32
    %c0_i32_1 = arith.constant 0 : i32
    return %arg0, %c0_i32, %c0_i32_0 : i32, i32, i32
  }
  func.func @transform_4(%arg0: i32) -> (i32, i32, i32) {
    %c0_i32 = arith.constant 0 : i32
    %c0_i32_0 = arith.constant 0 : i32
    %c0_i32_1 = arith.constant 0 : i32
    return %arg0, %c0_i32, %c0_i32_0 : i32, i32, i32
  }
  func.func @transform_5(%arg0: i32) -> (i32, i32, i32) {
    %c0_i32 = arith.constant 0 : i32
    %c0_i32_0 = arith.constant 0 : i32
    %c0_i32_1 = arith.constant 0 : i32
    return %arg0, %c0_i32, %c0_i32_0 : i32, i32, i32
  }
}

module attributes {stable_mosaic.version = 11 : i64} {
  func.func @_bn_relu_kernel(%arg0: i32, %arg1: memref<1x256x128xf32, #tpu.memory_space<vmem>>, %arg2: memref<1x128xf32, #tpu.memory_space<vmem>>, %arg3: memref<1x128xf32, #tpu.memory_space<vmem>>, %arg4: memref<1x256x128xf32, #tpu.memory_space<vmem>>) attributes {dimension_semantics = [#tpu.dimension_semantics<parallel>], iteration_bounds = array<i64: 2>, scalar_prefetch = 0 : i64, scratch_operands = 0 : i64, tpu.core_type = #tpu.core_type<tc>, window_params = [{transform_indices = @transform_0, window_bounds = array<i64: 1, 256, 128>}, {pipeline_mode = #tpu.pipeline_mode<synchronous>, transform_indices = @transform_1, window_bounds = array<i64: 1, 128>}, {pipeline_mode = #tpu.pipeline_mode<synchronous>, transform_indices = @transform_2, window_bounds = array<i64: 1, 128>}, {transform_indices = @transform_3, window_bounds = array<i64: 1, 256, 128>}]} {
    %c0 = arith.constant 0 : index
    %c0_0 = arith.constant 0 : index
    %c0_1 = arith.constant 0 : index
    %0 = vector.load %arg1[%c0, %c0_0, %c0_1] : memref<1x256x128xf32, #tpu.memory_space<vmem>>, vector<1x256x128xf32>
    %1 = vector.shape_cast %0 : vector<1x256x128xf32> to vector<256x128xf32>
    %c0_2 = arith.constant 0 : index
    %c0_3 = arith.constant 0 : index
    %2 = vector.load %arg2[%c0_2, %c0_3] : memref<1x128xf32, #tpu.memory_space<vmem>>, vector<1x128xf32>
    %3 = vector.broadcast %2 : vector<1x128xf32> to vector<256x128xf32>
    %4 = arith.mulf %1, %3 : vector<256x128xf32>
    %c0_4 = arith.constant 0 : index
    %c0_5 = arith.constant 0 : index
    %5 = vector.load %arg3[%c0_4, %c0_5] : memref<1x128xf32, #tpu.memory_space<vmem>>, vector<1x128xf32>
    %6 = vector.broadcast %5 : vector<1x128xf32> to vector<256x128xf32>
    %7 = arith.addf %4, %6 : vector<256x128xf32>
    %cst = arith.constant 0.000000e+00 : f32
    %8 = vector.broadcast %cst : f32 to vector<256x128xf32>
    %9 = arith.maximumf %7, %8 : vector<256x128xf32>
    %c0_6 = arith.constant 0 : index
    %c0_7 = arith.constant 0 : index
    %c0_8 = arith.constant 0 : index
    %10 = vector.load %arg4[%c0_6, %c0_7, %c0_8] : memref<1x256x128xf32, #tpu.memory_space<vmem>>, vector<1x256x128xf32>
    %11 = vector.shape_cast %10 : vector<1x256x128xf32> to vector<256x128xf32>
    %12 = vector.shape_cast %9 : vector<256x128xf32> to vector<1x256x128xf32>
    tpu.vector_store %arg4[%c0_6, %c0_7, %c0_8], %12 {strides = array<i32>} : memref<1x256x128xf32, #tpu.memory_space<vmem>>, vector<1x256x128xf32>,
    return
  }
  func.func @transform_0(%arg0: i32) -> (i32, i32, i32) {
    %c0_i32 = arith.constant 0 : i32
    %c0_i32_0 = arith.constant 0 : i32
    %c0_i32_1 = arith.constant 0 : i32
    return %arg0, %c0_i32, %c0_i32_0 : i32, i32, i32
  }
  func.func @transform_1(%arg0: i32) -> (i32, i32) {
    %c0_i32 = arith.constant 0 : i32
    %c0_i32_0 = arith.constant 0 : i32
    %c0_i32_1 = arith.constant 0 : i32
    return %c0_i32, %c0_i32_0 : i32, i32
  }
  func.func @transform_2(%arg0: i32) -> (i32, i32) {
    %c0_i32 = arith.constant 0 : i32
    %c0_i32_0 = arith.constant 0 : i32
    %c0_i32_1 = arith.constant 0 : i32
    return %c0_i32, %c0_i32_0 : i32, i32
  }
  func.func @transform_3(%arg0: i32) -> (i32, i32, i32) {
    %c0_i32 = arith.constant 0 : i32
    %c0_i32_0 = arith.constant 0 : i32
    %c0_i32_1 = arith.constant 0 : i32
    return %arg0, %c0_i32, %c0_i32_0 : i32, i32, i32
  }
}

</mosaic_0001>

<llo_original>
// kernel: pconv_bn_activ.3
$region0: #{pconv_bn_activ.3}
  #allocation0 [shape = 'u32[]', space=smem, size = 0x4, offset = 0x4, fixed_abs, tag = 'smem constant byte address 0x4 - core index']
  #allocation1 [shape = 'u32[144,128]{1,0:T(1,128)}', space=vmem, size = 0x12000, scoped, tag = 'internal scratch']
  %s0 = inlined_call_operand.vmem [shape: f32[2,256,128], index: 0, kind: input, shape index: {}]
  %s1 = inlined_call_operand.vmem [shape: f32[1,128], index: 1, kind: input, shape index: {}]
  %s2 = inlined_call_operand.vmem [shape: f32[1,128], index: 2, kind: input, shape index: {}]
  %s3 = inlined_call_operand.vmem [shape: f32[2,256,128], index: 3, kind: output, shape index: {}]
  %s4 = sld [smem:[#allocation0]]
  $region45: #{pconv_bn_activ.3} parent=0
    _
  %s6 = ssub.s32 1, %s4
  %s7 = scalar_select 0, %s6, %s4
  loop: start=0, step=1, limit=4
  $region2: #{pconv_bn_activ.3} parent=0 // loop_pre_header
    _
  $region3: #{pconv_bn_activ.3} parent=0 // loop_header
    %s9 = sphi 0, %s13
    %p10 = scmp.ge.s32.totalorder %s9, 4
    %s19 = sphi 0, %s21
    %s22 = sphi 0, %s19
    %s23 = sphi 0, %s22
    %s39 = sphi 0, %s23
    %s43 = sphi 0, %s43
    %s45 = sphi 0, %s43
    %s46 = sphi 0, %s45
    %s60 = sphi 0, %s46
    %s64 = sphi 0, %s64
    %s66 = sphi 0, %s64
    %s67 = sphi 0, %s66
    %s81 = sphi 0, %s67
    %s87 = sphi 0, %s89
    %s90 = sphi 0, %s87
    %s91 = sphi 0, %s90
    %s107 = sphi 0, %s91
  $region4: #{pconv_bn_activ.3} parent=0 // loop_header_branch
    %12 = sbr.rel (%p10) target = $region8
  $region5: #{pconv_bn_activ.3} parent=0 // loop_body
    %s14 = ssub.s32 %s9, 1
    %s15 = ssub.s32 %s9, 2
    %s16 = sadd.s32 %s9, 1
    %s17 = ssub.s32 %s9, %s16
    %p18 = scmp.eq.s32.totalorder %s17, 0
    %s20 = sadd.s32 %s19, 1
    %s21 = scalar_select %p18, %s19, %s20
    %p24 = pneg %p18
    %p25 = scmp.eq.s32.totalorder %s9, 1
    %p26 = por %p24, %p25
    %p27 = scmp.ne.s32.totalorder %s19, %s22
    %p28 = scmp.eq.s32.totalorder %s9, 0
    %p29 = por %p27, %p28
    %p30 = scmp.ne.s32.totalorder %s19, %s22
    %p31 = scmp.eq.s32.totalorder %s14, 1
    %p32 = por %p30, %p31
    %p33 = scmp.ne.s32.totalorder %s22, %s23
    %p34 = scmp.eq.s32.totalorder %s14, 0
    %p35 = por %p33, %p34
    %p36 = scmp.ne.s32.totalorder %s22, %s23
    %p37 = scmp.eq.s32.totalorder %s15, 1
    %p38 = por %p36, %p37
    %p40 = scmp.ne.s32.totalorder %s23, %s39
    %p41 = scmp.eq.s32.totalorder %s15, 0
    %p42 = por %p40, %p41
    %s44 = sadd.s32 %s43, 1
    %p47 = scmp.eq.s32.totalorder %s9, 1
    %p48 = scmp.ne.s32.totalorder %s43, %s45
    %p49 = scmp.eq.s32.totalorder %s9, 0
    %p50 = por %p48, %p49
    %p51 = scmp.ne.s32.totalorder %s43, %s45
    %p52 = scmp.eq.s32.totalorder %s14, 1
    %p53 = por %p51, %p52
    %p54 = scmp.ne.s32.totalorder %s45, %s46
    %p55 = scmp.eq.s32.totalorder %s14, 0
    %p56 = por %p54, %p55
    %p57 = scmp.ne.s32.totalorder %s45, %s46
    %p58 = scmp.eq.s32.totalorder %s15, 1
    %p59 = por %p57, %p58
    %p61 = scmp.ne.s32.totalorder %s46, %s60
    %p62 = scmp.eq.s32.totalorder %s15, 0
    %p63 = por %p61, %p62
    %s65 = sadd.s32 %s64, 1
    %p68 = scmp.eq.s32.totalorder %s9, 1
    %p69 = scmp.ne.s32.totalorder %s64, %s66
    %p70 = scmp.eq.s32.totalorder %s9, 0
    %p71 = por %p69, %p70
    %p72 = scmp.ne.s32.totalorder %s64, %s66
    %p73 = scmp.eq.s32.totalorder %s14, 1
    %p74 = por %p72, %p73
    %p75 = scmp.ne.s32.totalorder %s66, %s67
    %p76 = scmp.eq.s32.totalorder %s14, 0
    %p77 = por %p75, %p76
    %p78 = scmp.ne.s32.totalorder %s66, %s67
    %p79 = scmp.eq.s32.totalorder %s15, 1
    %p80 = por %p78, %p79
    %p82 = scmp.ne.s32.totalorder %s67, %s81
    %p83 = scmp.eq.s32.totalorder %s15, 0
    %p84 = por %p82, %p83
    %s85 = ssub.s32 %s9, %s16
    %p86 = scmp.eq.s32.totalorder %s85, 0
    %s88 = sadd.s32 %s87, 1
    %s89 = scalar_select %p86, %s87, %s88
    %p92 = pneg %p86
    %p93 = scmp.eq.s32.totalorder %s9, 1
    %p94 = por %p92, %p93
    %p95 = scmp.ne.s32.totalorder %s87, %s90
    %p96 = scmp.eq.s32.totalorder %s9, 0
    %p97 = por %p95, %p96
    %p98 = scmp.ne.s32.totalorder %s87, %s90
    %p99 = scmp.eq.s32.totalorder %s14, 1
    %p100 = por %p98, %p99
    %p101 = scmp.ne.s32.totalorder %s90, %s91
    %p102 = scmp.eq.s32.totalorder %s14, 0
    %p103 = por %p101, %p102
    %p104 = scmp.ne.s32.totalorder %s90, %s91
    %p105 = scmp.eq.s32.totalorder %s15, 1
    %p106 = por %p104, %p105
    %p108 = scmp.ne.s32.totalorder %s91, %s107
    %p109 = scmp.eq.s32.totalorder %s15, 0
    %p110 = por %p108, %p109
    %p111 = scmp.le.s32.totalorder 1, %s9
    %p112 = scmp.lt.s32.totalorder %s9, 3
    %p113 = pnand %p111, %p112
    %p114 = pneg %p113
    // Predicated region
    $region9: #{pconv_bn_activ.3} parent=5 // pred_check
      _
    $region10: #{pconv_bn_activ.3} parent=5 // pred_check_branch
      %116 = sbr.rel (%p113) target = $region12
    $region11: #{pconv_bn_activ.3} parent=5 // pred_region
      %s117 = ssub.s32 %s9, 1
      // Predicated region
      $region13: #{pconv_bn_activ.3} parent=11 // pred_check
        %p118 = pneg %p56
      $region14: #{pconv_bn_activ.3} parent=11 // pred_check_branch
        %120 = sbr.rel (%p118) target = $region16
      $region15: #{pconv_bn_activ.3} parent=11 // pred_region
        _
      $region16: #{pconv_bn_activ.3} parent=11 // pred_fallthru
        _
      // Predicated region
      $region17: #{pconv_bn_activ.3} parent=11 // pred_check
        %p121 = pneg %p77
      $region18: #{pconv_bn_activ.3} parent=11 // pred_check_branch
        %123 = sbr.rel (%p121) target = $region20
      $region19: #{pconv_bn_activ.3} parent=11 // pred_region
        _
      $region20: #{pconv_bn_activ.3} parent=11 // pred_fallthru
        _
    $region12: #{pconv_bn_activ.3} parent=5 // pred_fallthru
      _
    %p124 = scmp.lt.s32.totalorder %s9, 2
    // Predicated region
    $region21: #{pconv_bn_activ.3} parent=5 // pred_check
      %p125 = pneg %p124
    $region22: #{pconv_bn_activ.3} parent=5 // pred_check_branch
      %127 = sbr.rel (%p125) target = $region24
    $region23: #{pconv_bn_activ.3} parent=5 // pred_region
      // Predicated region
      $region25: #{pconv_bn_activ.3} parent=23 // pred_check
        %p128 = pneg %p29
      $region26: #{pconv_bn_activ.3} parent=23 // pred_check_branch
        %130 = sbr.rel (%p128) target = $region28
      $region27: #{pconv_bn_activ.3} parent=23 // pred_region
        %p131 = scmp.lt.s32.totalorder %s9, 1
        %s132 = scalar_select %p131, %s9, 1
        %s133 = smul.addr %s132, 32
        %s134 = smul.addr %s133, 8
        %s135 = scalar_lea.vmem %s0, %s134
      $region28: #{pconv_bn_activ.3} parent=23 // pred_fallthru
        _
    $region24: #{pconv_bn_activ.3} parent=5 // pred_fallthru
      _
    %p136 = scmp.le.s32.totalorder 1, %s9
    %p137 = scmp.lt.s32.totalorder %s9, 3
    %p138 = pnand %p136, %p137
    %p139 = pneg %p138
    // Predicated region
    $region29: #{pconv_bn_activ.3} parent=5 // pred_check
      _
    $region30: #{pconv_bn_activ.3} parent=5 // pred_check_branch
      %141 = sbr.rel (%p138) target = $region32
    $region31: #{pconv_bn_activ.3} parent=5 // pred_region
      %s142 = ssub.s32 %s9, 1
      %p143 = scmp.lt.s32.totalorder %s14, 1
      %s144 = scalar_select %p143, %s14, 1
      %s145 = smul.addr %s144, 32
      %s146 = smul.addr %s145, 8
      %s147 = scalar_lea.vmem %s0, %s146
      %p148 = pneg %p35
      %p149 = pneg %p32
      %p150 = pneg %p56
      %p151 = pneg %p53
      %p152 = pneg %p77
      %p153 = pneg %p74
      %p154 = pneg %p103
      %p155 = pneg %p100
      %p156 = scmp.lt.s32.totalorder %s14, 1
      %s157 = scalar_select %p156, %s14, 1
      %s158 = smul.addr %s157, 32
      %s159 = smul.addr %s158, 8
      %s160 = scalar_lea.vmem %s3, %s159
      %p161 = scmp.lt.s32.totalorder %s14, 1
      %s162 = scalar_select %p161, %s14, 1
      %s163 = smul.addr %s162, 32
      %s164 = smul.addr %s163, 8
      %s165 = scalar_lea.vmem %s0, %s164
      %p166 = scmp.lt.s32.totalorder %s14, 1
      %s167 = scalar_select %p166, %s14, 1
      %s168 = smul.addr %s167, 32
      %s169 = smul.addr %s168, 8
      %s170 = scalar_lea.vmem %s3, %s169
      %v171 = vld [vmem:[%s165] sm:$0xff]
      %v172 = vld [vmem:[%s165 + $0x8] sm:$0xff]
      %v173 = vld [vmem:[%s165 + $0x10] sm:$0xff]
      %v174 = vld [vmem:[%s165 + $0x18] sm:$0xff]
      %v175 = vld [vmem:[%s165 + $0x20] sm:$0xff]
      %v176 = vld [vmem:[%s165 + $0x28] sm:$0xff]
      %v177 = vld [vmem:[%s165 + $0x30] sm:$0xff]
      %v178 = vld [vmem:[%s165 + $0x38] sm:$0xff]
      %v179 = vld [vmem:[%s165 + $0x40] sm:$0xff]
      %v180 = vld [vmem:[%s165 + $0x48] sm:$0xff]
      %v181 = vld [vmem:[%s165 + $0x50] sm:$0xff]
      %v182 = vld [vmem:[%s165 + $0x58] sm:$0xff]
      %v183 = vld [vmem:[%s165 + $0x60] sm:$0xff]
      %v184 = vld [vmem:[%s165 + $0x68] sm:$0xff]
      %v185 = vld [vmem:[%s165 + $0x70] sm:$0xff]
      %v186 = vld [vmem:[%s165 + $0x78] sm:$0xff]
      %v187 = vld [vmem:[%s165 + $0x80] sm:$0xff]
      %v188 = vld [vmem:[%s165 + $0x88] sm:$0xff]
      %v189 = vld [vmem:[%s165 + $0x90] sm:$0xff]
      %v190 = vld [vmem:[%s165 + $0x98] sm:$0xff]
      %v191 = vld [vmem:[%s165 + $0xa0] sm:$0xff]
      %v192 = vld [vmem:[%s165 + $0xa8] sm:$0xff]
      %v193 = vld [vmem:[%s165 + $0xb0] sm:$0xff]
      %v194 = vld [vmem:[%s165 + $0xb8] sm:$0xff]
      %v195 = vld [vmem:[%s165 + $0xc0] sm:$0xff]
      %v196 = vld [vmem:[%s165 + $0xc8] sm:$0xff]
      %v197 = vld [vmem:[%s165 + $0xd0] sm:$0xff]
      %v198 = vld [vmem:[%s165 + $0xd8] sm:$0xff]
      %v199 = vld [vmem:[%s165 + $0xe0] sm:$0xff]
      %v200 = vld [vmem:[%s165 + $0xe8] sm:$0xff]
      %v201 = vld [vmem:[%s165 + $0xf0] sm:$0xff]
      %v202 = vld [vmem:[%s165 + $0xf8] sm:$0xff]
      %v203 = vld [vmem:[%s1] sm:$0x1]
      %v205 = vlaneseq
      %v206 = vshrl.u32 %v205, 7
      %v207 = vsub.s32 0, %v206
      %v208 = vrot.slane %v203, %v207
      %v210 = vmul.f32 %v171, %v208
      %v211 = vmul.f32 %v172, %v208
      %v212 = vmul.f32 %v173, %v208
      %v213 = vmul.f32 %v174, %v208
      %v214 = vmul.f32 %v175, %v208
      %v215 = vmul.f32 %v176, %v208
      %v216 = vmul.f32 %v177, %v208
      %v217 = vmul.f32 %v178, %v208
      %v218 = vmul.f32 %v179, %v208
      %v219 = vmul.f32 %v180, %v208
      %v220 = vmul.f32 %v181, %v208
      %v221 = vmul.f32 %v182, %v208
      %v222 = vmul.f32 %v183, %v208
      %v223 = vmul.f32 %v184, %v208
      %v224 = vmul.f32 %v185, %v208
      %v225 = vmul.f32 %v186, %v208
      %v226 = vmul.f32 %v187, %v208
      %v227 = vmul.f32 %v188, %v208
      %v228 = vmul.f32 %v189, %v208
      %v229 = vmul.f32 %v190, %v208
      %v230 = vmul.f32 %v191, %v208
      %v231 = vmul.f32 %v192, %v208
      %v232 = vmul.f32 %v193, %v208
      %v233 = vmul.f32 %v194, %v208
      %v234 = vmul.f32 %v195, %v208
      %v235 = vmul.f32 %v196, %v208
      %v236 = vmul.f32 %v197, %v208
      %v237 = vmul.f32 %v198, %v208
      %v238 = vmul.f32 %v199, %v208
      %v239 = vmul.f32 %v200, %v208
      %v240 = vmul.f32 %v201, %v208
      %v241 = vmul.f32 %v202, %v208
      %v242 = vld [vmem:[%s2] sm:$0x1]
      %v244 = vlaneseq
      %v245 = vshrl.u32 %v244, 7
      %v246 = vsub.s32 0, %v245
      %v247 = vrot.slane %v242, %v246
      %v249 = vadd.f32 %v210, %v247
      %v250 = vadd.f32 %v211, %v247
      %v251 = vadd.f32 %v212, %v247
      %v252 = vadd.f32 %v213, %v247
      %v253 = vadd.f32 %v214, %v247
      %v254 = vadd.f32 %v215, %v247
      %v255 = vadd.f32 %v216, %v247
      %v256 = vadd.f32 %v217, %v247
      %v257 = vadd.f32 %v218, %v247
      %v258 = vadd.f32 %v219, %v247
      %v259 = vadd.f32 %v220, %v247
      %v260 = vadd.f32 %v221, %v247
      %v261 = vadd.f32 %v222, %v247
      %v262 = vadd.f32 %v223, %v247
      %v263 = vadd.f32 %v224, %v247
      %v264 = vadd.f32 %v225, %v247
      %v265 = vadd.f32 %v226, %v247
      %v266 = vadd.f32 %v227, %v247
      %v267 = vadd.f32 %v228, %v247
      %v268 = vadd.f32 %v229, %v247
      %v269 = vadd.f32 %v230, %v247
      %v270 = vadd.f32 %v231, %v247
      %v271 = vadd.f32 %v232, %v247
      %v272 = vadd.f32 %v233, %v247
      %v273 = vadd.f32 %v234, %v247
      %v274 = vadd.f32 %v235, %v247
      %v275 = vadd.f32 %v236, %v247
      %v276 = vadd.f32 %v237, %v247
      %v277 = vadd.f32 %v238, %v247
      %v278 = vadd.f32 %v239, %v247
      %v279 = vadd.f32 %v240, %v247
      %v280 = vadd.f32 %v241, %v247
      %v281 = vmax.f32 %v249, 0.0
      %v282 = vmax.f32 %v250, 0.0
      %v283 = vmax.f32 %v251, 0.0
      %v284 = vmax.f32 %v252, 0.0
      %v285 = vmax.f32 %v253, 0.0
      %v286 = vmax.f32 %v254, 0.0
      %v287 = vmax.f32 %v255, 0.0
      %v288 = vmax.f32 %v256, 0.0
      %v289 = vmax.f32 %v257, 0.0
      %v290 = vmax.f32 %v258, 0.0
      %v291 = vmax.f32 %v259, 0.0
      %v292 = vmax.f32 %v260, 0.0
      %v293 = vmax.f32 %v261, 0.0
      %v294 = vmax.f32 %v262, 0.0
      %v295 = vmax.f32 %v263, 0.0
      %v296 = vmax.f32 %v264, 0.0
      %v297 = vmax.f32 %v265, 0.0
      %v298 = vmax.f32 %v266, 0.0
      %v299 = vmax.f32 %v267, 0.0
      %v300 = vmax.f32 %v268, 0.0
      %v301 = vmax.f32 %v269, 0.0
      %v302 = vmax.f32 %v270, 0.0
      %v303 = vmax.f32 %v271, 0.0
      %v304 = vmax.f32 %v272, 0.0
      %v305 = vmax.f32 %v273, 0.0
      %v306 = vmax.f32 %v274, 0.0
      %v307 = vmax.f32 %v275, 0.0
      %v308 = vmax.f32 %v276, 0.0
      %v309 = vmax.f32 %v277, 0.0
      %v310 = vmax.f32 %v278, 0.0
      %v311 = vmax.f32 %v279, 0.0
      %v312 = vmax.f32 %v280, 0.0
      %313 = vst [vmem:[%s170] sm:$0xff] %v281
      %314 = vst [vmem:[%s170 + $0x8] sm:$0xff] %v282
      %315 = vst [vmem:[%s170 + $0x10] sm:$0xff] %v283
      %316 = vst [vmem:[%s170 + $0x18] sm:$0xff] %v284
      %317 = vst [vmem:[%s170 + $0x20] sm:$0xff] %v285
      %318 = vst [vmem:[%s170 + $0x28] sm:$0xff] %v286
      %319 = vst [vmem:[%s170 + $0x30] sm:$0xff] %v287
      %320 = vst [vmem:[%s170 + $0x38] sm:$0xff] %v288
      %321 = vst [vmem:[%s170 + $0x40] sm:$0xff] %v289
      %322 = vst [vmem:[%s170 + $0x48] sm:$0xff] %v290
      %323 = vst [vmem:[%s170 + $0x50] sm:$0xff] %v291
      %324 = vst [vmem:[%s170 + $0x58] sm:$0xff] %v292
      %325 = vst [vmem:[%s170 + $0x60] sm:$0xff] %v293
      %326 = vst [vmem:[%s170 + $0x68] sm:$0xff] %v294
      %327 = vst [vmem:[%s170 + $0x70] sm:$0xff] %v295
      %328 = vst [vmem:[%s170 + $0x78] sm:$0xff] %v296
      %329 = vst [vmem:[%s170 + $0x80] sm:$0xff] %v297
      %330 = vst [vmem:[%s170 + $0x88] sm:$0xff] %v298
      %331 = vst [vmem:[%s170 + $0x90] sm:$0xff] %v299
      %332 = vst [vmem:[%s170 + $0x98] sm:$0xff] %v300
      %333 = vst [vmem:[%s170 + $0xa0] sm:$0xff] %v301
      %334 = vst [vmem:[%s170 + $0xa8] sm:$0xff] %v302
      %335 = vst [vmem:[%s170 + $0xb0] sm:$0xff] %v303
      %336 = vst [vmem:[%s170 + $0xb8] sm:$0xff] %v304
      %337 = vst [vmem:[%s170 + $0xc0] sm:$0xff] %v305
      %338 = vst [vmem:[%s170 + $0xc8] sm:$0xff] %v306
      %339 = vst [vmem:[%s170 + $0xd0] sm:$0xff] %v307
      %340 = vst [vmem:[%s170 + $0xd8] sm:$0xff] %v308
      %341 = vst [vmem:[%s170 + $0xe0] sm:$0xff] %v309
      %342 = vst [vmem:[%s170 + $0xe8] sm:$0xff] %v310
      %343 = vst [vmem:[%s170 + $0xf0] sm:$0xff] %v311
      %344 = vst [vmem:[%s170 + $0xf8] sm:$0xff] %v312
      %p345 = scmp.lt.s32.totalorder %s14, 1
      %s346 = scalar_select %p345, %s14, 1
      %s347 = smul.addr %s346, 32
      %s348 = smul.addr %s347, 8
      %s349 = scalar_lea.vmem %s3, %s348
      // Predicated region
      $region33: #{pconv_bn_activ.3} parent=31 // pred_check
        %p350 = pneg %p100
      $region34: #{pconv_bn_activ.3} parent=31 // pred_check_branch
        %352 = sbr.rel (%p350) target = $region36
      $region35: #{pconv_bn_activ.3} parent=31 // pred_region
        _
      $region36: #{pconv_bn_activ.3} parent=31 // pred_fallthru
        _
    $region32: #{pconv_bn_activ.3} parent=5 // pred_fallthru
      _
    %p353 = scmp.le.s32.totalorder 2, %s9
    // Predicated region
    $region37: #{pconv_bn_activ.3} parent=5 // pred_check
      %p354 = pneg %p353
    $region38: #{pconv_bn_activ.3} parent=5 // pred_check_branch
      %356 = sbr.rel (%p354) target = $region40
    $region39: #{pconv_bn_activ.3} parent=5 // pred_region
      %s357 = ssub.s32 %s9, 2
      // Predicated region
      $region41: #{pconv_bn_activ.3} parent=39 // pred_check
        %p358 = pneg %p106
      $region42: #{pconv_bn_activ.3} parent=39 // pred_check_branch
        %360 = sbr.rel (%p358) target = $region44
      $region43: #{pconv_bn_activ.3} parent=39 // pred_region
        %p361 = scmp.lt.s32.totalorder %s15, 1
        %s362 = scalar_select %p361, %s15, 1
        %s363 = smul.addr %s362, 32
        %s364 = smul.addr %s363, 8
        %s365 = scalar_lea.vmem %s3, %s364
      $region44: #{pconv_bn_activ.3} parent=39 // pred_fallthru
        _
    $region40: #{pconv_bn_activ.3} parent=5 // pred_fallthru
      _
  $region6: #{pconv_bn_activ.3} parent=0 // loop_footer
    %s13 = sadd.s32 1, %s9
  $region7: #{pconv_bn_activ.3} parent=0 // loop_footer_branch
    %8 = sbr.rel target = $region3
  $region8: #{pconv_bn_activ.3} parent=0 // loop_exit
    _

// kernel: pconv_bn_activ.2
$region0: #{pconv_bn_activ.2}
  #allocation0 [shape = 'u32[]', space=smem, size = 0x4, offset = 0x4, fixed_abs, tag = 'smem constant byte address 0x4 - core index']
  #allocation1 [shape = 'u32[144,128]{1,0:T(1,128)}', space=vmem, size = 0x12000, scoped, tag = 'internal scratch']
  %s0 = inlined_call_operand.vmem [shape: f32[2,18,18,4], index: 0, kind: input, shape index: {}]
  %s1 = inlined_call_operand.vmem [shape: f32[2,18,18,4], index: 1, kind: input, shape index: {}]
  %s2 = inlined_call_operand.vmem [shape: bf16[9,4,128], index: 2, kind: input, shape index: {}]
  %s3 = inlined_call_operand.vmem [shape: f32[2,256,128], index: 3, kind: output, shape index: {0}]
  %s4 = inlined_call_operand.vmem [shape: f32[2,256,1], index: 4, kind: output, shape index: {1}]
  %s5 = inlined_call_operand.vmem [shape: f32[2,8,128], index: 5, kind: output, shape index: {2}]
  %6 = xla_tuple %s3, %s4, %s5
  %s7 = sld [smem:[#allocation0]]
  $region61: #{pconv_bn_activ.2} parent=0
    _
  %s9 = ssub.s32 1, %s7
  %s10 = scalar_select 0, %s9, %s7
  loop: start=0, step=1, limit=4
  $region2: #{pconv_bn_activ.2} parent=0 // loop_pre_header
    _
  $region3: #{pconv_bn_activ.2} parent=0 // loop_header
    %s12 = sphi 0, %s16
    %p13 = scmp.ge.s32.totalorder %s12, 4
    %s22 = sphi 0, %s24
    %s25 = sphi 0, %s22
    %s26 = sphi 0, %s25
    %s42 = sphi 0, %s26
    %s48 = sphi 0, %s50
    %s51 = sphi 0, %s48
    %s52 = sphi 0, %s51
    %s68 = sphi 0, %s52
    %s72 = sphi 0, %s72
    %s74 = sphi 0, %s72
    %s75 = sphi 0, %s74
    %s89 = sphi 0, %s75
    %s95 = sphi 0, %s97
    %s98 = sphi 0, %s95
    %s99 = sphi 0, %s98
    %s115 = sphi 0, %s99
    %s121 = sphi 0, %s123
    %s124 = sphi 0, %s121
    %s125 = sphi 0, %s124
    %s141 = sphi 0, %s125
    %s147 = sphi 0, %s149
    %s150 = sphi 0, %s147
    %s151 = sphi 0, %s150
    %s167 = sphi 0, %s151
  $region4: #{pconv_bn_activ.2} parent=0 // loop_header_branch
    %15 = sbr.rel (%p13) target = $region8
  $region5: #{pconv_bn_activ.2} parent=0 // loop_body
    %s17 = ssub.s32 %s12, 1
    %s18 = ssub.s32 %s12, 2
    %s19 = sadd.s32 %s12, 1
    %s20 = ssub.s32 %s12, %s19
    %p21 = scmp.eq.s32.totalorder %s20, 0
    %s23 = sadd.s32 %s22, 1
    %s24 = scalar_select %p21, %s22, %s23
    %p27 = pneg %p21
    %p28 = scmp.eq.s32.totalorder %s12, 1
    %p29 = por %p27, %p28
    %p30 = scmp.ne.s32.totalorder %s22, %s25
    %p31 = scmp.eq.s32.totalorder %s12, 0
    %p32 = por %p30, %p31
    %p33 = scmp.ne.s32.totalorder %s22, %s25
    %p34 = scmp.eq.s32.totalorder %s17, 1
    %p35 = por %p33, %p34
    %p36 = scmp.ne.s32.totalorder %s25, %s26
    %p37 = scmp.eq.s32.totalorder %s17, 0
    %p38 = por %p36, %p37
    %p39 = scmp.ne.s32.totalorder %s25, %s26
    %p40 = scmp.eq.s32.totalorder %s18, 1
    %p41 = por %p39, %p40
    %p43 = scmp.ne.s32.totalorder %s26, %s42
    %p44 = scmp.eq.s32.totalorder %s18, 0
    %p45 = por %p43, %p44
    %s46 = ssub.s32 %s12, %s19
    %p47 = scmp.eq.s32.totalorder %s46, 0
    %s49 = sadd.s32 %s48, 1
    %s50 = scalar_select %p47, %s48, %s49
    %p53 = pneg %p47
    %p54 = scmp.eq.s32.totalorder %s12, 1
    %p55 = por %p53, %p54
    %p56 = scmp.ne.s32.totalorder %s48, %s51
    %p57 = scmp.eq.s32.totalorder %s12, 0
    %p58 = por %p56, %p57
    %p59 = scmp.ne.s32.totalorder %s48, %s51
    %p60 = scmp.eq.s32.totalorder %s17, 1
    %p61 = por %p59, %p60
    %p62 = scmp.ne.s32.totalorder %s51, %s52
    %p63 = scmp.eq.s32.totalorder %s17, 0
    %p64 = por %p62, %p63
    %p65 = scmp.ne.s32.totalorder %s51, %s52
    %p66 = scmp.eq.s32.totalorder %s18, 1
    %p67 = por %p65, %p66
    %p69 = scmp.ne.s32.totalorder %s52, %s68
    %p70 = scmp.eq.s32.totalorder %s18, 0
    %p71 = por %p69, %p70
    %s73 = sadd.s32 %s72, 1
    %p76 = scmp.eq.s32.totalorder %s12, 1
    %p77 = scmp.ne.s32.totalorder %s72, %s74
    %p78 = scmp.eq.s32.totalorder %s12, 0
    %p79 = por %p77, %p78
    %p80 = scmp.ne.s32.totalorder %s72, %s74
    %p81 = scmp.eq.s32.totalorder %s17, 1
    %p82 = por %p80, %p81
    %p83 = scmp.ne.s32.totalorder %s74, %s75
    %p84 = scmp.eq.s32.totalorder %s17, 0
    %p85 = por %p83, %p84
    %p86 = scmp.ne.s32.totalorder %s74, %s75
    %p87 = scmp.eq.s32.totalorder %s18, 1
    %p88 = por %p86, %p87
    %p90 = scmp.ne.s32.totalorder %s75, %s89
    %p91 = scmp.eq.s32.totalorder %s18, 0
    %p92 = por %p90, %p91
    %s93 = ssub.s32 %s12, %s19
    %p94 = scmp.eq.s32.totalorder %s93, 0
    %s96 = sadd.s32 %s95, 1
    %s97 = scalar_select %p94, %s95, %s96
    %p100 = pneg %p94
    %p101 = scmp.eq.s32.totalorder %s12, 1
    %p102 = por %p100, %p101
    %p103 = scmp.ne.s32.totalorder %s95, %s98
    %p104 = scmp.eq.s32.totalorder %s12, 0
    %p105 = por %p103, %p104
    %p106 = scmp.ne.s32.totalorder %s95, %s98
    %p107 = scmp.eq.s32.totalorder %s17, 1
    %p108 = por %p106, %p107
    %p109 = scmp.ne.s32.totalorder %s98, %s99
    %p110 = scmp.eq.s32.totalorder %s17, 0
    %p111 = por %p109, %p110
    %p112 = scmp.ne.s32.totalorder %s98, %s99
    %p113 = scmp.eq.s32.totalorder %s18, 1
    %p114 = por %p112, %p113
    %p116 = scmp.ne.s32.totalorder %s99, %s115
    %p117 = scmp.eq.s32.totalorder %s18, 0
    %p118 = por %p116, %p117
    %s119 = ssub.s32 %s12, %s19
    %p120 = scmp.eq.s32.totalorder %s119, 0
    %s122 = sadd.s32 %s121, 1
    %s123 = scalar_select %p120, %s121, %s122
    %p126 = pneg %p120
    %p127 = scmp.eq.s32.totalorder %s12, 1
    %p128 = por %p126, %p127
    %p129 = scmp.ne.s32.totalorder %s121, %s124
    %p130 = scmp.eq.s32.totalorder %s12, 0
    %p131 = por %p129, %p130
    %p132 = scmp.ne.s32.totalorder %s121, %s124
    %p133 = scmp.eq.s32.totalorder %s17, 1
    %p134 = por %p132, %p133
    %p135 = scmp.ne.s32.totalorder %s124, %s125
    %p136 = scmp.eq.s32.totalorder %s17, 0
    %p137 = por %p135, %p136
    %p138 = scmp.ne.s32.totalorder %s124, %s125
    %p139 = scmp.eq.s32.totalorder %s18, 1
    %p140 = por %p138, %p139
    %p142 = scmp.ne.s32.totalorder %s125, %s141
    %p143 = scmp.eq.s32.totalorder %s18, 0
    %p144 = por %p142, %p143
    %s145 = ssub.s32 %s12, %s19
    %p146 = scmp.eq.s32.totalorder %s145, 0
    %s148 = sadd.s32 %s147, 1
    %s149 = scalar_select %p146, %s147, %s148
    %p152 = pneg %p146
    %p153 = scmp.eq.s32.totalorder %s12, 1
    %p154 = por %p152, %p153
    %p155 = scmp.ne.s32.totalorder %s147, %s150
    %p156 = scmp.eq.s32.totalorder %s12, 0
    %p157 = por %p155, %p156
    %p158 = scmp.ne.s32.totalorder %s147, %s150
    %p159 = scmp.eq.s32.totalorder %s17, 1
    %p160 = por %p158, %p159
    %p161 = scmp.ne.s32.totalorder %s150, %s151
    %p162 = scmp.eq.s32.totalorder %s17, 0
    %p163 = por %p161, %p162
    %p164 = scmp.ne.s32.totalorder %s150, %s151
    %p165 = scmp.eq.s32.totalorder %s18, 1
    %p166 = por %p164, %p165
    %p168 = scmp.ne.s32.totalorder %s151, %s167
    %p169 = scmp.eq.s32.totalorder %s18, 0
    %p170 = por %p168, %p169
    %p171 = scmp.le.s32.totalorder 1, %s12
    %p172 = scmp.lt.s32.totalorder %s12, 3
    %p173 = pnand %p171, %p172
    %p174 = pneg %p173
    // Predicated region
    $region9: #{pconv_bn_activ.2} parent=5 // pred_check
      _
    $region10: #{pconv_bn_activ.2} parent=5 // pred_check_branch
      %176 = sbr.rel (%p173) target = $region12
    $region11: #{pconv_bn_activ.2} parent=5 // pred_region
      %s177 = ssub.s32 %s12, 1
      // Predicated region
      $region13: #{pconv_bn_activ.2} parent=11 // pred_check
        %p178 = pneg %p85
      $region14: #{pconv_bn_activ.2} parent=11 // pred_check_branch
        %180 = sbr.rel (%p178) target = $region16
      $region15: #{pconv_bn_activ.2} parent=11 // pred_region
        _
      $region16: #{pconv_bn_activ.2} parent=11 // pred_fallthru
        _
    $region12: #{pconv_bn_activ.2} parent=5 // pred_fallthru
      _
    %p181 = scmp.lt.s32.totalorder %s12, 2
    // Predicated region
    $region17: #{pconv_bn_activ.2} parent=5 // pred_check
      %p182 = pneg %p181
    $region18: #{pconv_bn_activ.2} parent=5 // pred_check_branch
      %184 = sbr.rel (%p182) target = $region20
    $region19: #{pconv_bn_activ.2} parent=5 // pred_region
      // Predicated region
      $region21: #{pconv_bn_activ.2} parent=19 // pred_check
        %p185 = pneg %p32
      $region22: #{pconv_bn_activ.2} parent=19 // pred_check_branch
        %187 = sbr.rel (%p185) target = $region24
      $region23: #{pconv_bn_activ.2} parent=19 // pred_region
        %p188 = scmp.lt.s32.totalorder %s12, 1
        %s189 = scalar_select %p188, %s12, 1
        %s190 = smul.addr %s189, 54
        %s191 = smul.addr %s190, 8
        %s192 = scalar_lea.vmem %s0, %s191
      $region24: #{pconv_bn_activ.2} parent=19 // pred_fallthru
        _
      // Predicated region
      $region25: #{pconv_bn_activ.2} parent=19 // pred_check
        %p193 = pneg %p58
      $region26: #{pconv_bn_activ.2} parent=19 // pred_check_branch
        %195 = sbr.rel (%p193) target = $region28
      $region27: #{pconv_bn_activ.2} parent=19 // pred_region
        %p196 = scmp.lt.s32.totalorder %s12, 1
        %s197 = scalar_select %p196, %s12, 1
        %s198 = smul.addr %s197, 54
        %s199 = smul.addr %s198, 8
        %s200 = scalar_lea.vmem %s1, %s199
      $region28: #{pconv_bn_activ.2} parent=19 // pred_fallthru
        _
    $region20: #{pconv_bn_activ.2} parent=5 // pred_fallthru
      _
    %p201 = scmp.le.s32.totalorder 1, %s12
    %p202 = scmp.lt.s32.totalorder %s12, 3
    %p203 = pnand %p201, %p202
    %p204 = pneg %p203
    // Predicated region
    $region29: #{pconv_bn_activ.2} parent=5 // pred_check
      _
    $region30: #{pconv_bn_activ.2} parent=5 // pred_check_branch
      %206 = sbr.rel (%p203) target = $region32
    $region31: #{pconv_bn_activ.2} parent=5 // pred_region
      %s207 = ssub.s32 %s12, 1
      %p208 = scmp.lt.s32.totalorder %s17, 1
      %s209 = scalar_select %p208, %s17, 1
      %s210 = smul.addr %s209, 54
      %s211 = smul.addr %s210, 8
      %s212 = scalar_lea.vmem %s0, %s211
      %p213 = pneg %p38
      %p214 = pneg %p35
      %p215 = scmp.lt.s32.totalorder %s17, 1
      %s216 = scalar_select %p215, %s17, 1
      %s217 = smul.addr %s216, 54
      %s218 = smul.addr %s217, 8
      %s219 = scalar_lea.vmem %s1, %s218
      %p220 = pneg %p64
      %p221 = pneg %p61
      %p222 = pneg %p85
      %p223 = pneg %p82
      %p224 = pneg %p111
      %p225 = pneg %p108
      %p226 = scmp.lt.s32.totalorder %s17, 1
      %s227 = scalar_select %p226, %s17, 1
      %s228 = smul.addr %s227, 32
      %s229 = smul.addr %s228, 8
      %s230 = scalar_lea.vmem %s3, %s229
      %p231 = pneg %p137
      %p232 = pneg %p134
      %p233 = scmp.lt.s32.totalorder %s17, 1
      %s234 = scalar_select %p233, %s17, 1
      %s235 = smul.addr %s234, 32
      %s236 = smul.addr %s235, 8
      %s237 = scalar_lea.vmem %s4, %s236
      %p238 = pneg %p163
      %p239 = pneg %p160
      %p240 = scmp.lt.s32.totalorder %s17, 1
      %s241 = scalar_select %p240, %s17, 1
      %s242 = smul.addr %s241, 8
      %s243 = scalar_lea.vmem %s5, %s242
      %p244 = scmp.lt.s32.totalorder %s17, 1
      %s245 = scalar_select %p244, %s17, 1
      %s246 = smul.addr %s245, 54
      %s247 = smul.addr %s246, 8
      %s248 = scalar_lea.vmem %s0, %s247
      %p249 = scmp.lt.s32.totalorder %s17, 1
      %s250 = scalar_select %p249, %s17, 1
      %s251 = smul.addr %s250, 54
      %s252 = smul.addr %s251, 8
      %s253 = scalar_lea.vmem %s1, %s252
      %p254 = scmp.lt.s32.totalorder %s17, 1
      %s255 = scalar_select %p254, %s17, 1
      %s256 = smul.addr %s255, 32
      %s257 = smul.addr %s256, 8
      %s258 = scalar_lea.vmem %s3, %s257
      %p259 = scmp.lt.s32.totalorder %s17, 1
      %s260 = scalar_select %p259, %s17, 1
      %s261 = smul.addr %s260, 32
      %s262 = smul.addr %s261, 8
      %s263 = scalar_lea.vmem %s4, %s262
      %p264 = scmp.lt.s32.totalorder %s17, 1
      %s265 = scalar_select %p264, %s17, 1
      %s266 = smul.addr %s265, 8
      %s267 = scalar_lea.vmem %s5, %s266
      %v269 = vld [vmem:[%s248] sm:$0xff]
      %v270 = vld [vmem:[%s248 + $0x8] sm:$0xff]
      %v271 = vld [vmem:[%s248 + $0x10] sm:$0x3]
      %v272 = vld [vmem:[%s248 + $0x18] sm:$0xff]
      %v273 = vld [vmem:[%s248 + $0x20] sm:$0xff]
      %v274 = vld [vmem:[%s248 + $0x28] sm:$0x3]
      %v275 = vld [vmem:[%s248 + $0x30] sm:$0xff]
      %v276 = vld [vmem:[%s248 + $0x38] sm:$0xff]
      %v277 = vld [vmem:[%s248 + $0x40] sm:$0x3]
      %v278 = vld [vmem:[%s248 + $0x48] sm:$0xff]
      %v279 = vld [vmem:[%s248 + $0x50] sm:$0xff]
      %v280 = vld [vmem:[%s248 + $0x58] sm:$0x3]
      %v281 = vld [vmem:[%s248 + $0x60] sm:$0xff]
      %v282 = vld [vmem:[%s248 + $0x68] sm:$0xff]
      %v283 = vld [vmem:[%s248 + $0x70] sm:$0x3]
      %v284 = vld [vmem:[%s248 + $0x78] sm:$0xff]
      %v285 = vld [vmem:[%s248 + $0x80] sm:$0xff]
      %v286 = vld [vmem:[%s248 + $0x88] sm:$0x3]
      %v287 = vld [vmem:[%s248 + $0x90] sm:$0xff]
      %v288 = vld [vmem:[%s248 + $0x98] sm:$0xff]
      %v289 = vld [vmem:[%s248 + $0xa0] sm:$0x3]
      %v290 = vld [vmem:[%s248 + $0xa8] sm:$0xff]
      %v291 = vld [vmem:[%s248 + $0xb0] sm:$0xff]
      %v292 = vld [vmem:[%s248 + $0xb8] sm:$0x3]
      %v293 = vld [vmem:[%s248 + $0xc0] sm:$0xff]
      %v294 = vld [vmem:[%s248 + $0xc8] sm:$0xff]
      %v295 = vld [vmem:[%s248 + $0xd0] sm:$0x3]
      %v296 = vld [vmem:[%s248 + $0xd8] sm:$0xff]
      %v297 = vld [vmem:[%s248 + $0xe0] sm:$0xff]
      %v298 = vld [vmem:[%s248 + $0xe8] sm:$0x3]
      %v299 = vld [vmem:[%s248 + $0xf0] sm:$0xff]
      %v300 = vld [vmem:[%s248 + $0xf8] sm:$0xff]
      %v301 = vld [vmem:[%s248 + $0x100] sm:$0x3]
      %v302 = vld [vmem:[%s248 + $0x108] sm:$0xff]
      %v303 = vld [vmem:[%s248 + $0x110] sm:$0xff]
      %v304 = vld [vmem:[%s248 + $0x118] sm:$0x3]
      %v305 = vld [vmem:[%s248 + $0x120] sm:$0xff]
      %v306 = vld [vmem:[%s248 + $0x128] sm:$0xff]
      %v307 = vld [vmem:[%s248 + $0x130] sm:$0x3]
      %v308 = vld [vmem:[%s248 + $0x138] sm:$0xff]
      %v309 = vld [vmem:[%s248 + $0x140] sm:$0xff]
      %v310 = vld [vmem:[%s248 + $0x148] sm:$0x3]
      %v311 = vld [vmem:[%s248 + $0x150] sm:$0xff]
      %v312 = vld [vmem:[%s248 + $0x158] sm:$0xff]
      %v313 = vld [vmem:[%s248 + $0x160] sm:$0x3]
      %v314 = vld [vmem:[%s248 + $0x168] sm:$0xff]
      %v315 = vld [vmem:[%s248 + $0x170] sm:$0xff]
      %v316 = vld [vmem:[%s248 + $0x178] sm:$0x3]
      %v317 = vld [vmem:[%s248 + $0x180] sm:$0xff]
      %v318 = vld [vmem:[%s248 + $0x188] sm:$0xff]
      %v319 = vld [vmem:[%s248 + $0x190] sm:$0x3]
      %v320 = vld [vmem:[%s248 + $0x198] sm:$0xff]
      %v321 = vld [vmem:[%s248 + $0x1a0] sm:$0xff]
      %v322 = vld [vmem:[%s248 + $0x1a8] sm:$0x3]
      %v323 = vld [vmem:[%s253] sm:$0xff]
      %v324 = vld [vmem:[%s253 + $0x8] sm:$0xff]
      %v325 = vld [vmem:[%s253 + $0x10] sm:$0x3]
      %v326 = vld [vmem:[%s253 + $0x18] sm:$0xff]
      %v327 = vld [vmem:[%s253 + $0x20] sm:$0xff]
      %v328 = vld [vmem:[%s253 + $0x28] sm:$0x3]
      %v329 = vld [vmem:[%s253 + $0x30] sm:$0xff]
      %v330 = vld [vmem:[%s253 + $0x38] sm:$0xff]
      %v331 = vld [vmem:[%s253 + $0x40] sm:$0x3]
      %v332 = vld [vmem:[%s253 + $0x48] sm:$0xff]
      %v333 = vld [vmem:[%s253 + $0x50] sm:$0xff]
      %v334 = vld [vmem:[%s253 + $0x58] sm:$0x3]
      %v335 = vld [vmem:[%s253 + $0x60] sm:$0xff]
      %v336 = vld [vmem:[%s253 + $0x68] sm:$0xff]
      %v337 = vld [vmem:[%s253 + $0x70] sm:$0x3]
      %v338 = vld [vmem:[%s253 + $0x78] sm:$0xff]
      %v339 = vld [vmem:[%s253 + $0x80] sm:$0xff]
      %v340 = vld [vmem:[%s253 + $0x88] sm:$0x3]
      %v341 = vld [vmem:[%s253 + $0x90] sm:$0xff]
      %v342 = vld [vmem:[%s253 + $0x98] sm:$0xff]
      %v343 = vld [vmem:[%s253 + $0xa0] sm:$0x3]
      %v344 = vld [vmem:[%s253 + $0xa8] sm:$0xff]
      %v345 = vld [vmem:[%s253 + $0xb0] sm:$0xff]
      %v346 = vld [vmem:[%s253 + $0xb8] sm:$0x3]
      %v347 = vld [vmem:[%s253 + $0xc0] sm:$0xff]
      %v348 = vld [vmem:[%s253 + $0xc8] sm:$0xff]
      %v349 = vld [vmem:[%s253 + $0xd0] sm:$0x3]
      %v350 = vld [vmem:[%s253 + $0xd8] sm:$0xff]
      %v351 = vld [vmem:[%s253 + $0xe0] sm:$0xff]
      %v352 = vld [vmem:[%s253 + $0xe8] sm:$0x3]
      %v353 = vld [vmem:[%s253 + $0xf0] sm:$0xff]
      %v354 = vld [vmem:[%s253 + $0xf8] sm:$0xff]
      %v355 = vld [vmem:[%s253 + $0x100] sm:$0x3]
      %v356 = vld [vmem:[%s253 + $0x108] sm:$0xff]
      %v357 = vld [vmem:[%s253 + $0x110] sm:$0xff]
      %v358 = vld [vmem:[%s253 + $0x118] sm:$0x3]
      %v359 = vld [vmem:[%s253 + $0x120] sm:$0xff]
      %v360 = vld [vmem:[%s253 + $0x128] sm:$0xff]
      %v361 = vld [vmem:[%s253 + $0x130] sm:$0x3]
      %v362 = vld [vmem:[%s253 + $0x138] sm:$0xff]
      %v363 = vld [vmem:[%s253 + $0x140] sm:$0xff]
      %v364 = vld [vmem:[%s253 + $0x148] sm:$0x3]
      %v365 = vld [vmem:[%s253 + $0x150] sm:$0xff]
      %v366 = vld [vmem:[%s253 + $0x158] sm:$0xff]
      %v367 = vld [vmem:[%s253 + $0x160] sm:$0x3]
      %v368 = vld [vmem:[%s253 + $0x168] sm:$0xff]
      %v369 = vld [vmem:[%s253 + $0x170] sm:$0xff]
      %v370 = vld [vmem:[%s253 + $0x178] sm:$0x3]
      %v371 = vld [vmem:[%s253 + $0x180] sm:$0xff]
      %v372 = vld [vmem:[%s253 + $0x188] sm:$0xff]
      %v373 = vld [vmem:[%s253 + $0x190] sm:$0x3]
      %v374 = vld [vmem:[%s253 + $0x198] sm:$0xff]
      %v375 = vld [vmem:[%s253 + $0x1a0] sm:$0xff]
      %v376 = vld [vmem:[%s253 + $0x1a8] sm:$0x3]
      %v377 = vmul.f32 %v269, %v323
      %v378 = vmul.f32 %v270, %v324
      %v379 = vmul.f32 %v271, %v325
      %v380 = vmul.f32 %v272, %v326
      %v381 = vmul.f32 %v273, %v327
      %v382 = vmul.f32 %v274, %v328
      %v383 = vmul.f32 %v275, %v329
      %v384 = vmul.f32 %v276, %v330
      %v385 = vmul.f32 %v277, %v331
      %v386 = vmul.f32 %v278, %v332
      %v387 = vmul.f32 %v279, %v333
      %v388 = vmul.f32 %v280, %v334
      %v389 = vmul.f32 %v281, %v335
      %v390 = vmul.f32 %v282, %v336
      %v391 = vmul.f32 %v283, %v337
      %v392 = vmul.f32 %v284, %v338
      %v393 = vmul.f32 %v285, %v339
      %v394 = vmul.f32 %v286, %v340
      %v395 = vmul.f32 %v287, %v341
      %v396 = vmul.f32 %v288, %v342
      %v397 = vmul.f32 %v289, %v343
      %v398 = vmul.f32 %v290, %v344
      %v399 = vmul.f32 %v291, %v345
      %v400 = vmul.f32 %v292, %v346
      %v401 = vmul.f32 %v293, %v347
      %v402 = vmul.f32 %v294, %v348
      %v403 = vmul.f32 %v295, %v349
      %v404 = vmul.f32 %v296, %v350
      %v405 = vmul.f32 %v297, %v351
      %v406 = vmul.f32 %v298, %v352
      %v407 = vmul.f32 %v299, %v353
      %v408 = vmul.f32 %v300, %v354
      %v409 = vmul.f32 %v301, %v355
      %v410 = vmul.f32 %v302, %v356
      %v411 = vmul.f32 %v303, %v357
      %v412 = vmul.f32 %v304, %v358
      %v413 = vmul.f32 %v305, %v359
      %v414 = vmul.f32 %v306, %v360
      %v415 = vmul.f32 %v307, %v361
      %v416 = vmul.f32 %v308, %v362
      %v417 = vmul.f32 %v309, %v363
      %v418 = vmul.f32 %v310, %v364
      %v419 = vmul.f32 %v311, %v365
      %v420 = vmul.f32 %v312, %v366
      %v421 = vmul.f32 %v313, %v367
      %v422 = vmul.f32 %v314, %v368
      %v423 = vmul.f32 %v315, %v369
      %v424 = vmul.f32 %v316, %v370
      %v425 = vmul.f32 %v317, %v371
      %v426 = vmul.f32 %v318, %v372
      %v427 = vmul.f32 %v319, %v373
      %v428 = vmul.f32 %v320, %v374
      %v429 = vmul.f32 %v321, %v375
      %v430 = vmul.f32 %v322, %v376
      %v431 = vpack.c.bf16 %v378, %v377
      %v432 = vpack.c.bf16 %v379, %v379
      %v433 = vpack.c.bf16 %v381, %v380
      %v434 = vpack.c.bf16 %v382, %v382
      %v435 = vpack.c.bf16 %v384, %v383
      %v436 = vpack.c.bf16 %v385, %v385
      %v437 = vpack.c.bf16 %v387, %v386
      %v438 = vpack.c.bf16 %v388, %v388
      %v439 = vpack.c.bf16 %v390, %v389
      %v440 = vpack.c.bf16 %v391, %v391
      %v441 = vpack.c.bf16 %v393, %v392
      %v442 = vpack.c.bf16 %v394, %v394
      %v443 = vpack.c.bf16 %v396, %v395
      %v444 = vpack.c.bf16 %v397, %v397
      %v445 = vpack.c.bf16 %v399, %v398
      %v446 = vpack.c.bf16 %v400, %v400
      %v447 = vpack.c.bf16 %v402, %v401
      %v448 = vpack.c.bf16 %v403, %v403
      %v449 = vpack.c.bf16 %v405, %v404
      %v450 = vpack.c.bf16 %v406, %v406
      %v451 = vpack.c.bf16 %v408, %v407
      %v452 = vpack.c.bf16 %v409, %v409
      %v453 = vpack.c.bf16 %v411, %v410
      %v454 = vpack.c.bf16 %v412, %v412
      %v455 = vpack.c.bf16 %v414, %v413
      %v456 = vpack.c.bf16 %v415, %v415
      %v457 = vpack.c.bf16 %v417, %v416
      %v458 = vpack.c.bf16 %v418, %v418
      %v459 = vpack.c.bf16 %v420, %v419
      %v460 = vpack.c.bf16 %v421, %v421
      %v461 = vpack.c.bf16 %v423, %v422
      %v462 = vpack.c.bf16 %v424, %v424
      %v463 = vpack.c.bf16 %v426, %v425
      %v464 = vpack.c.bf16 %v427, %v427
      %v465 = vpack.c.bf16 %v429, %v428
      %v466 = vpack.c.bf16 %v430, %v430
      %v467 = vld [vmem:[%s2] sm:$0x3]
      %v468 = vadd.f32 %v323, 0.0
      %v469 = vadd.f32 %v324, 0.0
      %v470 = vadd.f32 %v326, 0.0
      %v471 = vadd.f32 %v327, 0.0
      %v472 = vadd.f32 %v329, 0.0
      %v473 = vadd.f32 %v330, 0.0
      %v474 = vadd.f32 %v332, 0.0
      %v475 = vadd.f32 %v333, 0.0
      %v476 = vadd.f32 %v335, 0.0
      %v477 = vadd.f32 %v336, 0.0
      %v478 = vadd.f32 %v338, 0.0
      %v479 = vadd.f32 %v339, 0.0
      %v480 = vadd.f32 %v341, 0.0
      %v481 = vadd.f32 %v342, 0.0
      %v482 = vadd.f32 %v344, 0.0
      %v483 = vadd.f32 %v345, 0.0
      %v484 = vadd.f32 %v347, 0.0
      %v485 = vadd.f32 %v348, 0.0
      %v486 = vadd.f32 %v350, 0.0
      %v487 = vadd.f32 %v351, 0.0
      %v488 = vadd.f32 %v353, 0.0
      %v489 = vadd.f32 %v354, 0.0
      %v490 = vadd.f32 %v356, 0.0
      %v491 = vadd.f32 %v357, 0.0
      %v492 = vadd.f32 %v359, 0.0
      %v493 = vadd.f32 %v360, 0.0
      %v494 = vadd.f32 %v362, 0.0
      %v495 = vadd.f32 %v363, 0.0
      %v496 = vadd.f32 %v365, 0.0
      %v497 = vadd.f32 %v366, 0.0
      %v498 = vadd.f32 %v368, 0.0
      %v499 = vadd.f32 %v369, 0.0
      %vm500 = vsmask.f32 7424
      %v502 = vshrl.u32 %v431, 16
      %v504 = vshll.u32 %v431, 16
      %v506 = vrot.slane %v504, 1
      %v507 = vor.u32 %v502, %v506
      %v509 = vshll.u32 %v432, 16
      %v511 = vrot.slane %v509, 1
      %v512 = vsel %vm500, %v507, %v511
      %v514 = vshrl.u32 %v433, 16
      %v516 = vshll.u32 %v433, 16
      %v518 = vrot.slane %v516, 1
      %v519 = vor.u32 %v514, %v518
      %v521 = vshll.u32 %v434, 16
      %v523 = vrot.slane %v521, 1
      %v524 = vsel %vm500, %v519, %v523
      %v526 = vshrl.u32 %v435, 16
      %v528 = vshll.u32 %v435, 16
      %v530 = vrot.slane %v528, 1
      %v531 = vor.u32 %v526, %v530
      %v533 = vshll.u32 %v436, 16
      %v535 = vrot.slane %v533, 1
      %v536 = vsel %vm500, %v531, %v535
      %v538 = vshrl.u32 %v437, 16
      %v540 = vshll.u32 %v437, 16
      %v542 = vrot.slane %v540, 1
      %v543 = vor.u32 %v538, %v542
      %v545 = vshll.u32 %v438, 16
      %v547 = vrot.slane %v545, 1
      %v548 = vsel %vm500, %v543, %v547
      %v550 = vshrl.u32 %v439, 16
      %v552 = vshll.u32 %v439, 16
      %v554 = vrot.slane %v552, 1
      %v555 = vor.u32 %v550, %v554
      %v557 = vshll.u32 %v440, 16
      %v559 = vrot.slane %v557, 1
      %v560 = vsel %vm500, %v555, %v559
      %v562 = vshrl.u32 %v441, 16
      %v564 = vshll.u32 %v441, 16
      %v566 = vrot.slane %v564, 1
      %v567 = vor.u32 %v562, %v566
      %v569 = vshll.u32 %v442, 16
      %v571 = vrot.slane %v569, 1
      %v572 = vsel %vm500, %v567, %v571
      %v574 = vshrl.u32 %v443, 16
      %v576 = vshll.u32 %v443, 16
      %v578 = vrot.slane %v576, 1
      %v579 = vor.u32 %v574, %v578
      %v581 = vshll.u32 %v444, 16
      %v583 = vrot.slane %v581, 1
      %v584 = vsel %vm500, %v579, %v583
      %v586 = vshrl.u32 %v445, 16
      %v588 = vshll.u32 %v445, 16
      %v590 = vrot.slane %v588, 1
      %v591 = vor.u32 %v586, %v590
      %v593 = vshll.u32 %v446, 16
      %v595 = vrot.slane %v593, 1
      %v596 = vsel %vm500, %v591, %v595
      %v598 = vshrl.u32 %v447, 16
      %v600 = vshll.u32 %v447, 16
      %v602 = vrot.slane %v600, 1
      %v603 = vor.u32 %v598, %v602
      %v605 = vshll.u32 %v448, 16
      %v607 = vrot.slane %v605, 1
      %v608 = vsel %vm500, %v603, %v607
      %v610 = vshrl.u32 %v449, 16
      %v612 = vshll.u32 %v449, 16
      %v614 = vrot.slane %v612, 1
      %v615 = vor.u32 %v610, %v614
      %v617 = vshll.u32 %v450, 16
      %v619 = vrot.slane %v617, 1
      %v620 = vsel %vm500, %v615, %v619
      %v622 = vshrl.u32 %v451, 16
      %v624 = vshll.u32 %v451, 16
      %v626 = vrot.slane %v624, 1
      %v627 = vor.u32 %v622, %v626
      %v629 = vshll.u32 %v452, 16
      %v631 = vrot.slane %v629, 1
      %v632 = vsel %vm500, %v627, %v631
      %v634 = vshrl.u32 %v453, 16
      %v636 = vshll.u32 %v453, 16
      %v638 = vrot.slane %v636, 1
      %v639 = vor.u32 %v634, %v638
      %v641 = vshll.u32 %v454, 16
      %v643 = vrot.slane %v641, 1
      %v644 = vsel %vm500, %v639, %v643
      %v646 = vshrl.u32 %v455, 16
      %v648 = vshll.u32 %v455, 16
      %v650 = vrot.slane %v648, 1
      %v651 = vor.u32 %v646, %v650
      %v653 = vshll.u32 %v456, 16
      %v655 = vrot.slane %v653, 1
      %v656 = vsel %vm500, %v651, %v655
      %v658 = vshrl.u32 %v457, 16
      %v660 = vshll.u32 %v457, 16
      %v662 = vrot.slane %v660, 1
      %v663 = vor.u32 %v658, %v662
      %v665 = vshll.u32 %v458, 16
      %v667 = vrot.slane %v665, 1
      %v668 = vsel %vm500, %v663, %v667
      %v670 = vshrl.u32 %v459, 16
      %v672 = vshll.u32 %v459, 16
      %v674 = vrot.slane %v672, 1
      %v675 = vor.u32 %v670, %v674
      %v677 = vshll.u32 %v460, 16
      %v679 = vrot.slane %v677, 1
      %v680 = vsel %vm500, %v675, %v679
      %v682 = vshrl.u32 %v461, 16
      %v684 = vshll.u32 %v461, 16
      %v686 = vrot.slane %v684, 1
      %v687 = vor.u32 %v682, %v686
      %v689 = vshll.u32 %v462, 16
      %v691 = vrot.slane %v689, 1
      %v692 = vsel %vm500, %v687, %v691
      %s693 = scalar_lea.vmem %s2, 2
      %v694 = vld [vmem:[%s693] sm:$0x3]
      %vm695 = vcmask 31744
      %v697 = vsel %vm695, %v512, 0
      %v700 = vsel %vm695, %v524, 0
      %v703 = vsel %vm695, %v536, 0
      %v706 = vsel %vm695, %v548, 0
      %v709 = vsel %vm695, %v560, 0
      %v712 = vsel %vm695, %v572, 0
      %v715 = vsel %vm695, %v584, 0
      %v718 = vsel %vm695, %v596, 0
      %v721 = vsel %vm695, %v608, 0
      %v724 = vsel %vm695, %v620, 0
      %v727 = vsel %vm695, %v632, 0
      %v730 = vsel %vm695, %v644, 0
      %v733 = vsel %vm695, %v656, 0
      %v736 = vsel %vm695, %v668, 0
      %v739 = vsel %vm695, %v680, 0
      %v742 = vsel %vm695, %v692, 0
      %vm744 = vcmask 1041408
      %v746 = vsel %vm744, %v694, 0
      %748 = vmatprep.subr.bf16.mxu0 0
      %749 = vmatpush1.bf16.msra.mxu0 %v746
      %750 = vmatprep.subr.bf16.mxu0 0
      %751 = vmatpush1.bf16.msra.mxu0 0
      %752 = vmatprep.subr.bf16.mxu0 0
      %753 = vmatpush1.bf16.msra.mxu0 0
      %754 = vmatprep.subr.bf16.mxu0 0
      %755 = vmatpush1.bf16.msra.mxu0 0
      %756 = vmatprep.subr.bf16.mxu0 0
      %757 = vmatpush1.bf16.msra.mxu0 0
      %758 = vmatprep.subr.bf16.mxu0 0
      %759 = vmatpush1.bf16.msra.mxu0 0
      %760 = vmatprep.subr.bf16.mxu0 0
      %761 = vmatpush1.bf16.msra.mxu0 0
      %762 = vmatprep.subr.bf16.mxu0 0
      %763 = vmatpush1.bf16.msra.mxu0 0
      %764 = vmatprep.subr.bf16.mxu0 0
      %765 = vmatpush1.bf16.msra.mxu0 0
      %766 = vmatprep.subr.bf16.mxu0 0
      %767 = vmatpush1.bf16.msra.mxu0 0
      %768 = vmatprep.subr.bf16.mxu0 0
      %769 = vmatpush1.bf16.msra.mxu0 0
      %770 = vmatprep.subr.bf16.mxu0 0
      %771 = vmatpush1.bf16.msra.mxu0 0
      %772 = vmatprep.subr.bf16.mxu0 0
      %773 = vmatpush1.bf16.msra.mxu0 0
      %774 = vmatprep.subr.bf16.mxu0 0
      %775 = vmatpush1.bf16.msra.mxu0 0
      %776 = vmatprep.subr.bf16.mxu0 0
      %777 = vmatpush1.bf16.msra.mxu0 0
      %778 = vmatprep.subr.bf16.mxu0 0
      %779 = vmatpush1.bf16.msra.mxu0 0
      %780 = vmatprep.mubr.bf16.mxu0 0
      %781 = vmatmul.mubr.bf16.gmra.mrb[0].mxu0 %v697
      %v782 = vpop.f32.mrb[0].mxu0
      %v783 = vadd.f32 0.0, %v782
      %v784 = vpop.f32.mrb[0].mxu0
      %v785 = vpop.f32.mrb[0].mxu0
      %v786 = vadd.f32 0.0, %v785
      %v787 = vpop.f32.mrb[0].mxu0
      %788 = vmatprep.mubr.bf16.mxu0 0
      %789 = vmatmul.mubr.bf16.gmra.mrb[0].mxu0 %v700
      %v790 = vpop.f32.mrb[0].mxu0
      %v791 = vadd.f32 0.0, %v790
      %v792 = vpop.f32.mrb[0].mxu0
      %v793 = vpop.f32.mrb[0].mxu0
      %v794 = vadd.f32 0.0, %v793
      %v795 = vpop.f32.mrb[0].mxu0
      %796 = vmatprep.mubr.bf16.mxu0 0
      %797 = vmatmul.mubr.bf16.gmra.mrb[0].mxu0 %v703
      %v798 = vpop.f32.mrb[0].mxu0
      %v799 = vadd.f32 0.0, %v798
      %v800 = vpop.f32.mrb[0].mxu0
      %v801 = vpop.f32.mrb[0].mxu0
      %v802 = vadd.f32 0.0, %v801
      %v803 = vpop.f32.mrb[0].mxu0
      %804 = vmatprep.mubr.bf16.mxu0 0
      %805 = vmatmul.mubr.bf16.gmra.mrb[0].mxu0 %v706
      %v806 = vpop.f32.mrb[0].mxu0
      %v807 = vadd.f32 0.0, %v806
      %v808 = vpop.f32.mrb[0].mxu0
      %v809 = vpop.f32.mrb[0].mxu0
      %v810 = vadd.f32 0.0, %v809
      %v811 = vpop.f32.mrb[0].mxu0
      %812 = vmatprep.mubr.bf16.mxu0 0
      %813 = vmatmul.mubr.bf16.gmra.mrb[0].mxu0 %v709
      %v814 = vpop.f32.mrb[0].mxu0
      %v815 = vadd.f32 0.0, %v814
      %v816 = vpop.f32.mrb[0].mxu0
      %v817 = vpop.f32.mrb[0].mxu0
      %v818 = vadd.f32 0.0, %v817
      %v819 = vpop.f32.mrb[0].mxu0
      %820 = vmatprep.mubr.bf16.mxu0 0
      %821 = vmatmul.mubr.bf16.gmra.mrb[0].mxu0 %v712
      %v822 = vpop.f32.mrb[0].mxu0
      %v823 = vadd.f32 0.0, %v822
      %v824 = vpop.f32.mrb[0].mxu0
      %v825 = vpop.f32.mrb[0].mxu0
      %v826 = vadd.f32 0.0, %v825
      %v827 = vpop.f32.mrb[0].mxu0
      %828 = vmatprep.mubr.bf16.mxu0 0
      %829 = vmatmul.mubr.bf16.gmra.mrb[0].mxu0 %v715
      %v830 = vpop.f32.mrb[0].mxu0
      %v831 = vadd.f32 0.0, %v830
      %v832 = vpop.f32.mrb[0].mxu0
      %v833 = vpop.f32.mrb[0].mxu0
      %v834 = vadd.f32 0.0, %v833
      %v835 = vpop.f32.mrb[0].mxu0
      %836 = vmatprep.mubr.bf16.mxu0 0
      %837 = vmatmul.mubr.bf16.gmra.mrb[0].mxu0 %v718
      %v838 = vpop.f32.mrb[0].mxu0
      %v839 = vadd.f32 0.0, %v838
      %v840 = vpop.f32.mrb[0].mxu0
      %v841 = vpop.f32.mrb[0].mxu0
      %v842 = vadd.f32 0.0, %v841
      %v843 = vpop.f32.mrb[0].mxu0
      %844 = vmatprep.mubr.bf16.mxu0 0
      %845 = vmatmul.mubr.bf16.gmra.mrb[0].mxu0 %v721
      %v846 = vpop.f32.mrb[0].mxu0
      %v847 = vadd.f32 0.0, %v846
      %v848 = vpop.f32.mrb[0].mxu0
      %v849 = vpop.f32.mrb[0].mxu0
      %v850 = vadd.f32 0.0, %v849
      %v851 = vpop.f32.mrb[0].mxu0
      %852 = vmatprep.mubr.bf16.mxu0 0
      %853 = vmatmul.mubr.bf16.gmra.mrb[0].mxu0 %v724
      %v854 = vpop.f32.mrb[0].mxu0
      %v855 = vadd.f32 0.0, %v854
      %v856 = vpop.f32.mrb[0].mxu0
      %v857 = vpop.f32.mrb[0].mxu0
      %v858 = vadd.f32 0.0, %v857
      %v859 = vpop.f32.mrb[0].mxu0
      %860 = vmatprep.mubr.bf16.mxu0 0
      %861 = vmatmul.mubr.bf16.gmra.mrb[0].mxu0 %v727
      %v862 = vpop.f32.mrb[0].mxu0
      %v863 = vadd.f32 0.0, %v862
      %v864 = vpop.f32.mrb[0].mxu0
      %v865 = vpop.f32.mrb[0].mxu0
      %v866 = vadd.f32 0.0, %v865
      %v867 = vpop.f32.mrb[0].mxu0
      %868 = vmatprep.mubr.bf16.mxu0 0
      %869 = vmatmul.mubr.bf16.gmra.mrb[0].mxu0 %v730
      %v870 = vpop.f32.mrb[0].mxu0
      %v871 = vadd.f32 0.0, %v870
      %v872 = vpop.f32.mrb[0].mxu0
      %v873 = vpop.f32.mrb[0].mxu0
      %v874 = vadd.f32 0.0, %v873
      %v875 = vpop.f32.mrb[0].mxu0
      %876 = vmatprep.mubr.bf16.mxu0 0
      %877 = vmatmul.mubr.bf16.gmra.mrb[0].mxu0 %v733
      %v878 = vpop.f32.mrb[0].mxu0
      %v879 = vadd.f32 0.0, %v878
      %v880 = vpop.f32.mrb[0].mxu0
      %v881 = vpop.f32.mrb[0].mxu0
      %v882 = vadd.f32 0.0, %v881
      %v883 = vpop.f32.mrb[0].mxu0
      %884 = vmatprep.mubr.bf16.mxu0 0
      %885 = vmatmul.mubr.bf16.gmra.mrb[0].mxu0 %v736
      %v886 = vpop.f32.mrb[0].mxu0
      %v887 = vadd.f32 0.0, %v886
      %v888 = vpop.f32.mrb[0].mxu0
      %v889 = vpop.f32.mrb[0].mxu0
      %v890 = vadd.f32 0.0, %v889
      %v891 = vpop.f32.mrb[0].mxu0
      %892 = vmatprep.mubr.bf16.mxu0 0
      %893 = vmatmul.mubr.bf16.gmra.mrb[0].mxu0 %v739
      %v894 = vpop.f32.mrb[0].mxu0
      %v895 = vadd.f32 0.0, %v894
      %v896 = vpop.f32.mrb[0].mxu0
      %v897 = vpop.f32.mrb[0].mxu0
      %v898 = vadd.f32 0.0, %v897
      %v899 = vpop.f32.mrb[0].mxu0
      %900 = vmatprep.mubr.bf16.mxu0 0
      %901 = vmatmul.mubr.bf16.gmra.mrb[0].mxu0 %v742
      %v902 = vpop.f32.mrb[0].mxu0
      %v903 = vadd.f32 0.0, %v902
      %v904 = vpop.f32.mrb[0].mxu0
      %v905 = vpop.f32.mrb[0].mxu0
      %v906 = vadd.f32 0.0, %v905
      %v907 = vpop.f32.mrb[0].mxu0
      %908 = vdwg.mxu0
      %v909 = vsel %vm695, %v431, 0
      %v911 = vsel %vm695, %v433, 0
      %v913 = vsel %vm695, %v435, 0
      %v915 = vsel %vm695, %v437, 0
      %v917 = vsel %vm695, %v439, 0
      %v919 = vsel %vm695, %v441, 0
      %v921 = vsel %vm695, %v443, 0
      %v923 = vsel %vm695, %v445, 0
      %v925 = vsel %vm695, %v447, 0
      %v927 = vsel %vm695, %v449, 0
      %v929 = vsel %vm695, %v451, 0
      %v931 = vsel %vm695, %v453, 0
      %v933 = vsel %vm695, %v455, 0
      %v935 = vsel %vm695, %v457, 0
      %v937 = vsel %vm695, %v459, 0
      %v939 = vsel %vm695, %v461, 0
      %v942 = vsel %vm744, %v467, 0
      %944 = vmatprep.subr.bf16.mxu0 0
      %945 = vmatpush1.bf16.msra.mxu0 %v942
      %946 = vmatprep.subr.bf16.mxu0 0
      %947 = vmatpush1.bf16.msra.mxu0 0
      %948 = vmatprep.subr.bf16.mxu0 0
      %949 = vmatpush1.bf16.msra.mxu0 0
      %950 = vmatprep.subr.bf16.mxu0 0
      %951 = vmatpush1.bf16.msra.mxu0 0
      %952 = vmatprep.subr.bf16.mxu0 0
      %953 = vmatpush1.bf16.msra.mxu0 0
      %954 = vmatprep.subr.bf16.mxu0 0
      %955 = vmatpush1.bf16.msra.mxu0 0
      %956 = vmatprep.subr.bf16.mxu0 0
      %957 = vmatpush1.bf16.msra.mxu0 0
      %958 = vmatprep.subr.bf16.mxu0 0
      %959 = vmatpush1.bf16.msra.mxu0 0
      %960 = vmatprep.subr.bf16.mxu0 0
      %961 = vmatpush1.bf16.msra.mxu0 0
      %962 = vmatprep.subr.bf16.mxu0 0
      %963 = vmatpush1.bf16.msra.mxu0 0
      %964 = vmatprep.subr.bf16.mxu0 0
      %965 = vmatpush1.bf16.msra.mxu0 0
      %966 = vmatprep.subr.bf16.mxu0 0
      %967 = vmatpush1.bf16.msra.mxu0 0
      %968 = vmatprep.subr.bf16.mxu0 0
      %969 = vmatpush1.bf16.msra.mxu0 0
      %970 = vmatprep.subr.bf16.mxu0 0
      %971 = vmatpush1.bf16.msra.mxu0 0
      %972 = vmatprep.subr.bf16.mxu0 0
      %973 = vmatpush1.bf16.msra.mxu0 0
      %974 = vmatprep.subr.bf16.mxu0 0
      %975 = vmatpush1.bf16.msra.mxu0 0
      %976 = vmatprep.mubr.bf16.mxu0 0
      %977 = vmatmul.mubr.bf16.gmra.mrb[0].mxu0 %v909
      %v978 = vpop.f32.mrb[0].mxu0
      %v979 = vadd.f32 %v783, %v978
      %v980 = vpop.f32.mrb[0].mxu0
      %v981 = vpop.f32.mrb[0].mxu0
      %v982 = vadd.f32 %v786, %v981
      %v983 = vpop.f32.mrb[0].mxu0
      %984 = vmatprep.mubr.bf16.mxu0 0
      %985 = vmatmul.mubr.bf16.gmra.mrb[0].mxu0 %v911
      %v986 = vpop.f32.mrb[0].mxu0
      %v987 = vadd.f32 %v791, %v986
      %v988 = vpop.f32.mrb[0].mxu0
      %v989 = vpop.f32.mrb[0].mxu0
      %v990 = vadd.f32 %v794, %v989
      %v991 = vpop.f32.mrb[0].mxu0
      %992 = vmatprep.mubr.bf16.mxu0 0
      %993 = vmatmul.mubr.bf16.gmra.mrb[0].mxu0 %v913
      %v994 = vpop.f32.mrb[0].mxu0
      %v995 = vadd.f32 %v799, %v994
      %v996 = vpop.f32.mrb[0].mxu0
      %v997 = vpop.f32.mrb[0].mxu0
      %v998 = vadd.f32 %v802, %v997
      %v999 = vpop.f32.mrb[0].mxu0
      %1000 = vmatprep.mubr.bf16.mxu0 0
      %1001 = vmatmul.mubr.bf16.gmra.mrb[0].mxu0 %v915
      %v1002 = vpop.f32.mrb[0].mxu0
      %v1003 = vadd.f32 %v807, %v1002
      %v1004 = vpop.f32.mrb[0].mxu0
      %v1005 = vpop.f32.mrb[0].mxu0
      %v1006 = vadd.f32 %v810, %v1005
      %v1007 = vpop.f32.mrb[0].mxu0
      %1008 = vmatprep.mubr.bf16.mxu0 0
      %1009 = vmatmul.mubr.bf16.gmra.mrb[0].mxu0 %v917
      %v1010 = vpop.f32.mrb[0].mxu0
      %v1011 = vadd.f32 %v815, %v1010
      %v1012 = vpop.f32.mrb[0].mxu0
      %v1013 = vpop.f32.mrb[0].mxu0
      %v1014 = vadd.f32 %v818, %v1013
      %v1015 = vpop.f32.mrb[0].mxu0
      %1016 = vmatprep.mubr.bf16.mxu0 0
      %1017 = vmatmul.mubr.bf16.gmra.mrb[0].mxu0 %v919
      %v1018 = vpop.f32.mrb[0].mxu0
      %v1019 = vadd.f32 %v823, %v1018
      %v1020 = vpop.f32.mrb[0].mxu0
      %v1021 = vpop.f32.mrb[0].mxu0
      %v1022 = vadd.f32 %v826, %v1021
      %v1023 = vpop.f32.mrb[0].mxu0
      %1024 = vmatprep.mubr.bf16.mxu0 0
      %1025 = vmatmul.mubr.bf16.gmra.mrb[0].mxu0 %v921
      %v1026 = vpop.f32.mrb[0].mxu0
      %v1027 = vadd.f32 %v831, %v1026
      %v1028 = vpop.f32.mrb[0].mxu0
      %v1029 = vpop.f32.mrb[0].mxu0
      %v1030 = vadd.f32 %v834, %v1029
      %v1031 = vpop.f32.mrb[0].mxu0
      %1032 = vmatprep.mubr.bf16.mxu0 0
      %1033 = vmatmul.mubr.bf16.gmra.mrb[0].mxu0 %v923
      %v1034 = vpop.f32.mrb[0].mxu0
      %v1035 = vadd.f32 %v839, %v1034
      %v1036 = vpop.f32.mrb[0].mxu0
      %v1037 = vpop.f32.mrb[0].mxu0
      %v1038 = vadd.f32 %v842, %v1037
      %v1039 = vpop.f32.mrb[0].mxu0
      %1040 = vmatprep.mubr.bf16.mxu0 0
      %1041 = vmatmul.mubr.bf16.gmra.mrb[0].mxu0 %v925
      %v1042 = vpop.f32.mrb[0].mxu0
      %v1043 = vadd.f32 %v847, %v1042
      %v1044 = vpop.f32.mrb[0].mxu0
      %v1045 = vpop.f32.mrb[0].mxu0
      %v1046 = vadd.f32 %v850, %v1045
      %v1047 = vpop.f32.mrb[0].mxu0
      %1048 = vmatprep.mubr.bf16.mxu0 0
      %1049 = vmatmul.mubr.bf16.gmra.mrb[0].mxu0 %v927
      %v1050 = vpop.f32.mrb[0].mxu0
      %v1051 = vadd.f32 %v855, %v1050
      %v1052 = vpop.f32.mrb[0].mxu0
      %v1053 = vpop.f32.mrb[0].mxu0
      %v1054 = vadd.f32 %v858, %v1053
      %v1055 = vpop.f32.mrb[0].mxu0
      %1056 = vmatprep.mubr.bf16.mxu0 0
      %1057 = vmatmul.mubr.bf16.gmra.mrb[0].mxu0 %v929
      %v1058 = vpop.f32.mrb[0].mxu0
      %v1059 = vadd.f32 %v863, %v1058
      %v1060 = vpop.f32.mrb[0].mxu0
      %v1061 = vpop.f32.mrb[0].mxu0
      %v1062 = vadd.f32 %v866, %v1061
      %v1063 = vpop.f32.mrb[0].mxu0
      %1064 = vmatprep.mubr.bf16.mxu0 0
      %1065 = vmatmul.mubr.bf16.gmra.mrb[0].mxu0 %v931
      %v1066 = vpop.f32.mrb[0].mxu0
      %v1067 = vadd.f32 %v871, %v1066
      %v1068 = vpop.f32.mrb[0].mxu0
      %v1069 = vpop.f32.mrb[0].mxu0
      %v1070 = vadd.f32 %v874, %v1069
      %v1071 = vpop.f32.mrb[0].mxu0
      %1072 = vmatprep.mubr.bf16.mxu0 0
      %1073 = vmatmul.mubr.bf16.gmra.mrb[0].mxu0 %v933
      %v1074 = vpop.f32.mrb[0].mxu0
      %v1075 = vadd.f32 %v879, %v1074
      %v1076 = vpop.f32.mrb[0].mxu0
      %v1077 = vpop.f32.mrb[0].mxu0
      %v1078 = vadd.f32 %v882, %v1077
      %v1079 = vpop.f32.mrb[0].mxu0
      %1080 = vmatprep.mubr.bf16.mxu0 0
      %1081 = vmatmul.mubr.bf16.gmra.mrb[0].mxu0 %v935
      %v1082 = vpop.f32.mrb[0].mxu0
      %v1083 = vadd.f32 %v887, %v1082
      %v1084 = vpop.f32.mrb[0].mxu0
      %v1085 = vpop.f32.mrb[0].mxu0
      %v1086 = vadd.f32 %v890, %v1085
      %v1087 = vpop.f32.mrb[0].mxu0
      %1088 = vmatprep.mubr.bf16.mxu0 0
      %1089 = vmatmul.mubr.bf16.gmra.mrb[0].mxu0 %v937
      %v1090 = vpop.f32.mrb[0].mxu0
      %v1091 = vadd.f32 %v895, %v1090
      %v1092 = vpop.f32.mrb[0].mxu0
      %v1093 = vpop.f32.mrb[0].mxu0
      %v1094 = vadd.f32 %v898, %v1093
      %v1095 = vpop.f32.mrb[0].mxu0
      %1096 = vmatprep.mubr.bf16.mxu0 0
      %1097 = vmatmul.mubr.bf16.gmra.mrb[0].mxu0 %v939
      %v1098 = vpop.f32.mrb[0].mxu0
      %v1099 = vadd.f32 %v903, %v1098
      %v1100 = vpop.f32.mrb[0].mxu0
      %v1101 = vpop.f32.mrb[0].mxu0
      %v1102 = vadd.f32 %v906, %v1101
      %v1103 = vpop.f32.mrb[0].mxu0
      %1104 = vdwg.mxu0
      %vm1153 = vcmask 1046528
      %v1154 = vrot.slane %v323, 1
      %v1155 = vrot.slane %v324, 1
      %v1156 = vsel %vm1153, %v1154, %v1155
      %v1157 = vrot.slane %v325, 1
      %v1158 = vsel %vm1153, %v1155, %v1157
      %v1159 = vrot.slane %v326, 1
      %v1160 = vrot.slane %v327, 1
      %v1161 = vsel %vm1153, %v1159, %v1160
      %v1162 = vrot.slane %v328, 1
      %v1163 = vsel %vm1153, %v1160, %v1162
      %v1164 = vrot.slane %v329, 1
      %v1165 = vrot.slane %v330, 1
      %v1166 = vsel %vm1153, %v1164, %v1165
      %v1167 = vrot.slane %v331, 1
      %v1168 = vsel %vm1153, %v1165, %v1167
      %v1169 = vrot.slane %v332, 1
      %v1170 = vrot.slane %v333, 1
      %v1171 = vsel %vm1153, %v1169, %v1170
      %v1172 = vrot.slane %v334, 1
      %v1173 = vsel %vm1153, %v1170, %v1172
      %v1174 = vrot.slane %v335, 1
      %v1175 = vrot.slane %v336, 1
      %v1176 = vsel %vm1153, %v1174, %v1175
      %v1177 = vrot.slane %v337, 1
      %v1178 = vsel %vm1153, %v1175, %v1177
      %v1179 = vrot.slane %v338, 1
      %v1180 = vrot.slane %v339, 1
      %v1181 = vsel %vm1153, %v1179, %v1180
      %v1182 = vrot.slane %v340, 1
      %v1183 = vsel %vm1153, %v1180, %v1182
      %v1184 = vrot.slane %v341, 1
      %v1185 = vrot.slane %v342, 1
      %v1186 = vsel %vm1153, %v1184, %v1185
      %v1187 = vrot.slane %v343, 1
      %v1188 = vsel %vm1153, %v1185, %v1187
      %v1189 = vrot.slane %v344, 1
      %v1190 = vrot.slane %v345, 1
      %v1191 = vsel %vm1153, %v1189, %v1190
      %v1192 = vrot.slane %v346, 1
      %v1193 = vsel %vm1153, %v1190, %v1192
      %v1194 = vrot.slane %v347, 1
      %v1195 = vrot.slane %v348, 1
      %v1196 = vsel %vm1153, %v1194, %v1195
      %v1197 = vrot.slane %v349, 1
      %v1198 = vsel %vm1153, %v1195, %v1197
      %v1199 = vrot.slane %v350, 1
      %v1200 = vrot.slane %v351, 1
      %v1201 = vsel %vm1153, %v1199, %v1200
      %v1202 = vrot.slane %v352, 1
      %v1203 = vsel %vm1153, %v1200, %v1202
      %v1204 = vrot.slane %v353, 1
      %v1205 = vrot.slane %v354, 1
      %v1206 = vsel %vm1153, %v1204, %v1205
      %v1207 = vrot.slane %v355, 1
      %v1208 = vsel %vm1153, %v1205, %v1207
      %v1209 = vrot.slane %v356, 1
      %v1210 = vrot.slane %v357, 1
      %v1211 = vsel %vm1153, %v1209, %v1210
      %v1212 = vrot.slane %v358, 1
      %v1213 = vsel %vm1153, %v1210, %v1212
      %v1214 = vrot.slane %v359, 1
      %v1215 = vrot.slane %v360, 1
      %v1216 = vsel %vm1153, %v1214, %v1215
      %v1217 = vrot.slane %v361, 1
      %v1218 = vsel %vm1153, %v1215, %v1217
      %v1219 = vrot.slane %v362, 1
      %v1220 = vrot.slane %v363, 1
      %v1221 = vsel %vm1153, %v1219, %v1220
      %v1222 = vrot.slane %v364, 1
      %v1223 = vsel %vm1153, %v1220, %v1222
      %v1224 = vrot.slane %v365, 1
      %v1225 = vrot.slane %v366, 1
      %v1226 = vsel %vm1153, %v1224, %v1225
      %v1227 = vrot.slane %v367, 1
      %v1228 = vsel %vm1153, %v1225, %v1227
      %v1229 = vrot.slane %v368, 1
      %v1230 = vrot.slane %v369, 1
      %v1231 = vsel %vm1153, %v1229, %v1230
      %v1232 = vrot.slane %v370, 1
      %v1233 = vsel %vm1153, %v1230, %v1232
      %v1266 = vadd.f32 %v468, %v1156
      %v1267 = vadd.f32 %v469, %v1158
      %v1268 = vadd.f32 %v470, %v1161
      %v1269 = vadd.f32 %v471, %v1163
      %v1270 = vadd.f32 %v472, %v1166
      %v1271 = vadd.f32 %v473, %v1168
      %v1272 = vadd.f32 %v474, %v1171
      %v1273 = vadd.f32 %v475, %v1173
      %v1274 = vadd.f32 %v476, %v1176
      %v1275 = vadd.f32 %v477, %v1178
      %v1276 = vadd.f32 %v478, %v1181
      %v1277 = vadd.f32 %v479, %v1183
      %v1278 = vadd.f32 %v480, %v1186
      %v1279 = vadd.f32 %v481, %v1188
      %v1280 = vadd.f32 %v482, %v1191
      %v1281 = vadd.f32 %v483, %v1193
      %v1282 = vadd.f32 %v484, %v1196
      %v1283 = vadd.f32 %v485, %v1198
      %v1284 = vadd.f32 %v486, %v1201
      %v1285 = vadd.f32 %v487, %v1203
      %v1286 = vadd.f32 %v488, %v1206
      %v1287 = vadd.f32 %v489, %v1208
      %v1288 = vadd.f32 %v490, %v1211
      %v1289 = vadd.f32 %v491, %v1213
      %v1290 = vadd.f32 %v492, %v1216
      %v1291 = vadd.f32 %v493, %v1218
      %v1292 = vadd.f32 %v494, %v1221
      %v1293 = vadd.f32 %v495, %v1223
      %v1294 = vadd.f32 %v496, %v1226
      %v1295 = vadd.f32 %v497, %v1228
      %v1296 = vadd.f32 %v498, %v1231
      %v1297 = vadd.f32 %v499, %v1233
      %vm1330 = vcmask 1046528
      %v1331 = vrot.slane %v431, 1
      %v1332 = vrot.slane %v432, 1
      %v1333 = vsel %vm1330, %v1331, %v1332
      %v1334 = vrot.slane %v433, 1
      %v1335 = vrot.slane %v434, 1
      %v1336 = vsel %vm1330, %v1334, %v1335
      %v1337 = vrot.slane %v435, 1
      %v1338 = vrot.slane %v436, 1
      %v1339 = vsel %vm1330, %v1337, %v1338
      %v1340 = vrot.slane %v437, 1
      %v1341 = vrot.slane %v438, 1
      %v1342 = vsel %vm1330, %v1340, %v1341
      %v1343 = vrot.slane %v439, 1
      %v1344 = vrot.slane %v440, 1
      %v1345 = vsel %vm1330, %v1343, %v1344
      %v1346 = vrot.slane %v441, 1
      %v1347 = vrot.slane %v442, 1
      %v1348 = vsel %vm1330, %v1346, %v1347
      %v1349 = vrot.slane %v443, 1
      %v1350 = vrot.slane %v444, 1
      %v1351 = vsel %vm1330, %v1349, %v1350
      %v1352 = vrot.slane %v445, 1
      %v1353 = vrot.slane %v446, 1
      %v1354 = vsel %vm1330, %v1352, %v1353
      %v1355 = vrot.slane %v447, 1
      %v1356 = vrot.slane %v448, 1
      %v1357 = vsel %vm1330, %v1355, %v1356
      %v1358 = vrot.slane %v449, 1
      %v1359 = vrot.slane %v450, 1
      %v1360 = vsel %vm1330, %v1358, %v1359
      %v1361 = vrot.slane %v451, 1
      %v1362 = vrot.slane %v452, 1
      %v1363 = vsel %vm1330, %v1361, %v1362
      %v1364 = vrot.slane %v453, 1
      %v1365 = vrot.slane %v454, 1
      %v1366 = vsel %vm1330, %v1364, %v1365
      %v1367 = vrot.slane %v455, 1
      %v1368 = vrot.slane %v456, 1
      %v1369 = vsel %vm1330, %v1367, %v1368
      %v1370 = vrot.slane %v457, 1
      %v1371 = vrot.slane %v458, 1
      %v1372 = vsel %vm1330, %v1370, %v1371
      %v1373 = vrot.slane %v459, 1
      %v1374 = vrot.slane %v460, 1
      %v1375 = vsel %vm1330, %v1373, %v1374
      %v1376 = vrot.slane %v461, 1
      %v1377 = vrot.slane %v462, 1
      %v1378 = vsel %vm1330, %v1376, %v1377
      %s1379 = scalar_lea.vmem %s2, 4
      %v1380 = vld [vmem:[%s1379] sm:$0x3]
      %v1382 = vsel %vm695, %v1333, 0
      %v1385 = vsel %vm695, %v1336, 0
      %v1388 = vsel %vm695, %v1339, 0
      %v1391 = vsel %vm695, %v1342, 0
      %v1394 = vsel %vm695, %v1345, 0
      %v1397 = vsel %vm695, %v1348, 0
      %v1400 = vsel %vm695, %v1351, 0
      %v1403 = vsel %vm695, %v1354, 0
      %v1406 = vsel %vm695, %v1357, 0
      %v1409 = vsel %vm695, %v1360, 0
      %v1412 = vsel %vm695, %v1363, 0
      %v1415 = vsel %vm695, %v1366, 0
      %v1418 = vsel %vm695, %v1369, 0
      %v1421 = vsel %vm695, %v1372, 0
      %v1424 = vsel %vm695, %v1375, 0
      %v1427 = vsel %vm695, %v1378, 0
      %v1430 = vsel %vm744, %v1380, 0
      %1432 = vmatprep.subr.bf16.mxu0 0
      %1433 = vmatpush1.bf16.msra.mxu0 %v1430
      %1434 = vmatprep.subr.bf16.mxu0 0
      %1435 = vmatpush1.bf16.msra.mxu0 0
      %1436 = vmatprep.subr.bf16.mxu0 0
      %1437 = vmatpush1.bf16.msra.mxu0 0
      %1438 = vmatprep.subr.bf16.mxu0 0
      %1439 = vmatpush1.bf16.msra.mxu0 0
      %1440 = vmatprep.subr.bf16.mxu0 0
      %1441 = vmatpush1.bf16.msra.mxu0 0
      %1442 = vmatprep.subr.bf16.mxu0 0
      %1443 = vmatpush1.bf16.msra.mxu0 0
      %1444 = vmatprep.subr.bf16.mxu0 0
      %1445 = vmatpush1.bf16.msra.mxu0 0
      %1446 = vmatprep.subr.bf16.mxu0 0
      %1447 = vmatpush1.bf16.msra.mxu0 0
      %1448 = vmatprep.subr.bf16.mxu0 0
      %1449 = vmatpush1.bf16.msra.mxu0 0
      %1450 = vmatprep.subr.bf16.mxu0 0
      %1451 = vmatpush1.bf16.msra.mxu0 0
      %1452 = vmatprep.subr.bf16.mxu0 0
      %1453 = vmatpush1.bf16.msra.mxu0 0
      %1454 = vmatprep.subr.bf16.mxu0 0
      %1455 = vmatpush1.bf16.msra.mxu0 0
      %1456 = vmatprep.subr.bf16.mxu0 0
      %1457 = vmatpush1.bf16.msra.mxu0 0
      %1458 = vmatprep.subr.bf16.mxu0 0
      %1459 = vmatpush1.bf16.msra.mxu0 0
      %1460 = vmatprep.subr.bf16.mxu0 0
      %1461 = vmatpush1.bf16.msra.mxu0 0
      %1462 = vmatprep.subr.bf16.mxu0 0
      %1463 = vmatpush1.bf16.msra.mxu0 0
      %1464 = vmatprep.mubr.bf16.mxu0 0
      %1465 = vmatmul.mubr.bf16.gmra.mrb[0].mxu0 %v1382
      %v1466 = vpop.f32.mrb[0].mxu0
      %v1467 = vadd.f32 0.0, %v1466
      %v1468 = vpop.f32.mrb[0].mxu0
      %v1469 = vpop.f32.mrb[0].mxu0
      %v1470 = vadd.f32 0.0, %v1469
      %v1471 = vpop.f32.mrb[0].mxu0
      %1472 = vmatprep.mubr.bf16.mxu0 0
      %1473 = vmatmul.mubr.bf16.gmra.mrb[0].mxu0 %v1385
      %v1474 = vpop.f32.mrb[0].mxu0
      %v1475 = vadd.f32 0.0, %v1474
      %v1476 = vpop.f32.mrb[0].mxu0
      %v1477 = vpop.f32.mrb[0].mxu0
      %v1478 = vadd.f32 0.0, %v1477
      %v1479 = vpop.f32.mrb[0].mxu0
      %1480 = vmatprep.mubr.bf16.mxu0 0
      %1481 = vmatmul.mubr.bf16.gmra.mrb[0].mxu0 %v1388
      %v1482 = vpop.f32.mrb[0].mxu0
      %v1483 = vadd.f32 0.0, %v1482
      %v1484 = vpop.f32.mrb[0].mxu0
      %v1485 = vpop.f32.mrb[0].mxu0
      %v1486 = vadd.f32 0.0, %v1485
      %v1487 = vpop.f32.mrb[0].mxu0
      %1488 = vmatprep.mubr.bf16.mxu0 0
      %1489 = vmatmul.mubr.bf16.gmra.mrb[0].mxu0 %v1391
      %v1490 = vpop.f32.mrb[0].mxu0
      %v1491 = vadd.f32 0.0, %v1490
      %v1492 = vpop.f32.mrb[0].mxu0
      %v1493 = vpop.f32.mrb[0].mxu0
      %v1494 = vadd.f32 0.0, %v1493
      %v1495 = vpop.f32.mrb[0].mxu0
      %1496 = vmatprep.mubr.bf16.mxu0 0
      %1497 = vmatmul.mubr.bf16.gmra.mrb[0].mxu0 %v1394
      %v1498 = vpop.f32.mrb[0].mxu0
      %v1499 = vadd.f32 0.0, %v1498
      %v1500 = vpop.f32.mrb[0].mxu0
      %v1501 = vpop.f32.mrb[0].mxu0
      %v1502 = vadd.f32 0.0, %v1501
      %v1503 = vpop.f32.mrb[0].mxu0
      %1504 = vmatprep.mubr.bf16.mxu0 0
      %1505 = vmatmul.mubr.bf16.gmra.mrb[0].mxu0 %v1397
      %v1506 = vpop.f32.mrb[0].mxu0
      %v1507 = vadd.f32 0.0, %v1506
      %v1508 = vpop.f32.mrb[0].mxu0
      %v1509 = vpop.f32.mrb[0].mxu0
      %v1510 = vadd.f32 0.0, %v1509
      %v1511 = vpop.f32.mrb[0].mxu0
      %1512 = vmatprep.mubr.bf16.mxu0 0
      %1513 = vmatmul.mubr.bf16.gmra.mrb[0].mxu0 %v1400
      %v1514 = vpop.f32.mrb[0].mxu0
      %v1515 = vadd.f32 0.0, %v1514
      %v1516 = vpop.f32.mrb[0].mxu0
      %v1517 = vpop.f32.mrb[0].mxu0
      %v1518 = vadd.f32 0.0, %v1517
      %v1519 = vpop.f32.mrb[0].mxu0
      %1520 = vmatprep.mubr.bf16.mxu0 0
      %1521 = vmatmul.mubr.bf16.gmra.mrb[0].mxu0 %v1403
      %v1522 = vpop.f32.mrb[0].mxu0
      %v1523 = vadd.f32 0.0, %v1522
      %v1524 = vpop.f32.mrb[0].mxu0
      %v1525 = vpop.f32.mrb[0].mxu0
      %v1526 = vadd.f32 0.0, %v1525
      %v1527 = vpop.f32.mrb[0].mxu0
      %1528 = vmatprep.mubr.bf16.mxu0 0
      %1529 = vmatmul.mubr.bf16.gmra.mrb[0].mxu0 %v1406
      %v1530 = vpop.f32.mrb[0].mxu0
      %v1531 = vadd.f32 0.0, %v1530
      %v1532 = vpop.f32.mrb[0].mxu0
      %v1533 = vpop.f32.mrb[0].mxu0
      %v1534 = vadd.f32 0.0, %v1533
      %v1535 = vpop.f32.mrb[0].mxu0
      %1536 = vmatprep.mubr.bf16.mxu0 0
      %1537 = vmatmul.mubr.bf16.gmra.mrb[0].mxu0 %v1409
      %v1538 = vpop.f32.mrb[0].mxu0
      %v1539 = vadd.f32 0.0, %v1538
      %v1540 = vpop.f32.mrb[0].mxu0
      %v1541 = vpop.f32.mrb[0].mxu0
      %v1542 = vadd.f32 0.0, %v1541
      %v1543 = vpop.f32.mrb[0].mxu0
      %1544 = vmatprep.mubr.bf16.mxu0 0
      %1545 = vmatmul.mubr.bf16.gmra.mrb[0].mxu0 %v1412
      %v1546 = vpop.f32.mrb[0].mxu0
      %v1547 = vadd.f32 0.0, %v1546
      %v1548 = vpop.f32.mrb[0].mxu0
      %v1549 = vpop.f32.mrb[0].mxu0
      %v1550 = vadd.f32 0.0, %v1549
      %v1551 = vpop.f32.mrb[0].mxu0
      %1552 = vmatprep.mubr.bf16.mxu0 0
      %1553 = vmatmul.mubr.bf16.gmra.mrb[0].mxu0 %v1415
      %v1554 = vpop.f32.mrb[0].mxu0
      %v1555 = vadd.f32 0.0, %v1554
      %v1556 = vpop.f32.mrb[0].mxu0
      %v1557 = vpop.f32.mrb[0].mxu0
      %v1558 = vadd.f32 0.0, %v1557
      %v1559 = vpop.f32.mrb[0].mxu0
      %1560 = vmatprep.mubr.bf16.mxu0 0
      %1561 = vmatmul.mubr.bf16.gmra.mrb[0].mxu0 %v1418
      %v1562 = vpop.f32.mrb[0].mxu0
      %v1563 = vadd.f32 0.0, %v1562
      %v1564 = vpop.f32.mrb[0].mxu0
      %v1565 = vpop.f32.mrb[0].mxu0
      %v1566 = vadd.f32 0.0, %v1565
      %v1567 = vpop.f32.mrb[0].mxu0
      %1568 = vmatprep.mubr.bf16.mxu0 0
      %1569 = vmatmul.mubr.bf16.gmra.mrb[0].mxu0 %v1421
      %v1570 = vpop.f32.mrb[0].mxu0
      %v1571 = vadd.f32 0.0, %v1570
      %v1572 = vpop.f32.mrb[0].mxu0
      %v1573 = vpop.f32.mrb[0].mxu0
      %v1574 = vadd.f32 0.0, %v1573
      %v1575 = vpop.f32.mrb[0].mxu0
      %1576 = vmatprep.mubr.bf16.mxu0 0
      %1577 = vmatmul.mubr.bf16.gmra.mrb[0].mxu0 %v1424
      %v1578 = vpop.f32.mrb[0].mxu0
      %v1579 = vadd.f32 0.0, %v1578
      %v1580 = vpop.f32.mrb[0].mxu0
      %v1581 = vpop.f32.mrb[0].mxu0
      %v1582 = vadd.f32 0.0, %v1581
      %v1583 = vpop.f32.mrb[0].mxu0
      %1584 = vmatprep.mubr.bf16.mxu0 0
      %1585 = vmatmul.mubr.bf16.gmra.mrb[0].mxu0 %v1427
      %v1586 = vpop.f32.mrb[0].mxu0
      %v1587 = vadd.f32 0.0, %v1586
      %v1588 = vpop.f32.mrb[0].mxu0
      %v1589 = vpop.f32.mrb[0].mxu0
      %v1590 = vadd.f32 0.0, %v1589
      %v1591 = vpop.f32.mrb[0].mxu0
      %1592 = vdwg.mxu0
      %v1593 = vadd.f32 %v979, %v1467
      %v1594 = vadd.f32 %v982, %v1470
      %v1595 = vadd.f32 %v987, %v1475
      %v1596 = vadd.f32 %v990, %v1478
      %v1597 = vadd.f32 %v995, %v1483
      %v1598 = vadd.f32 %v998, %v1486
      %v1599 = vadd.f32 %v1003, %v1491
      %v1600 = vadd.f32 %v1006, %v1494
      %v1601 = vadd.f32 %v1011, %v1499
      %v1602 = vadd.f32 %v1014, %v1502
      %v1603 = vadd.f32 %v1019, %v1507
      %v1604 = vadd.f32 %v1022, %v1510
      %v1605 = vadd.f32 %v1027, %v1515
      %v1606 = vadd.f32 %v1030, %v1518
      %v1607 = vadd.f32 %v1035, %v1523
      %v1608 = vadd.f32 %v1038, %v1526
      %v1609 = vadd.f32 %v1043, %v1531
      %v1610 = vadd.f32 %v1046, %v1534
      %v1611 = vadd.f32 %v1051, %v1539
      %v1612 = vadd.f32 %v1054, %v1542
      %v1613 = vadd.f32 %v1059, %v1547
      %v1614 = vadd.f32 %v1062, %v1550
      %v1615 = vadd.f32 %v1067, %v1555
      %v1616 = vadd.f32 %v1070, %v1558
      %v1617 = vadd.f32 %v1075, %v1563
      %v1618 = vadd.f32 %v1078, %v1566
      %v1619 = vadd.f32 %v1083, %v1571
      %v1620 = vadd.f32 %v1086, %v1574
      %v1621 = vadd.f32 %v1091, %v1579
      %v1622 = vadd.f32 %v1094, %v1582
      %v1623 = vadd.f32 %v1099, %v1587
      %v1624 = vadd.f32 %v1102, %v1590
      %vm1625 = vcmask 1045504
      %v1626 = vrot.slane %v323, 2
      %v1627 = vrot.slane %v324, 2
      %v1628 = vsel %vm1625, %v1626, %v1627
      %v1629 = vrot.slane %v325, 2
      %v1630 = vsel %vm1625, %v1627, %v1629
      %v1631 = vrot.slane %v326, 2
      %v1632 = vrot.slane %v327, 2
      %v1633 = vsel %vm1625, %v1631, %v1632
      %v1634 = vrot.slane %v328, 2
      %v1635 = vsel %vm1625, %v1632, %v1634
      %v1636 = vrot.slane %v329, 2
      %v1637 = vrot.slane %v330, 2
      %v1638 = vsel %vm1625, %v1636, %v1637
      %v1639 = vrot.slane %v331, 2
      %v1640 = vsel %vm1625, %v1637, %v1639
      %v1641 = vrot.slane %v332, 2
      %v1642 = vrot.slane %v333, 2
      %v1643 = vsel %vm1625, %v1641, %v1642
      %v1644 = vrot.slane %v334, 2
      %v1645 = vsel %vm1625, %v1642, %v1644
      %v1646 = vrot.slane %v335, 2
      %v1647 = vrot.slane %v336, 2
      %v1648 = vsel %vm1625, %v1646, %v1647
      %v1649 = vrot.slane %v337, 2
      %v1650 = vsel %vm1625, %v1647, %v1649
      %v1651 = vrot.slane %v338, 2
      %v1652 = vrot.slane %v339, 2
      %v1653 = vsel %vm1625, %v1651, %v1652
      %v1654 = vrot.slane %v340, 2
      %v1655 = vsel %vm1625, %v1652, %v1654
      %v1656 = vrot.slane %v341, 2
      %v1657 = vrot.slane %v342, 2
      %v1658 = vsel %vm1625, %v1656, %v1657
      %v1659 = vrot.slane %v343, 2
      %v1660 = vsel %vm1625, %v1657, %v1659
      %v1661 = vrot.slane %v344, 2
      %v1662 = vrot.slane %v345, 2
      %v1663 = vsel %vm1625, %v1661, %v1662
      %v1664 = vrot.slane %v346, 2
      %v1665 = vsel %vm1625, %v1662, %v1664
      %v1666 = vrot.slane %v347, 2
      %v1667 = vrot.slane %v348, 2
      %v1668 = vsel %vm1625, %v1666, %v1667
      %v1669 = vrot.slane %v349, 2
      %v1670 = vsel %vm1625, %v1667, %v1669
      %v1671 = vrot.slane %v350, 2
      %v1672 = vrot.slane %v351, 2
      %v1673 = vsel %vm1625, %v1671, %v1672
      %v1674 = vrot.slane %v352, 2
      %v1675 = vsel %vm1625, %v1672, %v1674
      %v1676 = vrot.slane %v353, 2
      %v1677 = vrot.slane %v354, 2
      %v1678 = vsel %vm1625, %v1676, %v1677
      %v1679 = vrot.slane %v355, 2
      %v1680 = vsel %vm1625, %v1677, %v1679
      %v1681 = vrot.slane %v356, 2
      %v1682 = vrot.slane %v357, 2
      %v1683 = vsel %vm1625, %v1681, %v1682
      %v1684 = vrot.slane %v358, 2
      %v1685 = vsel %vm1625, %v1682, %v1684
      %v1686 = vrot.slane %v359, 2
      %v1687 = vrot.slane %v360, 2
      %v1688 = vsel %vm1625, %v1686, %v1687
      %v1689 = vrot.slane %v361, 2
      %v1690 = vsel %vm1625, %v1687, %v1689
      %v1691 = vrot.slane %v362, 2
      %v1692 = vrot.slane %v363, 2
      %v1693 = vsel %vm1625, %v1691, %v1692
      %v1694 = vrot.slane %v364, 2
      %v1695 = vsel %vm1625, %v1692, %v1694
      %v1696 = vrot.slane %v365, 2
      %v1697 = vrot.slane %v366, 2
      %v1698 = vsel %vm1625, %v1696, %v1697
      %v1699 = vrot.slane %v367, 2
      %v1700 = vsel %vm1625, %v1697, %v1699
      %v1701 = vrot.slane %v368, 2
      %v1702 = vrot.slane %v369, 2
      %v1703 = vsel %vm1625, %v1701, %v1702
      %v1704 = vrot.slane %v370, 2
      %v1705 = vsel %vm1625, %v1702, %v1704
      %v1738 = vadd.f32 %v1266, %v1628
      %v1739 = vadd.f32 %v1267, %v1630
      %v1740 = vadd.f32 %v1268, %v1633
      %v1741 = vadd.f32 %v1269, %v1635
      %v1742 = vadd.f32 %v1270, %v1638
      %v1743 = vadd.f32 %v1271, %v1640
      %v1744 = vadd.f32 %v1272, %v1643
      %v1745 = vadd.f32 %v1273, %v1645
      %v1746 = vadd.f32 %v1274, %v1648
      %v1747 = vadd.f32 %v1275, %v1650
      %v1748 = vadd.f32 %v1276, %v1653
      %v1749 = vadd.f32 %v1277, %v1655
      %v1750 = vadd.f32 %v1278, %v1658
      %v1751 = vadd.f32 %v1279, %v1660
      %v1752 = vadd.f32 %v1280, %v1663
      %v1753 = vadd.f32 %v1281, %v1665
      %v1754 = vadd.f32 %v1282, %v1668
      %v1755 = vadd.f32 %v1283, %v1670
      %v1756 = vadd.f32 %v1284, %v1673
      %v1757 = vadd.f32 %v1285, %v1675
      %v1758 = vadd.f32 %v1286, %v1678
      %v1759 = vadd.f32 %v1287, %v1680
      %v1760 = vadd.f32 %v1288, %v1683
      %v1761 = vadd.f32 %v1289, %v1685
      %v1762 = vadd.f32 %v1290, %v1688
      %v1763 = vadd.f32 %v1291, %v1690
      %v1764 = vadd.f32 %v1292, %v1693
      %v1765 = vadd.f32 %v1293, %v1695
      %v1766 = vadd.f32 %v1294, %v1698
      %v1767 = vadd.f32 %v1295, %v1700
      %v1768 = vadd.f32 %v1296, %v1703
      %v1769 = vadd.f32 %v1297, %v1705
      %s1770 = scalar_lea.vmem %s2, 6
      %v1771 = vld [vmem:[%s1770] sm:$0x3]
      %v1773 = vsel %vm695, %v463, 0
      %v1776 = vsel %vm744, %v1771, 0
      %1778 = vmatprep.subr.bf16.mxu0 0
      %1779 = vmatpush1.bf16.msra.mxu0 %v1776
      %1780 = vmatprep.subr.bf16.mxu0 0
      %1781 = vmatpush1.bf16.msra.mxu0 0
      %1782 = vmatprep.subr.bf16.mxu0 0
      %1783 = vmatpush1.bf16.msra.mxu0 0
      %1784 = vmatprep.subr.bf16.mxu0 0
      %1785 = vmatpush1.bf16.msra.mxu0 0
      %1786 = vmatprep.subr.bf16.mxu0 0
      %1787 = vmatpush1.bf16.msra.mxu0 0
      %1788 = vmatprep.subr.bf16.mxu0 0
      %1789 = vmatpush1.bf16.msra.mxu0 0
      %1790 = vmatprep.subr.bf16.mxu0 0
      %1791 = vmatpush1.bf16.msra.mxu0 0
      %1792 = vmatprep.subr.bf16.mxu0 0
      %1793 = vmatpush1.bf16.msra.mxu0 0
      %1794 = vmatprep.subr.bf16.mxu0 0
      %1795 = vmatpush1.bf16.msra.mxu0 0
      %1796 = vmatprep.subr.bf16.mxu0 0
      %1797 = vmatpush1.bf16.msra.mxu0 0
      %1798 = vmatprep.subr.bf16.mxu0 0
      %1799 = vmatpush1.bf16.msra.mxu0 0
      %1800 = vmatprep.subr.bf16.mxu0 0
      %1801 = vmatpush1.bf16.msra.mxu0 0
      %1802 = vmatprep.subr.bf16.mxu0 0
      %1803 = vmatpush1.bf16.msra.mxu0 0
      %1804 = vmatprep.subr.bf16.mxu0 0
      %1805 = vmatpush1.bf16.msra.mxu0 0
      %1806 = vmatprep.subr.bf16.mxu0 0
      %1807 = vmatpush1.bf16.msra.mxu0 0
      %1808 = vmatprep.subr.bf16.mxu0 0
      %1809 = vmatpush1.bf16.msra.mxu0 0
      %1810 = vmatprep.mubr.bf16.mxu0 0
      %1811 = vmatmul.mubr.bf16.gmra.mrb[0].mxu0 %v911
      %v1812 = vpop.f32.mrb[0].mxu0
      %v1813 = vadd.f32 0.0, %v1812
      %v1814 = vpop.f32.mrb[0].mxu0
      %v1815 = vpop.f32.mrb[0].mxu0
      %v1816 = vadd.f32 0.0, %v1815
      %v1817 = vpop.f32.mrb[0].mxu0
      %1818 = vmatprep.mubr.bf16.mxu0 0
      %1819 = vmatmul.mubr.bf16.gmra.mrb[0].mxu0 %v913
      %v1820 = vpop.f32.mrb[0].mxu0
      %v1821 = vadd.f32 0.0, %v1820
      %v1822 = vpop.f32.mrb[0].mxu0
      %v1823 = vpop.f32.mrb[0].mxu0
      %v1824 = vadd.f32 0.0, %v1823
      %v1825 = vpop.f32.mrb[0].mxu0
      %1826 = vmatprep.mubr.bf16.mxu0 0
      %1827 = vmatmul.mubr.bf16.gmra.mrb[0].mxu0 %v915
      %v1828 = vpop.f32.mrb[0].mxu0
      %v1829 = vadd.f32 0.0, %v1828
      %v1830 = vpop.f32.mrb[0].mxu0
      %v1831 = vpop.f32.mrb[0].mxu0
      %v1832 = vadd.f32 0.0, %v1831
      %v1833 = vpop.f32.mrb[0].mxu0
      %1834 = vmatprep.mubr.bf16.mxu0 0
      %1835 = vmatmul.mubr.bf16.gmra.mrb[0].mxu0 %v917
      %v1836 = vpop.f32.mrb[0].mxu0
      %v1837 = vadd.f32 0.0, %v1836
      %v1838 = vpop.f32.mrb[0].mxu0
      %v1839 = vpop.f32.mrb[0].mxu0
      %v1840 = vadd.f32 0.0, %v1839
      %v1841 = vpop.f32.mrb[0].mxu0
      %1842 = vmatprep.mubr.bf16.mxu0 0
      %1843 = vmatmul.mubr.bf16.gmra.mrb[0].mxu0 %v919
      %v1844 = vpop.f32.mrb[0].mxu0
      %v1845 = vadd.f32 0.0, %v1844
      %v1846 = vpop.f32.mrb[0].mxu0
      %v1847 = vpop.f32.mrb[0].mxu0
      %v1848 = vadd.f32 0.0, %v1847
      %v1849 = vpop.f32.mrb[0].mxu0
      %1850 = vmatprep.mubr.bf16.mxu0 0
      %1851 = vmatmul.mubr.bf16.gmra.mrb[0].mxu0 %v921
      %v1852 = vpop.f32.mrb[0].mxu0
      %v1853 = vadd.f32 0.0, %v1852
      %v1854 = vpop.f32.mrb[0].mxu0
      %v1855 = vpop.f32.mrb[0].mxu0
      %v1856 = vadd.f32 0.0, %v1855
      %v1857 = vpop.f32.mrb[0].mxu0
      %1858 = vmatprep.mubr.bf16.mxu0 0
      %1859 = vmatmul.mubr.bf16.gmra.mrb[0].mxu0 %v923
      %v1860 = vpop.f32.mrb[0].mxu0
      %v1861 = vadd.f32 0.0, %v1860
      %v1862 = vpop.f32.mrb[0].mxu0
      %v1863 = vpop.f32.mrb[0].mxu0
      %v1864 = vadd.f32 0.0, %v1863
      %v1865 = vpop.f32.mrb[0].mxu0
      %1866 = vmatprep.mubr.bf16.mxu0 0
      %1867 = vmatmul.mubr.bf16.gmra.mrb[0].mxu0 %v925
      %v1868 = vpop.f32.mrb[0].mxu0
      %v1869 = vadd.f32 0.0, %v1868
      %v1870 = vpop.f32.mrb[0].mxu0
      %v1871 = vpop.f32.mrb[0].mxu0
      %v1872 = vadd.f32 0.0, %v1871
      %v1873 = vpop.f32.mrb[0].mxu0
      %1874 = vmatprep.mubr.bf16.mxu0 0
      %1875 = vmatmul.mubr.bf16.gmra.mrb[0].mxu0 %v927
      %v1876 = vpop.f32.mrb[0].mxu0
      %v1877 = vadd.f32 0.0, %v1876
      %v1878 = vpop.f32.mrb[0].mxu0
      %v1879 = vpop.f32.mrb[0].mxu0
      %v1880 = vadd.f32 0.0, %v1879
      %v1881 = vpop.f32.mrb[0].mxu0
      %1882 = vmatprep.mubr.bf16.mxu0 0
      %1883 = vmatmul.mubr.bf16.gmra.mrb[0].mxu0 %v929
      %v1884 = vpop.f32.mrb[0].mxu0
      %v1885 = vadd.f32 0.0, %v1884
      %v1886 = vpop.f32.mrb[0].mxu0
      %v1887 = vpop.f32.mrb[0].mxu0
      %v1888 = vadd.f32 0.0, %v1887
      %v1889 = vpop.f32.mrb[0].mxu0
      %1890 = vmatprep.mubr.bf16.mxu0 0
      %1891 = vmatmul.mubr.bf16.gmra.mrb[0].mxu0 %v931
      %v1892 = vpop.f32.mrb[0].mxu0
      %v1893 = vadd.f32 0.0, %v1892
      %v1894 = vpop.f32.mrb[0].mxu0
      %v1895 = vpop.f32.mrb[0].mxu0
      %v1896 = vadd.f32 0.0, %v1895
      %v1897 = vpop.f32.mrb[0].mxu0
      %1898 = vmatprep.mubr.bf16.mxu0 0
      %1899 = vmatmul.mubr.bf16.gmra.mrb[0].mxu0 %v933
      %v1900 = vpop.f32.mrb[0].mxu0
      %v1901 = vadd.f32 0.0, %v1900
      %v1902 = vpop.f32.mrb[0].mxu0
      %v1903 = vpop.f32.mrb[0].mxu0
      %v1904 = vadd.f32 0.0, %v1903
      %v1905 = vpop.f32.mrb[0].mxu0
      %1906 = vmatprep.mubr.bf16.mxu0 0
      %1907 = vmatmul.mubr.bf16.gmra.mrb[0].mxu0 %v935
      %v1908 = vpop.f32.mrb[0].mxu0
      %v1909 = vadd.f32 0.0, %v1908
      %v1910 = vpop.f32.mrb[0].mxu0
      %v1911 = vpop.f32.mrb[0].mxu0
      %v1912 = vadd.f32 0.0, %v1911
      %v1913 = vpop.f32.mrb[0].mxu0
      %1914 = vmatprep.mubr.bf16.mxu0 0
      %1915 = vmatmul.mubr.bf16.gmra.mrb[0].mxu0 %v937
      %v1916 = vpop.f32.mrb[0].mxu0
      %v1917 = vadd.f32 0.0, %v1916
      %v1918 = vpop.f32.mrb[0].mxu0
      %v1919 = vpop.f32.mrb[0].mxu0
      %v1920 = vadd.f32 0.0, %v1919
      %v1921 = vpop.f32.mrb[0].mxu0
      %1922 = vmatprep.mubr.bf16.mxu0 0
      %1923 = vmatmul.mubr.bf16.gmra.mrb[0].mxu0 %v939
      %v1924 = vpop.f32.mrb[0].mxu0
      %v1925 = vadd.f32 0.0, %v1924
      %v1926 = vpop.f32.mrb[0].mxu0
      %v1927 = vpop.f32.mrb[0].mxu0
      %v1928 = vadd.f32 0.0, %v1927
      %v1929 = vpop.f32.mrb[0].mxu0
      %1930 = vmatprep.mubr.bf16.mxu0 0
      %1931 = vmatmul.mubr.bf16.gmra.mrb[0].mxu0 %v1773
      %v1932 = vpop.f32.mrb[0].mxu0
      %v1933 = vadd.f32 0.0, %v1932
      %v1934 = vpop.f32.mrb[0].mxu0
      %v1935 = vpop.f32.mrb[0].mxu0
      %v1936 = vadd.f32 0.0, %v1935
      %v1937 = vpop.f32.mrb[0].mxu0
      %1938 = vdwg.mxu0
      %v1939 = vadd.f32 %v1593, %v1813
      %v1940 = vadd.f32 %v1594, %v1816
      %v1941 = vadd.f32 %v1595, %v1821
      %v1942 = vadd.f32 %v1596, %v1824
      %v1943 = vadd.f32 %v1597, %v1829
      %v1944 = vadd.f32 %v1598, %v1832
      %v1945 = vadd.f32 %v1599, %v1837
      %v1946 = vadd.f32 %v1600, %v1840
      %v1947 = vadd.f32 %v1601, %v1845
      %v1948 = vadd.f32 %v1602, %v1848
      %v1949 = vadd.f32 %v1603, %v1853
      %v1950 = vadd.f32 %v1604, %v1856
      %v1951 = vadd.f32 %v1605, %v1861
      %v1952 = vadd.f32 %v1606, %v1864
      %v1953 = vadd.f32 %v1607, %v1869
      %v1954 = vadd.f32 %v1608, %v1872
      %v1955 = vadd.f32 %v1609, %v1877
      %v1956 = vadd.f32 %v1610, %v1880
      %v1957 = vadd.f32 %v1611, %v1885
      %v1958 = vadd.f32 %v1612, %v1888
      %v1959 = vadd.f32 %v1613, %v1893
      %v1960 = vadd.f32 %v1614, %v1896
      %v1961 = vadd.f32 %v1615, %v1901
      %v1962 = vadd.f32 %v1616, %v1904
      %v1963 = vadd.f32 %v1617, %v1909
      %v1964 = vadd.f32 %v1618, %v1912
      %v1965 = vadd.f32 %v1619, %v1917
      %v1966 = vadd.f32 %v1620, %v1920
      %v1967 = vadd.f32 %v1621, %v1925
      %v1968 = vadd.f32 %v1622, %v1928
      %v1969 = vadd.f32 %v1623, %v1933
      %v1970 = vadd.f32 %v1624, %v1936
      %v1971 = vadd.f32 %v1738, %v326
      %v1972 = vadd.f32 %v1739, %v327
      %v1973 = vadd.f32 %v1740, %v329
      %v1974 = vadd.f32 %v1741, %v330
      %v1975 = vadd.f32 %v1742, %v332
      %v1976 = vadd.f32 %v1743, %v333
      %v1977 = vadd.f32 %v1744, %v335
      %v1978 = vadd.f32 %v1745, %v336
      %v1979 = vadd.f32 %v1746, %v338
      %v1980 = vadd.f32 %v1747, %v339
      %v1981 = vadd.f32 %v1748, %v341
      %v1982 = vadd.f32 %v1749, %v342
      %v1983 = vadd.f32 %v1750, %v344
      %v1984 = vadd.f32 %v1751, %v345
      %v1985 = vadd.f32 %v1752, %v347
      %v1986 = vadd.f32 %v1753, %v348
      %v1987 = vadd.f32 %v1754, %v350
      %v1988 = vadd.f32 %v1755, %v351
      %v1989 = vadd.f32 %v1756, %v353
      %v1990 = vadd.f32 %v1757, %v354
      %v1991 = vadd.f32 %v1758, %v356
      %v1992 = vadd.f32 %v1759, %v357
      %v1993 = vadd.f32 %v1760, %v359
      %v1994 = vadd.f32 %v1761, %v360
      %v1995 = vadd.f32 %v1762, %v362
      %v1996 = vadd.f32 %v1763, %v363
      %v1997 = vadd.f32 %v1764, %v365
      %v1998 = vadd.f32 %v1765, %v366
      %v1999 = vadd.f32 %v1766, %v368
      %v2000 = vadd.f32 %v1767, %v369
      %v2001 = vadd.f32 %v1768, %v371
      %v2002 = vadd.f32 %v1769, %v372
      %v2003 = vshrl.u32 %v463, 16
      %v2005 = vshll.u32 %v463, 16
      %v2007 = vrot.slane %v2005, 1
      %v2008 = vor.u32 %v2003, %v2007
      %v2010 = vshll.u32 %v464, 16
      %v2012 = vrot.slane %v2010, 1
      %v2013 = vsel %vm500, %v2008, %v2012
      %s2014 = scalar_lea.vmem %s2, 8
      %v2015 = vld [vmem:[%s2014] sm:$0x3]
      %v2017 = vsel %vm695, %v2013, 0
      %v2020 = vsel %vm744, %v2015, 0
      %2022 = vmatprep.subr.bf16.mxu0 0
      %2023 = vmatpush1.bf16.msra.mxu0 %v2020
      %2024 = vmatprep.subr.bf16.mxu0 0
      %2025 = vmatpush1.bf16.msra.mxu0 0
      %2026 = vmatprep.subr.bf16.mxu0 0
      %2027 = vmatpush1.bf16.msra.mxu0 0
      %2028 = vmatprep.subr.bf16.mxu0 0
      %2029 = vmatpush1.bf16.msra.mxu0 0
      %2030 = vmatprep.subr.bf16.mxu0 0
      %2031 = vmatpush1.bf16.msra.mxu0 0
      %2032 = vmatprep.subr.bf16.mxu0 0
      %2033 = vmatpush1.bf16.msra.mxu0 0
      %2034 = vmatprep.subr.bf16.mxu0 0
      %2035 = vmatpush1.bf16.msra.mxu0 0
      %2036 = vmatprep.subr.bf16.mxu0 0
      %2037 = vmatpush1.bf16.msra.mxu0 0
      %2038 = vmatprep.subr.bf16.mxu0 0
      %2039 = vmatpush1.bf16.msra.mxu0 0
      %2040 = vmatprep.subr.bf16.mxu0 0
      %2041 = vmatpush1.bf16.msra.mxu0 0
      %2042 = vmatprep.subr.bf16.mxu0 0
      %2043 = vmatpush1.bf16.msra.mxu0 0
      %2044 = vmatprep.subr.bf16.mxu0 0
      %2045 = vmatpush1.bf16.msra.mxu0 0
      %2046 = vmatprep.subr.bf16.mxu0 0
      %2047 = vmatpush1.bf16.msra.mxu0 0
      %2048 = vmatprep.subr.bf16.mxu0 0
      %2049 = vmatpush1.bf16.msra.mxu0 0
      %2050 = vmatprep.subr.bf16.mxu0 0
      %2051 = vmatpush1.bf16.msra.mxu0 0
      %2052 = vmatprep.subr.bf16.mxu0 0
      %2053 = vmatpush1.bf16.msra.mxu0 0
      %2054 = vmatprep.mubr.bf16.mxu0 0
      %2055 = vmatmul.mubr.bf16.gmra.mrb[0].mxu0 %v700
      %v2056 = vpop.f32.mrb[0].mxu0
      %v2057 = vadd.f32 0.0, %v2056
      %v2058 = vpop.f32.mrb[0].mxu0
      %v2059 = vpop.f32.mrb[0].mxu0
      %v2060 = vadd.f32 0.0, %v2059
      %v2061 = vpop.f32.mrb[0].mxu0
      %2062 = vmatprep.mubr.bf16.mxu0 0
      %2063 = vmatmul.mubr.bf16.gmra.mrb[0].mxu0 %v703
      %v2064 = vpop.f32.mrb[0].mxu0
      %v2065 = vadd.f32 0.0, %v2064
      %v2066 = vpop.f32.mrb[0].mxu0
      %v2067 = vpop.f32.mrb[0].mxu0
      %v2068 = vadd.f32 0.0, %v2067
      %v2069 = vpop.f32.mrb[0].mxu0
      %2070 = vmatprep.mubr.bf16.mxu0 0
      %2071 = vmatmul.mubr.bf16.gmra.mrb[0].mxu0 %v706
      %v2072 = vpop.f32.mrb[0].mxu0
      %v2073 = vadd.f32 0.0, %v2072
      %v2074 = vpop.f32.mrb[0].mxu0
      %v2075 = vpop.f32.mrb[0].mxu0
      %v2076 = vadd.f32 0.0, %v2075
      %v2077 = vpop.f32.mrb[0].mxu0
      %2078 = vmatprep.mubr.bf16.mxu0 0
      %2079 = vmatmul.mubr.bf16.gmra.mrb[0].mxu0 %v709
      %v2080 = vpop.f32.mrb[0].mxu0
      %v2081 = vadd.f32 0.0, %v2080
      %v2082 = vpop.f32.mrb[0].mxu0
      %v2083 = vpop.f32.mrb[0].mxu0
      %v2084 = vadd.f32 0.0, %v2083
      %v2085 = vpop.f32.mrb[0].mxu0
      %2086 = vmatprep.mubr.bf16.mxu0 0
      %2087 = vmatmul.mubr.bf16.gmra.mrb[0].mxu0 %v712
      %v2088 = vpop.f32.mrb[0].mxu0
      %v2089 = vadd.f32 0.0, %v2088
      %v2090 = vpop.f32.mrb[0].mxu0
      %v2091 = vpop.f32.mrb[0].mxu0
      %v2092 = vadd.f32 0.0, %v2091
      %v2093 = vpop.f32.mrb[0].mxu0
      %2094 = vmatprep.mubr.bf16.mxu0 0
      %2095 = vmatmul.mubr.bf16.gmra.mrb[0].mxu0 %v715
      %v2096 = vpop.f32.mrb[0].mxu0
      %v2097 = vadd.f32 0.0, %v2096
      %v2098 = vpop.f32.mrb[0].mxu0
      %v2099 = vpop.f32.mrb[0].mxu0
      %v2100 = vadd.f32 0.0, %v2099
      %v2101 = vpop.f32.mrb[0].mxu0
      %2102 = vmatprep.mubr.bf16.mxu0 0
      %2103 = vmatmul.mubr.bf16.gmra.mrb[0].mxu0 %v718
      %v2104 = vpop.f32.mrb[0].mxu0
      %v2105 = vadd.f32 0.0, %v2104
      %v2106 = vpop.f32.mrb[0].mxu0
      %v2107 = vpop.f32.mrb[0].mxu0
      %v2108 = vadd.f32 0.0, %v2107
      %v2109 = vpop.f32.mrb[0].mxu0
      %2110 = vmatprep.mubr.bf16.mxu0 0
      %2111 = vmatmul.mubr.bf16.gmra.mrb[0].mxu0 %v721
      %v2112 = vpop.f32.mrb[0].mxu0
      %v2113 = vadd.f32 0.0, %v2112
      %v2114 = vpop.f32.mrb[0].mxu0
      %v2115 = vpop.f32.mrb[0].mxu0
      %v2116 = vadd.f32 0.0, %v2115
      %v2117 = vpop.f32.mrb[0].mxu0
      %2118 = vmatprep.mubr.bf16.mxu0 0
      %2119 = vmatmul.mubr.bf16.gmra.mrb[0].mxu0 %v724
      %v2120 = vpop.f32.mrb[0].mxu0
      %v2121 = vadd.f32 0.0, %v2120
      %v2122 = vpop.f32.mrb[0].mxu0
      %v2123 = vpop.f32.mrb[0].mxu0
      %v2124 = vadd.f32 0.0, %v2123
      %v2125 = vpop.f32.mrb[0].mxu0
      %2126 = vmatprep.mubr.bf16.mxu0 0
      %2127 = vmatmul.mubr.bf16.gmra.mrb[0].mxu0 %v727
      %v2128 = vpop.f32.mrb[0].mxu0
      %v2129 = vadd.f32 0.0, %v2128
      %v2130 = vpop.f32.mrb[0].mxu0
      %v2131 = vpop.f32.mrb[0].mxu0
      %v2132 = vadd.f32 0.0, %v2131
      %v2133 = vpop.f32.mrb[0].mxu0
      %2134 = vmatprep.mubr.bf16.mxu0 0
      %2135 = vmatmul.mubr.bf16.gmra.mrb[0].mxu0 %v730
      %v2136 = vpop.f32.mrb[0].mxu0
      %v2137 = vadd.f32 0.0, %v2136
      %v2138 = vpop.f32.mrb[0].mxu0
      %v2139 = vpop.f32.mrb[0].mxu0
      %v2140 = vadd.f32 0.0, %v2139
      %v2141 = vpop.f32.mrb[0].mxu0
      %2142 = vmatprep.mubr.bf16.mxu0 0
      %2143 = vmatmul.mubr.bf16.gmra.mrb[0].mxu0 %v733
      %v2144 = vpop.f32.mrb[0].mxu0
      %v2145 = vadd.f32 0.0, %v2144
      %v2146 = vpop.f32.mrb[0].mxu0
      %v2147 = vpop.f32.mrb[0].mxu0
      %v2148 = vadd.f32 0.0, %v2147
      %v2149 = vpop.f32.mrb[0].mxu0
      %2150 = vmatprep.mubr.bf16.mxu0 0
      %2151 = vmatmul.mubr.bf16.gmra.mrb[0].mxu0 %v736
      %v2152 = vpop.f32.mrb[0].mxu0
      %v2153 = vadd.f32 0.0, %v2152
      %v2154 = vpop.f32.mrb[0].mxu0
      %v2155 = vpop.f32.mrb[0].mxu0
      %v2156 = vadd.f32 0.0, %v2155
      %v2157 = vpop.f32.mrb[0].mxu0
      %2158 = vmatprep.mubr.bf16.mxu0 0
      %2159 = vmatmul.mubr.bf16.gmra.mrb[0].mxu0 %v739
      %v2160 = vpop.f32.mrb[0].mxu0
      %v2161 = vadd.f32 0.0, %v2160
      %v2162 = vpop.f32.mrb[0].mxu0
      %v2163 = vpop.f32.mrb[0].mxu0
      %v2164 = vadd.f32 0.0, %v2163
      %v2165 = vpop.f32.mrb[0].mxu0
      %2166 = vmatprep.mubr.bf16.mxu0 0
      %2167 = vmatmul.mubr.bf16.gmra.mrb[0].mxu0 %v742
      %v2168 = vpop.f32.mrb[0].mxu0
      %v2169 = vadd.f32 0.0, %v2168
      %v2170 = vpop.f32.mrb[0].mxu0
      %v2171 = vpop.f32.mrb[0].mxu0
      %v2172 = vadd.f32 0.0, %v2171
      %v2173 = vpop.f32.mrb[0].mxu0
      %2174 = vmatprep.mubr.bf16.mxu0 0
      %2175 = vmatmul.mubr.bf16.gmra.mrb[0].mxu0 %v2017
      %v2176 = vpop.f32.mrb[0].mxu0
      %v2177 = vadd.f32 0.0, %v2176
      %v2178 = vpop.f32.mrb[0].mxu0
      %v2179 = vpop.f32.mrb[0].mxu0
      %v2180 = vadd.f32 0.0, %v2179
      %v2181 = vpop.f32.mrb[0].mxu0
      %2182 = vdwg.mxu0
      %v2183 = vadd.f32 %v1939, %v2057
      %v2184 = vadd.f32 %v1940, %v2060
      %v2185 = vadd.f32 %v1941, %v2065
      %v2186 = vadd.f32 %v1942, %v2068
      %v2187 = vadd.f32 %v1943, %v2073
      %v2188 = vadd.f32 %v1944, %v2076
      %v2189 = vadd.f32 %v1945, %v2081
      %v2190 = vadd.f32 %v1946, %v2084
      %v2191 = vadd.f32 %v1947, %v2089
      %v2192 = vadd.f32 %v1948, %v2092
      %v2193 = vadd.f32 %v1949, %v2097
      %v2194 = vadd.f32 %v1950, %v2100
      %v2195 = vadd.f32 %v1951, %v2105
      %v2196 = vadd.f32 %v1952, %v2108
      %v2197 = vadd.f32 %v1953, %v2113
      %v2198 = vadd.f32 %v1954, %v2116
      %v2199 = vadd.f32 %v1955, %v2121
      %v2200 = vadd.f32 %v1956, %v2124
      %v2201 = vadd.f32 %v1957, %v2129
      %v2202 = vadd.f32 %v1958, %v2132
      %v2203 = vadd.f32 %v1959, %v2137
      %v2204 = vadd.f32 %v1960, %v2140
      %v2205 = vadd.f32 %v1961, %v2145
      %v2206 = vadd.f32 %v1962, %v2148
      %v2207 = vadd.f32 %v1963, %v2153
      %v2208 = vadd.f32 %v1964, %v2156
      %v2209 = vadd.f32 %v1965, %v2161
      %v2210 = vadd.f32 %v1966, %v2164
      %v2211 = vadd.f32 %v1967, %v2169
      %v2212 = vadd.f32 %v1968, %v2172
      %v2213 = vadd.f32 %v1969, %v2177
      %v2214 = vadd.f32 %v1970, %v2180
      %v2218 = vrot.slane %v371, 1
      %v2219 = vrot.slane %v372, 1
      %v2220 = vsel %vm1153, %v2218, %v2219
      %v2221 = vrot.slane %v373, 1
      %v2222 = vsel %vm1153, %v2219, %v2221
      %v2225 = vadd.f32 %v1971, %v1161
      %v2226 = vadd.f32 %v1972, %v1163
      %v2227 = vadd.f32 %v1973, %v1166
      %v2228 = vadd.f32 %v1974, %v1168
      %v2229 = vadd.f32 %v1975, %v1171
      %v2230 = vadd.f32 %v1976, %v1173
      %v2231 = vadd.f32 %v1977, %v1176
      %v2232 = vadd.f32 %v1978, %v1178
      %v2233 = vadd.f32 %v1979, %v1181
      %v2234 = vadd.f32 %v1980, %v1183
      %v2235 = vadd.f32 %v1981, %v1186
      %v2236 = vadd.f32 %v1982, %v1188
      %v2237 = vadd.f32 %v1983, %v1191
      %v2238 = vadd.f32 %v1984, %v1193
      %v2239 = vadd.f32 %v1985, %v1196
      %v2240 = vadd.f32 %v1986, %v1198
      %v2241 = vadd.f32 %v1987, %v1201
      %v2242 = vadd.f32 %v1988, %v1203
      %v2243 = vadd.f32 %v1989, %v1206
      %v2244 = vadd.f32 %v1990, %v1208
      %v2245 = vadd.f32 %v1991, %v1211
      %v2246 = vadd.f32 %v1992, %v1213
      %v2247 = vadd.f32 %v1993, %v1216
      %v2248 = vadd.f32 %v1994, %v1218
      %v2249 = vadd.f32 %v1995, %v1221
      %v2250 = vadd.f32 %v1996, %v1223
      %v2251 = vadd.f32 %v1997, %v1226
      %v2252 = vadd.f32 %v1998, %v1228
      %v2253 = vadd.f32 %v1999, %v1231
      %v2254 = vadd.f32 %v2000, %v1233
      %v2255 = vadd.f32 %v2001, %v2220
      %v2256 = vadd.f32 %v2002, %v2222
      %v2259 = vrot.slane %v463, 1
      %v2260 = vrot.slane %v464, 1
      %v2261 = vsel %vm1330, %v2259, %v2260
      %s2262 = scalar_lea.vmem %s2, 10
      %v2263 = vld [vmem:[%s2262] sm:$0x3]
      %v2265 = vsel %vm695, %v2261, 0
      %v2268 = vsel %vm744, %v2263, 0
      %2270 = vmatprep.subr.bf16.mxu0 0
      %2271 = vmatpush1.bf16.msra.mxu0 %v2268
      %2272 = vmatprep.subr.bf16.mxu0 0
      %2273 = vmatpush1.bf16.msra.mxu0 0
      %2274 = vmatprep.subr.bf16.mxu0 0
      %2275 = vmatpush1.bf16.msra.mxu0 0
      %2276 = vmatprep.subr.bf16.mxu0 0
      %2277 = vmatpush1.bf16.msra.mxu0 0
      %2278 = vmatprep.subr.bf16.mxu0 0
      %2279 = vmatpush1.bf16.msra.mxu0 0
      %2280 = vmatprep.subr.bf16.mxu0 0
      %2281 = vmatpush1.bf16.msra.mxu0 0
      %2282 = vmatprep.subr.bf16.mxu0 0
      %2283 = vmatpush1.bf16.msra.mxu0 0
      %2284 = vmatprep.subr.bf16.mxu0 0
      %2285 = vmatpush1.bf16.msra.mxu0 0
      %2286 = vmatprep.subr.bf16.mxu0 0
      %2287 = vmatpush1.bf16.msra.mxu0 0
      %2288 = vmatprep.subr.bf16.mxu0 0
      %2289 = vmatpush1.bf16.msra.mxu0 0
      %2290 = vmatprep.subr.bf16.mxu0 0
      %2291 = vmatpush1.bf16.msra.mxu0 0
      %2292 = vmatprep.subr.bf16.mxu0 0
      %2293 = vmatpush1.bf16.msra.mxu0 0
      %2294 = vmatprep.subr.bf16.mxu0 0
      %2295 = vmatpush1.bf16.msra.mxu0 0
      %2296 = vmatprep.subr.bf16.mxu0 0
      %2297 = vmatpush1.bf16.msra.mxu0 0
      %2298 = vmatprep.subr.bf16.mxu0 0
      %2299 = vmatpush1.bf16.msra.mxu0 0
      %2300 = vmatprep.subr.bf16.mxu0 0
      %2301 = vmatpush1.bf16.msra.mxu0 0
      %2302 = vmatprep.mubr.bf16.mxu0 0
      %2303 = vmatmul.mubr.bf16.gmra.mrb[0].mxu0 %v1385
      %v2304 = vpop.f32.mrb[0].mxu0
      %v2305 = vadd.f32 0.0, %v2304
      %v2306 = vpop.f32.mrb[0].mxu0
      %v2307 = vpop.f32.mrb[0].mxu0
      %v2308 = vadd.f32 0.0, %v2307
      %v2309 = vpop.f32.mrb[0].mxu0
      %2310 = vmatprep.mubr.bf16.mxu0 0
      %2311 = vmatmul.mubr.bf16.gmra.mrb[0].mxu0 %v1388
      %v2312 = vpop.f32.mrb[0].mxu0
      %v2313 = vadd.f32 0.0, %v2312
      %v2314 = vpop.f32.mrb[0].mxu0
      %v2315 = vpop.f32.mrb[0].mxu0
      %v2316 = vadd.f32 0.0, %v2315
      %v2317 = vpop.f32.mrb[0].mxu0
      %2318 = vmatprep.mubr.bf16.mxu0 0
      %2319 = vmatmul.mubr.bf16.gmra.mrb[0].mxu0 %v1391
      %v2320 = vpop.f32.mrb[0].mxu0
      %v2321 = vadd.f32 0.0, %v2320
      %v2322 = vpop.f32.mrb[0].mxu0
      %v2323 = vpop.f32.mrb[0].mxu0
      %v2324 = vadd.f32 0.0, %v2323
      %v2325 = vpop.f32.mrb[0].mxu0
      %2326 = vmatprep.mubr.bf16.mxu0 0
      %2327 = vmatmul.mubr.bf16.gmra.mrb[0].mxu0 %v1394
      %v2328 = vpop.f32.mrb[0].mxu0
      %v2329 = vadd.f32 0.0, %v2328
      %v2330 = vpop.f32.mrb[0].mxu0
      %v2331 = vpop.f32.mrb[0].mxu0
      %v2332 = vadd.f32 0.0, %v2331
      %v2333 = vpop.f32.mrb[0].mxu0
      %2334 = vmatprep.mubr.bf16.mxu0 0
      %2335 = vmatmul.mubr.bf16.gmra.mrb[0].mxu0 %v1397
      %v2336 = vpop.f32.mrb[0].mxu0
      %v2337 = vadd.f32 0.0, %v2336
      %v2338 = vpop.f32.mrb[0].mxu0
      %v2339 = vpop.f32.mrb[0].mxu0
      %v2340 = vadd.f32 0.0, %v2339
      %v2341 = vpop.f32.mrb[0].mxu0
      %2342 = vmatprep.mubr.bf16.mxu0 0
      %2343 = vmatmul.mubr.bf16.gmra.mrb[0].mxu0 %v1400
      %v2344 = vpop.f32.mrb[0].mxu0
      %v2345 = vadd.f32 0.0, %v2344
      %v2346 = vpop.f32.mrb[0].mxu0
      %v2347 = vpop.f32.mrb[0].mxu0
      %v2348 = vadd.f32 0.0, %v2347
      %v2349 = vpop.f32.mrb[0].mxu0
      %2350 = vmatprep.mubr.bf16.mxu0 0
      %2351 = vmatmul.mubr.bf16.gmra.mrb[0].mxu0 %v1403
      %v2352 = vpop.f32.mrb[0].mxu0
      %v2353 = vadd.f32 0.0, %v2352
      %v2354 = vpop.f32.mrb[0].mxu0
      %v2355 = vpop.f32.mrb[0].mxu0
      %v2356 = vadd.f32 0.0, %v2355
      %v2357 = vpop.f32.mrb[0].mxu0
      %2358 = vmatprep.mubr.bf16.mxu0 0
      %2359 = vmatmul.mubr.bf16.gmra.mrb[0].mxu0 %v1406
      %v2360 = vpop.f32.mrb[0].mxu0
      %v2361 = vadd.f32 0.0, %v2360
      %v2362 = vpop.f32.mrb[0].mxu0
      %v2363 = vpop.f32.mrb[0].mxu0
      %v2364 = vadd.f32 0.0, %v2363
      %v2365 = vpop.f32.mrb[0].mxu0
      %2366 = vmatprep.mubr.bf16.mxu0 0
      %2367 = vmatmul.mubr.bf16.gmra.mrb[0].mxu0 %v1409
      %v2368 = vpop.f32.mrb[0].mxu0
      %v2369 = vadd.f32 0.0, %v2368
      %v2370 = vpop.f32.mrb[0].mxu0
      %v2371 = vpop.f32.mrb[0].mxu0
      %v2372 = vadd.f32 0.0, %v2371
      %v2373 = vpop.f32.mrb[0].mxu0
      %2374 = vmatprep.mubr.bf16.mxu0 0
      %2375 = vmatmul.mubr.bf16.gmra.mrb[0].mxu0 %v1412
      %v2376 = vpop.f32.mrb[0].mxu0
      %v2377 = vadd.f32 0.0, %v2376
      %v2378 = vpop.f32.mrb[0].mxu0
      %v2379 = vpop.f32.mrb[0].mxu0
      %v2380 = vadd.f32 0.0, %v2379
      %v2381 = vpop.f32.mrb[0].mxu0
      %2382 = vmatprep.mubr.bf16.mxu0 0
      %2383 = vmatmul.mubr.bf16.gmra.mrb[0].mxu0 %v1415
      %v2384 = vpop.f32.mrb[0].mxu0
      %v2385 = vadd.f32 0.0, %v2384
      %v2386 = vpop.f32.mrb[0].mxu0
      %v2387 = vpop.f32.mrb[0].mxu0
      %v2388 = vadd.f32 0.0, %v2387
      %v2389 = vpop.f32.mrb[0].mxu0
      %2390 = vmatprep.mubr.bf16.mxu0 0
      %2391 = vmatmul.mubr.bf16.gmra.mrb[0].mxu0 %v1418
      %v2392 = vpop.f32.mrb[0].mxu0
      %v2393 = vadd.f32 0.0, %v2392
      %v2394 = vpop.f32.mrb[0].mxu0
      %v2395 = vpop.f32.mrb[0].mxu0
      %v2396 = vadd.f32 0.0, %v2395
      %v2397 = vpop.f32.mrb[0].mxu0
      %2398 = vmatprep.mubr.bf16.mxu0 0
      %2399 = vmatmul.mubr.bf16.gmra.mrb[0].mxu0 %v1421
      %v2400 = vpop.f32.mrb[0].mxu0
      %v2401 = vadd.f32 0.0, %v2400
      %v2402 = vpop.f32.mrb[0].mxu0
      %v2403 = vpop.f32.mrb[0].mxu0
      %v2404 = vadd.f32 0.0, %v2403
      %v2405 = vpop.f32.mrb[0].mxu0
      %2406 = vmatprep.mubr.bf16.mxu0 0
      %2407 = vmatmul.mubr.bf16.gmra.mrb[0].mxu0 %v1424
      %v2408 = vpop.f32.mrb[0].mxu0
      %v2409 = vadd.f32 0.0, %v2408
      %v2410 = vpop.f32.mrb[0].mxu0
      %v2411 = vpop.f32.mrb[0].mxu0
      %v2412 = vadd.f32 0.0, %v2411
      %v2413 = vpop.f32.mrb[0].mxu0
      %2414 = vmatprep.mubr.bf16.mxu0 0
      %2415 = vmatmul.mubr.bf16.gmra.mrb[0].mxu0 %v1427
      %v2416 = vpop.f32.mrb[0].mxu0
      %v2417 = vadd.f32 0.0, %v2416
      %v2418 = vpop.f32.mrb[0].mxu0
      %v2419 = vpop.f32.mrb[0].mxu0
      %v2420 = vadd.f32 0.0, %v2419
      %v2421 = vpop.f32.mrb[0].mxu0
      %2422 = vmatprep.mubr.bf16.mxu0 0
      %2423 = vmatmul.mubr.bf16.gmra.mrb[0].mxu0 %v2265
      %v2424 = vpop.f32.mrb[0].mxu0
      %v2425 = vadd.f32 0.0, %v2424
      %v2426 = vpop.f32.mrb[0].mxu0
      %v2427 = vpop.f32.mrb[0].mxu0
      %v2428 = vadd.f32 0.0, %v2427
      %v2429 = vpop.f32.mrb[0].mxu0
      %2430 = vdwg.mxu0
      %v2431 = vadd.f32 %v2183, %v2305
      %v2432 = vadd.f32 %v2184, %v2308
      %v2433 = vadd.f32 %v2185, %v2313
      %v2434 = vadd.f32 %v2186, %v2316
      %v2435 = vadd.f32 %v2187, %v2321
      %v2436 = vadd.f32 %v2188, %v2324
      %v2437 = vadd.f32 %v2189, %v2329
      %v2438 = vadd.f32 %v2190, %v2332
      %v2439 = vadd.f32 %v2191, %v2337
      %v2440 = vadd.f32 %v2192, %v2340
      %v2441 = vadd.f32 %v2193, %v2345
      %v2442 = vadd.f32 %v2194, %v2348
      %v2443 = vadd.f32 %v2195, %v2353
      %v2444 = vadd.f32 %v2196, %v2356
      %v2445 = vadd.f32 %v2197, %v2361
      %v2446 = vadd.f32 %v2198, %v2364
      %v2447 = vadd.f32 %v2199, %v2369
      %v2448 = vadd.f32 %v2200, %v2372
      %v2449 = vadd.f32 %v2201, %v2377
      %v2450 = vadd.f32 %v2202, %v2380
      %v2451 = vadd.f32 %v2203, %v2385
      %v2452 = vadd.f32 %v2204, %v2388
      %v2453 = vadd.f32 %v2205, %v2393
      %v2454 = vadd.f32 %v2206, %v2396
      %v2455 = vadd.f32 %v2207, %v2401
      %v2456 = vadd.f32 %v2208, %v2404
      %v2457 = vadd.f32 %v2209, %v2409
      %v2458 = vadd.f32 %v2210, %v2412
      %v2459 = vadd.f32 %v2211, %v2417
      %v2460 = vadd.f32 %v2212, %v2420
      %v2461 = vadd.f32 %v2213, %v2425
      %v2462 = vadd.f32 %v2214, %v2428
      %v2463 = vrot.slane %v371, 2
      %v2464 = vrot.slane %v372, 2
      %v2465 = vsel %vm1625, %v2463, %v2464
      %v2466 = vrot.slane %v373, 2
      %v2467 = vsel %vm1625, %v2464, %v2466
      %v2470 = vadd.f32 %v2225, %v1633
      %v2471 = vadd.f32 %v2226, %v1635
      %v2472 = vadd.f32 %v2227, %v1638
      %v2473 = vadd.f32 %v2228, %v1640
      %v2474 = vadd.f32 %v2229, %v1643
      %v2475 = vadd.f32 %v2230, %v1645
      %v2476 = vadd.f32 %v2231, %v1648
      %v2477 = vadd.f32 %v2232, %v1650
      %v2478 = vadd.f32 %v2233, %v1653
      %v2479 = vadd.f32 %v2234, %v1655
      %v2480 = vadd.f32 %v2235, %v1658
      %v2481 = vadd.f32 %v2236, %v1660
      %v2482 = vadd.f32 %v2237, %v1663
      %v2483 = vadd.f32 %v2238, %v1665
      %v2484 = vadd.f32 %v2239, %v1668
      %v2485 = vadd.f32 %v2240, %v1670
      %v2486 = vadd.f32 %v2241, %v1673
      %v2487 = vadd.f32 %v2242, %v1675
      %v2488 = vadd.f32 %v2243, %v1678
      %v2489 = vadd.f32 %v2244, %v1680
      %v2490 = vadd.f32 %v2245, %v1683
      %v2491 = vadd.f32 %v2246, %v1685
      %v2492 = vadd.f32 %v2247, %v1688
      %v2493 = vadd.f32 %v2248, %v1690
      %v2494 = vadd.f32 %v2249, %v1693
      %v2495 = vadd.f32 %v2250, %v1695
      %v2496 = vadd.f32 %v2251, %v1698
      %v2497 = vadd.f32 %v2252, %v1700
      %v2498 = vadd.f32 %v2253, %v1703
      %v2499 = vadd.f32 %v2254, %v1705
      %v2500 = vadd.f32 %v2255, %v2465
      %v2501 = vadd.f32 %v2256, %v2467
      %s2502 = scalar_lea.vmem %s2, 12
      %v2503 = vld [vmem:[%s2502] sm:$0x3]
      %v2505 = vsel %vm695, %v465, 0
      %v2508 = vsel %vm744, %v2503, 0
      %2510 = vmatprep.subr.bf16.mxu0 0
      %2511 = vmatpush1.bf16.msra.mxu0 %v2508
      %2512 = vmatprep.subr.bf16.mxu0 0
      %2513 = vmatpush1.bf16.msra.mxu0 0
      %2514 = vmatprep.subr.bf16.mxu0 0
      %2515 = vmatpush1.bf16.msra.mxu0 0
      %2516 = vmatprep.subr.bf16.mxu0 0
      %2517 = vmatpush1.bf16.msra.mxu0 0
      %2518 = vmatprep.subr.bf16.mxu0 0
      %2519 = vmatpush1.bf16.msra.mxu0 0
      %2520 = vmatprep.subr.bf16.mxu0 0
      %2521 = vmatpush1.bf16.msra.mxu0 0
      %2522 = vmatprep.subr.bf16.mxu0 0
      %2523 = vmatpush1.bf16.msra.mxu0 0
      %2524 = vmatprep.subr.bf16.mxu0 0
      %2525 = vmatpush1.bf16.msra.mxu0 0
      %2526 = vmatprep.subr.bf16.mxu0 0
      %2527 = vmatpush1.bf16.msra.mxu0 0
      %2528 = vmatprep.subr.bf16.mxu0 0
      %2529 = vmatpush1.bf16.msra.mxu0 0
      %2530 = vmatprep.subr.bf16.mxu0 0
      %2531 = vmatpush1.bf16.msra.mxu0 0
      %2532 = vmatprep.subr.bf16.mxu0 0
      %2533 = vmatpush1.bf16.msra.mxu0 0
      %2534 = vmatprep.subr.bf16.mxu0 0
      %2535 = vmatpush1.bf16.msra.mxu0 0
      %2536 = vmatprep.subr.bf16.mxu0 0
      %2537 = vmatpush1.bf16.msra.mxu0 0
      %2538 = vmatprep.subr.bf16.mxu0 0
      %2539 = vmatpush1.bf16.msra.mxu0 0
      %2540 = vmatprep.subr.bf16.mxu0 0
      %2541 = vmatpush1.bf16.msra.mxu0 0
      %2542 = vmatprep.mubr.bf16.mxu0 0
      %2543 = vmatmul.mubr.bf16.gmra.mrb[0].mxu0 %v913
      %v2544 = vpop.f32.mrb[0].mxu0
      %v2545 = vadd.f32 0.0, %v2544
      %v2546 = vpop.f32.mrb[0].mxu0
      %v2547 = vpop.f32.mrb[0].mxu0
      %v2548 = vadd.f32 0.0, %v2547
      %v2549 = vpop.f32.mrb[0].mxu0
      %2550 = vmatprep.mubr.bf16.mxu0 0
      %2551 = vmatmul.mubr.bf16.gmra.mrb[0].mxu0 %v915
      %v2552 = vpop.f32.mrb[0].mxu0
      %v2553 = vadd.f32 0.0, %v2552
      %v2554 = vpop.f32.mrb[0].mxu0
      %v2555 = vpop.f32.mrb[0].mxu0
      %v2556 = vadd.f32 0.0, %v2555
      %v2557 = vpop.f32.mrb[0].mxu0
      %2558 = vmatprep.mubr.bf16.mxu0 0
      %2559 = vmatmul.mubr.bf16.gmra.mrb[0].mxu0 %v917
      %v2560 = vpop.f32.mrb[0].mxu0
      %v2561 = vadd.f32 0.0, %v2560
      %v2562 = vpop.f32.mrb[0].mxu0
      %v2563 = vpop.f32.mrb[0].mxu0
      %v2564 = vadd.f32 0.0, %v2563
      %v2565 = vpop.f32.mrb[0].mxu0
      %2566 = vmatprep.mubr.bf16.mxu0 0
      %2567 = vmatmul.mubr.bf16.gmra.mrb[0].mxu0 %v919
      %v2568 = vpop.f32.mrb[0].mxu0
      %v2569 = vadd.f32 0.0, %v2568
      %v2570 = vpop.f32.mrb[0].mxu0
      %v2571 = vpop.f32.mrb[0].mxu0
      %v2572 = vadd.f32 0.0, %v2571
      %v2573 = vpop.f32.mrb[0].mxu0
      %2574 = vmatprep.mubr.bf16.mxu0 0
      %2575 = vmatmul.mubr.bf16.gmra.mrb[0].mxu0 %v921
      %v2576 = vpop.f32.mrb[0].mxu0
      %v2577 = vadd.f32 0.0, %v2576
      %v2578 = vpop.f32.mrb[0].mxu0
      %v2579 = vpop.f32.mrb[0].mxu0
      %v2580 = vadd.f32 0.0, %v2579
      %v2581 = vpop.f32.mrb[0].mxu0
      %2582 = vmatprep.mubr.bf16.mxu0 0
      %2583 = vmatmul.mubr.bf16.gmra.mrb[0].mxu0 %v923
      %v2584 = vpop.f32.mrb[0].mxu0
      %v2585 = vadd.f32 0.0, %v2584
      %v2586 = vpop.f32.mrb[0].mxu0
      %v2587 = vpop.f32.mrb[0].mxu0
      %v2588 = vadd.f32 0.0, %v2587
      %v2589 = vpop.f32.mrb[0].mxu0
      %2590 = vmatprep.mubr.bf16.mxu0 0
      %2591 = vmatmul.mubr.bf16.gmra.mrb[0].mxu0 %v925
      %v2592 = vpop.f32.mrb[0].mxu0
      %v2593 = vadd.f32 0.0, %v2592
      %v2594 = vpop.f32.mrb[0].mxu0
      %v2595 = vpop.f32.mrb[0].mxu0
      %v2596 = vadd.f32 0.0, %v2595
      %v2597 = vpop.f32.mrb[0].mxu0
      %2598 = vmatprep.mubr.bf16.mxu0 0
      %2599 = vmatmul.mubr.bf16.gmra.mrb[0].mxu0 %v927
      %v2600 = vpop.f32.mrb[0].mxu0
      %v2601 = vadd.f32 0.0, %v2600
      %v2602 = vpop.f32.mrb[0].mxu0
      %v2603 = vpop.f32.mrb[0].mxu0
      %v2604 = vadd.f32 0.0, %v2603
      %v2605 = vpop.f32.mrb[0].mxu0
      %2606 = vmatprep.mubr.bf16.mxu0 0
      %2607 = vmatmul.mubr.bf16.gmra.mrb[0].mxu0 %v929
      %v2608 = vpop.f32.mrb[0].mxu0
      %v2609 = vadd.f32 0.0, %v2608
      %v2610 = vpop.f32.mrb[0].mxu0
      %v2611 = vpop.f32.mrb[0].mxu0
      %v2612 = vadd.f32 0.0, %v2611
      %v2613 = vpop.f32.mrb[0].mxu0
      %2614 = vmatprep.mubr.bf16.mxu0 0
      %2615 = vmatmul.mubr.bf16.gmra.mrb[0].mxu0 %v931
      %v2616 = vpop.f32.mrb[0].mxu0
      %v2617 = vadd.f32 0.0, %v2616
      %v2618 = vpop.f32.mrb[0].mxu0
      %v2619 = vpop.f32.mrb[0].mxu0
      %v2620 = vadd.f32 0.0, %v2619
      %v2621 = vpop.f32.mrb[0].mxu0
      %2622 = vmatprep.mubr.bf16.mxu0 0
      %2623 = vmatmul.mubr.bf16.gmra.mrb[0].mxu0 %v933
      %v2624 = vpop.f32.mrb[0].mxu0
      %v2625 = vadd.f32 0.0, %v2624
      %v2626 = vpop.f32.mrb[0].mxu0
      %v2627 = vpop.f32.mrb[0].mxu0
      %v2628 = vadd.f32 0.0, %v2627
      %v2629 = vpop.f32.mrb[0].mxu0
      %2630 = vmatprep.mubr.bf16.mxu0 0
      %2631 = vmatmul.mubr.bf16.gmra.mrb[0].mxu0 %v935
      %v2632 = vpop.f32.mrb[0].mxu0
      %v2633 = vadd.f32 0.0, %v2632
      %v2634 = vpop.f32.mrb[0].mxu0
      %v2635 = vpop.f32.mrb[0].mxu0
      %v2636 = vadd.f32 0.0, %v2635
      %v2637 = vpop.f32.mrb[0].mxu0
      %2638 = vmatprep.mubr.bf16.mxu0 0
      %2639 = vmatmul.mubr.bf16.gmra.mrb[0].mxu0 %v937
      %v2640 = vpop.f32.mrb[0].mxu0
      %v2641 = vadd.f32 0.0, %v2640
      %v2642 = vpop.f32.mrb[0].mxu0
      %v2643 = vpop.f32.mrb[0].mxu0
      %v2644 = vadd.f32 0.0, %v2643
      %v2645 = vpop.f32.mrb[0].mxu0
      %2646 = vmatprep.mubr.bf16.mxu0 0
      %2647 = vmatmul.mubr.bf16.gmra.mrb[0].mxu0 %v939
      %v2648 = vpop.f32.mrb[0].mxu0
      %v2649 = vadd.f32 0.0, %v2648
      %v2650 = vpop.f32.mrb[0].mxu0
      %v2651 = vpop.f32.mrb[0].mxu0
      %v2652 = vadd.f32 0.0, %v2651
      %v2653 = vpop.f32.mrb[0].mxu0
      %2654 = vmatprep.mubr.bf16.mxu0 0
      %2655 = vmatmul.mubr.bf16.gmra.mrb[0].mxu0 %v1773
      %v2656 = vpop.f32.mrb[0].mxu0
      %v2657 = vadd.f32 0.0, %v2656
      %v2658 = vpop.f32.mrb[0].mxu0
      %v2659 = vpop.f32.mrb[0].mxu0
      %v2660 = vadd.f32 0.0, %v2659
      %v2661 = vpop.f32.mrb[0].mxu0
      %2662 = vmatprep.mubr.bf16.mxu0 0
      %2663 = vmatmul.mubr.bf16.gmra.mrb[0].mxu0 %v2505
      %v2664 = vpop.f32.mrb[0].mxu0
      %v2665 = vadd.f32 0.0, %v2664
      %v2666 = vpop.f32.mrb[0].mxu0
      %v2667 = vpop.f32.mrb[0].mxu0
      %v2668 = vadd.f32 0.0, %v2667
      %v2669 = vpop.f32.mrb[0].mxu0
      %2670 = vdwg.mxu0
      %v2671 = vadd.f32 %v2431, %v2545
      %v2672 = vadd.f32 %v2432, %v2548
      %v2673 = vadd.f32 %v2433, %v2553
      %v2674 = vadd.f32 %v2434, %v2556
      %v2675 = vadd.f32 %v2435, %v2561
      %v2676 = vadd.f32 %v2436, %v2564
      %v2677 = vadd.f32 %v2437, %v2569
      %v2678 = vadd.f32 %v2438, %v2572
      %v2679 = vadd.f32 %v2439, %v2577
      %v2680 = vadd.f32 %v2440, %v2580
      %v2681 = vadd.f32 %v2441, %v2585
      %v2682 = vadd.f32 %v2442, %v2588
      %v2683 = vadd.f32 %v2443, %v2593
      %v2684 = vadd.f32 %v2444, %v2596
      %v2685 = vadd.f32 %v2445, %v2601
      %v2686 = vadd.f32 %v2446, %v2604
      %v2687 = vadd.f32 %v2447, %v2609
      %v2688 = vadd.f32 %v2448, %v2612
      %v2689 = vadd.f32 %v2449, %v2617
      %v2690 = vadd.f32 %v2450, %v2620
      %v2691 = vadd.f32 %v2451, %v2625
      %v2692 = vadd.f32 %v2452, %v2628
      %v2693 = vadd.f32 %v2453, %v2633
      %v2694 = vadd.f32 %v2454, %v2636
      %v2695 = vadd.f32 %v2455, %v2641
      %v2696 = vadd.f32 %v2456, %v2644
      %v2697 = vadd.f32 %v2457, %v2649
      %v2698 = vadd.f32 %v2458, %v2652
      %v2699 = vadd.f32 %v2459, %v2657
      %v2700 = vadd.f32 %v2460, %v2660
      %v2701 = vadd.f32 %v2461, %v2665
      %v2702 = vadd.f32 %v2462, %v2668
      %v2703 = vadd.f32 %v2470, %v329
      %v2704 = vadd.f32 %v2471, %v330
      %v2705 = vadd.f32 %v2472, %v332
      %v2706 = vadd.f32 %v2473, %v333
      %v2707 = vadd.f32 %v2474, %v335
      %v2708 = vadd.f32 %v2475, %v336
      %v2709 = vadd.f32 %v2476, %v338
      %v2710 = vadd.f32 %v2477, %v339
      %v2711 = vadd.f32 %v2478, %v341
      %v2712 = vadd.f32 %v2479, %v342
      %v2713 = vadd.f32 %v2480, %v344
      %v2714 = vadd.f32 %v2481, %v345
      %v2715 = vadd.f32 %v2482, %v347
      %v2716 = vadd.f32 %v2483, %v348
      %v2717 = vadd.f32 %v2484, %v350
      %v2718 = vadd.f32 %v2485, %v351
      %v2719 = vadd.f32 %v2486, %v353
      %v2720 = vadd.f32 %v2487, %v354
      %v2721 = vadd.f32 %v2488, %v356
      %v2722 = vadd.f32 %v2489, %v357
      %v2723 = vadd.f32 %v2490, %v359
      %v2724 = vadd.f32 %v2491, %v360
      %v2725 = vadd.f32 %v2492, %v362
      %v2726 = vadd.f32 %v2493, %v363
      %v2727 = vadd.f32 %v2494, %v365
      %v2728 = vadd.f32 %v2495, %v366
      %v2729 = vadd.f32 %v2496, %v368
      %v2730 = vadd.f32 %v2497, %v369
      %v2731 = vadd.f32 %v2498, %v371
      %v2732 = vadd.f32 %v2499, %v372
      %v2733 = vadd.f32 %v2500, %v374
      %v2734 = vadd.f32 %v2501, %v375
      %v2735 = vshrl.u32 %v465, 16
      %v2737 = vshll.u32 %v465, 16
      %v2739 = vrot.slane %v2737, 1
      %v2740 = vor.u32 %v2735, %v2739
      %v2742 = vshll.u32 %v466, 16
      %v2744 = vrot.slane %v2742, 1
      %v2745 = vsel %vm500, %v2740, %v2744
      %s2746 = scalar_lea.vmem %s2, 14
      %v2747 = vld [vmem:[%s2746] sm:$0x3]
      %v2749 = vsel %vm695, %v2745, 0
      %v2752 = vsel %vm744, %v2747, 0
      %2754 = vmatprep.subr.bf16.mxu0 0
      %2755 = vmatpush1.bf16.msra.mxu0 %v2752
      %2756 = vmatprep.subr.bf16.mxu0 0
      %2757 = vmatpush1.bf16.msra.mxu0 0
      %2758 = vmatprep.subr.bf16.mxu0 0
      %2759 = vmatpush1.bf16.msra.mxu0 0
      %2760 = vmatprep.subr.bf16.mxu0 0
      %2761 = vmatpush1.bf16.msra.mxu0 0
      %2762 = vmatprep.subr.bf16.mxu0 0
      %2763 = vmatpush1.bf16.msra.mxu0 0
      %2764 = vmatprep.subr.bf16.mxu0 0
      %2765 = vmatpush1.bf16.msra.mxu0 0
      %2766 = vmatprep.subr.bf16.mxu0 0
      %2767 = vmatpush1.bf16.msra.mxu0 0
      %2768 = vmatprep.subr.bf16.mxu0 0
      %2769 = vmatpush1.bf16.msra.mxu0 0
      %2770 = vmatprep.subr.bf16.mxu0 0
      %2771 = vmatpush1.bf16.msra.mxu0 0
      %2772 = vmatprep.subr.bf16.mxu0 0
      %2773 = vmatpush1.bf16.msra.mxu0 0
      %2774 = vmatprep.subr.bf16.mxu0 0
      %2775 = vmatpush1.bf16.msra.mxu0 0
      %2776 = vmatprep.subr.bf16.mxu0 0
      %2777 = vmatpush1.bf16.msra.mxu0 0
      %2778 = vmatprep.subr.bf16.mxu0 0
      %2779 = vmatpush1.bf16.msra.mxu0 0
      %2780 = vmatprep.subr.bf16.mxu0 0
      %2781 = vmatpush1.bf16.msra.mxu0 0
      %2782 = vmatprep.subr.bf16.mxu0 0
      %2783 = vmatpush1.bf16.msra.mxu0 0
      %2784 = vmatprep.subr.bf16.mxu0 0
      %2785 = vmatpush1.bf16.msra.mxu0 0
      %2786 = vmatprep.mubr.bf16.mxu0 0
      %2787 = vmatmul.mubr.bf16.gmra.mrb[0].mxu0 %v703
      %v2788 = vpop.f32.mrb[0].mxu0
      %v2789 = vadd.f32 0.0, %v2788
      %v2790 = vpop.f32.mrb[0].mxu0
      %v2791 = vpop.f32.mrb[0].mxu0
      %v2792 = vadd.f32 0.0, %v2791
      %v2793 = vpop.f32.mrb[0].mxu0
      %2794 = vmatprep.mubr.bf16.mxu0 0
      %2795 = vmatmul.mubr.bf16.gmra.mrb[0].mxu0 %v706
      %v2796 = vpop.f32.mrb[0].mxu0
      %v2797 = vadd.f32 0.0, %v2796
      %v2798 = vpop.f32.mrb[0].mxu0
      %v2799 = vpop.f32.mrb[0].mxu0
      %v2800 = vadd.f32 0.0, %v2799
      %v2801 = vpop.f32.mrb[0].mxu0
      %2802 = vmatprep.mubr.bf16.mxu0 0
      %2803 = vmatmul.mubr.bf16.gmra.mrb[0].mxu0 %v709
      %v2804 = vpop.f32.mrb[0].mxu0
      %v2805 = vadd.f32 0.0, %v2804
      %v2806 = vpop.f32.mrb[0].mxu0
      %v2807 = vpop.f32.mrb[0].mxu0
      %v2808 = vadd.f32 0.0, %v2807
      %v2809 = vpop.f32.mrb[0].mxu0
      %2810 = vmatprep.mubr.bf16.mxu0 0
      %2811 = vmatmul.mubr.bf16.gmra.mrb[0].mxu0 %v712
      %v2812 = vpop.f32.mrb[0].mxu0
      %v2813 = vadd.f32 0.0, %v2812
      %v2814 = vpop.f32.mrb[0].mxu0
      %v2815 = vpop.f32.mrb[0].mxu0
      %v2816 = vadd.f32 0.0, %v2815
      %v2817 = vpop.f32.mrb[0].mxu0
      %2818 = vmatprep.mubr.bf16.mxu0 0
      %2819 = vmatmul.mubr.bf16.gmra.mrb[0].mxu0 %v715
      %v2820 = vpop.f32.mrb[0].mxu0
      %v2821 = vadd.f32 0.0, %v2820
      %v2822 = vpop.f32.mrb[0].mxu0
      %v2823 = vpop.f32.mrb[0].mxu0
      %v2824 = vadd.f32 0.0, %v2823
      %v2825 = vpop.f32.mrb[0].mxu0
      %2826 = vmatprep.mubr.bf16.mxu0 0
      %2827 = vmatmul.mubr.bf16.gmra.mrb[0].mxu0 %v718
      %v2828 = vpop.f32.mrb[0].mxu0
      %v2829 = vadd.f32 0.0, %v2828
      %v2830 = vpop.f32.mrb[0].mxu0
      %v2831 = vpop.f32.mrb[0].mxu0
      %v2832 = vadd.f32 0.0, %v2831
      %v2833 = vpop.f32.mrb[0].mxu0
      %2834 = vmatprep.mubr.bf16.mxu0 0
      %2835 = vmatmul.mubr.bf16.gmra.mrb[0].mxu0 %v721
      %v2836 = vpop.f32.mrb[0].mxu0
      %v2837 = vadd.f32 0.0, %v2836
      %v2838 = vpop.f32.mrb[0].mxu0
      %v2839 = vpop.f32.mrb[0].mxu0
      %v2840 = vadd.f32 0.0, %v2839
      %v2841 = vpop.f32.mrb[0].mxu0
      %2842 = vmatprep.mubr.bf16.mxu0 0
      %2843 = vmatmul.mubr.bf16.gmra.mrb[0].mxu0 %v724
      %v2844 = vpop.f32.mrb[0].mxu0
      %v2845 = vadd.f32 0.0, %v2844
      %v2846 = vpop.f32.mrb[0].mxu0
      %v2847 = vpop.f32.mrb[0].mxu0
      %v2848 = vadd.f32 0.0, %v2847
      %v2849 = vpop.f32.mrb[0].mxu0
      %2850 = vmatprep.mubr.bf16.mxu0 0
      %2851 = vmatmul.mubr.bf16.gmra.mrb[0].mxu0 %v727
      %v2852 = vpop.f32.mrb[0].mxu0
      %v2853 = vadd.f32 0.0, %v2852
      %v2854 = vpop.f32.mrb[0].mxu0
      %v2855 = vpop.f32.mrb[0].mxu0
      %v2856 = vadd.f32 0.0, %v2855
      %v2857 = vpop.f32.mrb[0].mxu0
      %2858 = vmatprep.mubr.bf16.mxu0 0
      %2859 = vmatmul.mubr.bf16.gmra.mrb[0].mxu0 %v730
      %v2860 = vpop.f32.mrb[0].mxu0
      %v2861 = vadd.f32 0.0, %v2860
      %v2862 = vpop.f32.mrb[0].mxu0
      %v2863 = vpop.f32.mrb[0].mxu0
      %v2864 = vadd.f32 0.0, %v2863
      %v2865 = vpop.f32.mrb[0].mxu0
      %2866 = vmatprep.mubr.bf16.mxu0 0
      %2867 = vmatmul.mubr.bf16.gmra.mrb[0].mxu0 %v733
      %v2868 = vpop.f32.mrb[0].mxu0
      %v2869 = vadd.f32 0.0, %v2868
      %v2870 = vpop.f32.mrb[0].mxu0
      %v2871 = vpop.f32.mrb[0].mxu0
      %v2872 = vadd.f32 0.0, %v2871
      %v2873 = vpop.f32.mrb[0].mxu0
      %2874 = vmatprep.mubr.bf16.mxu0 0
      %2875 = vmatmul.mubr.bf16.gmra.mrb[0].mxu0 %v736
      %v2876 = vpop.f32.mrb[0].mxu0
      %v2877 = vadd.f32 0.0, %v2876
      %v2878 = vpop.f32.mrb[0].mxu0
      %v2879 = vpop.f32.mrb[0].mxu0
      %v2880 = vadd.f32 0.0, %v2879
      %v2881 = vpop.f32.mrb[0].mxu0
      %2882 = vmatprep.mubr.bf16.mxu0 0
      %2883 = vmatmul.mubr.bf16.gmra.mrb[0].mxu0 %v739
      %v2884 = vpop.f32.mrb[0].mxu0
      %v2885 = vadd.f32 0.0, %v2884
      %v2886 = vpop.f32.mrb[0].mxu0
      %v2887 = vpop.f32.mrb[0].mxu0
      %v2888 = vadd.f32 0.0, %v2887
      %v2889 = vpop.f32.mrb[0].mxu0
      %2890 = vmatprep.mubr.bf16.mxu0 0
      %2891 = vmatmul.mubr.bf16.gmra.mrb[0].mxu0 %v742
      %v2892 = vpop.f32.mrb[0].mxu0
      %v2893 = vadd.f32 0.0, %v2892
      %v2894 = vpop.f32.mrb[0].mxu0
      %v2895 = vpop.f32.mrb[0].mxu0
      %v2896 = vadd.f32 0.0, %v2895
      %v2897 = vpop.f32.mrb[0].mxu0
      %2898 = vmatprep.mubr.bf16.mxu0 0
      %2899 = vmatmul.mubr.bf16.gmra.mrb[0].mxu0 %v2017
      %v2900 = vpop.f32.mrb[0].mxu0
      %v2901 = vadd.f32 0.0, %v2900
      %v2902 = vpop.f32.mrb[0].mxu0
      %v2903 = vpop.f32.mrb[0].mxu0
      %v2904 = vadd.f32 0.0, %v2903
      %v2905 = vpop.f32.mrb[0].mxu0
      %2906 = vmatprep.mubr.bf16.mxu0 0
      %2907 = vmatmul.mubr.bf16.gmra.mrb[0].mxu0 %v2749
      %v2908 = vpop.f32.mrb[0].mxu0
      %v2909 = vadd.f32 0.0, %v2908
      %v2910 = vpop.f32.mrb[0].mxu0
      %v2911 = vpop.f32.mrb[0].mxu0
      %v2912 = vadd.f32 0.0, %v2911
      %v2913 = vpop.f32.mrb[0].mxu0
      %2914 = vdwg.mxu0
      %v2915 = vadd.f32 %v2671, %v2789
      %v2916 = vadd.f32 %v2672, %v2792
      %v2917 = vadd.f32 %v2673, %v2797
      %v2918 = vadd.f32 %v2674, %v2800
      %v2919 = vadd.f32 %v2675, %v2805
      %v2920 = vadd.f32 %v2676, %v2808
      %v2921 = vadd.f32 %v2677, %v2813
      %v2922 = vadd.f32 %v2678, %v2816
      %v2923 = vadd.f32 %v2679, %v2821
      %v2924 = vadd.f32 %v2680, %v2824
      %v2925 = vadd.f32 %v2681, %v2829
      %v2926 = vadd.f32 %v2682, %v2832
      %v2927 = vadd.f32 %v2683, %v2837
      %v2928 = vadd.f32 %v2684, %v2840
      %v2929 = vadd.f32 %v2685, %v2845
      %v2930 = vadd.f32 %v2686, %v2848
      %v2931 = vadd.f32 %v2687, %v2853
      %v2932 = vadd.f32 %v2688, %v2856
      %v2933 = vadd.f32 %v2689, %v2861
      %v2934 = vadd.f32 %v2690, %v2864
      %v2935 = vadd.f32 %v2691, %v2869
      %v2936 = vadd.f32 %v2692, %v2872
      %v2937 = vadd.f32 %v2693, %v2877
      %v2938 = vadd.f32 %v2694, %v2880
      %v2939 = vadd.f32 %v2695, %v2885
      %v2940 = vadd.f32 %v2696, %v2888
      %v2941 = vadd.f32 %v2697, %v2893
      %v2942 = vadd.f32 %v2698, %v2896
      %v2943 = vadd.f32 %v2699, %v2901
      %v2944 = vadd.f32 %v2700, %v2904
      %v2945 = vadd.f32 %v2701, %v2909
      %v2946 = vadd.f32 %v2702, %v2912
      %v2950 = vrot.slane %v374, 1
      %v2951 = vrot.slane %v375, 1
      %v2952 = vsel %vm1153, %v2950, %v2951
      %v2953 = vrot.slane %v376, 1
      %v2954 = vsel %vm1153, %v2951, %v2953
      %v2957 = vadd.f32 %v2703, %v1166
      %v2958 = vadd.f32 %v2704, %v1168
      %v2959 = vadd.f32 %v2705, %v1171
      %v2960 = vadd.f32 %v2706, %v1173
      %v2961 = vadd.f32 %v2707, %v1176
      %v2962 = vadd.f32 %v2708, %v1178
      %v2963 = vadd.f32 %v2709, %v1181
      %v2964 = vadd.f32 %v2710, %v1183
      %v2965 = vadd.f32 %v2711, %v1186
      %v2966 = vadd.f32 %v2712, %v1188
      %v2967 = vadd.f32 %v2713, %v1191
      %v2968 = vadd.f32 %v2714, %v1193
      %v2969 = vadd.f32 %v2715, %v1196
      %v2970 = vadd.f32 %v2716, %v1198
      %v2971 = vadd.f32 %v2717, %v1201
      %v2972 = vadd.f32 %v2718, %v1203
      %v2973 = vadd.f32 %v2719, %v1206
      %v2974 = vadd.f32 %v2720, %v1208
      %v2975 = vadd.f32 %v2721, %v1211
      %v2976 = vadd.f32 %v2722, %v1213
      %v2977 = vadd.f32 %v2723, %v1216
      %v2978 = vadd.f32 %v2724, %v1218
      %v2979 = vadd.f32 %v2725, %v1221
      %v2980 = vadd.f32 %v2726, %v1223
      %v2981 = vadd.f32 %v2727, %v1226
      %v2982 = vadd.f32 %v2728, %v1228
      %v2983 = vadd.f32 %v2729, %v1231
      %v2984 = vadd.f32 %v2730, %v1233
      %v2985 = vadd.f32 %v2731, %v2220
      %v2986 = vadd.f32 %v2732, %v2222
      %v2987 = vadd.f32 %v2733, %v2952
      %v2988 = vadd.f32 %v2734, %v2954
      %v2991 = vrot.slane %v465, 1
      %v2992 = vrot.slane %v466, 1
      %v2993 = vsel %vm1330, %v2991, %v2992
      %s2994 = scalar_lea.vmem %s2, 16
      %v2995 = vld [vmem:[%s2994] sm:$0x3]
      %v2997 = vsel %vm695, %v2993, 0
      %v3000 = vsel %vm744, %v2995, 0
      %3002 = vmatprep.subr.bf16.mxu0 0
      %3003 = vmatpush1.bf16.msra.mxu0 %v3000
      %3004 = vmatprep.subr.bf16.mxu0 0
      %3005 = vmatpush1.bf16.msra.mxu0 0
      %3006 = vmatprep.subr.bf16.mxu0 0
      %3007 = vmatpush1.bf16.msra.mxu0 0
      %3008 = vmatprep.subr.bf16.mxu0 0
      %3009 = vmatpush1.bf16.msra.mxu0 0
      %3010 = vmatprep.subr.bf16.mxu0 0
      %3011 = vmatpush1.bf16.msra.mxu0 0
      %3012 = vmatprep.subr.bf16.mxu0 0
      %3013 = vmatpush1.bf16.msra.mxu0 0
      %3014 = vmatprep.subr.bf16.mxu0 0
      %3015 = vmatpush1.bf16.msra.mxu0 0
      %3016 = vmatprep.subr.bf16.mxu0 0
      %3017 = vmatpush1.bf16.msra.mxu0 0
      %3018 = vmatprep.subr.bf16.mxu0 0
      %3019 = vmatpush1.bf16.msra.mxu0 0
      %3020 = vmatprep.subr.bf16.mxu0 0
      %3021 = vmatpush1.bf16.msra.mxu0 0
      %3022 = vmatprep.subr.bf16.mxu0 0
      %3023 = vmatpush1.bf16.msra.mxu0 0
      %3024 = vmatprep.subr.bf16.mxu0 0
      %3025 = vmatpush1.bf16.msra.mxu0 0
      %3026 = vmatprep.subr.bf16.mxu0 0
      %3027 = vmatpush1.bf16.msra.mxu0 0
      %3028 = vmatprep.subr.bf16.mxu0 0
      %3029 = vmatpush1.bf16.msra.mxu0 0
      %3030 = vmatprep.subr.bf16.mxu0 0
      %3031 = vmatpush1.bf16.msra.mxu0 0
      %3032 = vmatprep.subr.bf16.mxu0 0
      %3033 = vmatpush1.bf16.msra.mxu0 0
      %3034 = vmatprep.mubr.bf16.mxu0 0
      %3035 = vmatmul.mubr.bf16.gmra.mrb[0].mxu0 %v1388
      %v3036 = vpop.f32.mrb[0].mxu0
      %v3037 = vadd.f32 0.0, %v3036
      %v3038 = vpop.f32.mrb[0].mxu0
      %v3039 = vpop.f32.mrb[0].mxu0
      %v3040 = vadd.f32 0.0, %v3039
      %v3041 = vpop.f32.mrb[0].mxu0
      %3042 = vmatprep.mubr.bf16.mxu0 0
      %3043 = vmatmul.mubr.bf16.gmra.mrb[0].mxu0 %v1391
      %v3044 = vpop.f32.mrb[0].mxu0
      %v3045 = vadd.f32 0.0, %v3044
      %v3046 = vpop.f32.mrb[0].mxu0
      %v3047 = vpop.f32.mrb[0].mxu0
      %v3048 = vadd.f32 0.0, %v3047
      %v3049 = vpop.f32.mrb[0].mxu0
      %3050 = vmatprep.mubr.bf16.mxu0 0
      %3051 = vmatmul.mubr.bf16.gmra.mrb[0].mxu0 %v1394
      %v3052 = vpop.f32.mrb[0].mxu0
      %v3053 = vadd.f32 0.0, %v3052
      %v3054 = vpop.f32.mrb[0].mxu0
      %v3055 = vpop.f32.mrb[0].mxu0
      %v3056 = vadd.f32 0.0, %v3055
      %v3057 = vpop.f32.mrb[0].mxu0
      %3058 = vmatprep.mubr.bf16.mxu0 0
      %3059 = vmatmul.mubr.bf16.gmra.mrb[0].mxu0 %v1397
      %v3060 = vpop.f32.mrb[0].mxu0
      %v3061 = vadd.f32 0.0, %v3060
      %v3062 = vpop.f32.mrb[0].mxu0
      %v3063 = vpop.f32.mrb[0].mxu0
      %v3064 = vadd.f32 0.0, %v3063
      %v3065 = vpop.f32.mrb[0].mxu0
      %3066 = vmatprep.mubr.bf16.mxu0 0
      %3067 = vmatmul.mubr.bf16.gmra.mrb[0].mxu0 %v1400
      %v3068 = vpop.f32.mrb[0].mxu0
      %v3069 = vadd.f32 0.0, %v3068
      %v3070 = vpop.f32.mrb[0].mxu0
      %v3071 = vpop.f32.mrb[0].mxu0
      %v3072 = vadd.f32 0.0, %v3071
      %v3073 = vpop.f32.mrb[0].mxu0
      %3074 = vmatprep.mubr.bf16.mxu0 0
      %3075 = vmatmul.mubr.bf16.gmra.mrb[0].mxu0 %v1403
      %v3076 = vpop.f32.mrb[0].mxu0
      %v3077 = vadd.f32 0.0, %v3076
      %v3078 = vpop.f32.mrb[0].mxu0
      %v3079 = vpop.f32.mrb[0].mxu0
      %v3080 = vadd.f32 0.0, %v3079
      %v3081 = vpop.f32.mrb[0].mxu0
      %3082 = vmatprep.mubr.bf16.mxu0 0
      %3083 = vmatmul.mubr.bf16.gmra.mrb[0].mxu0 %v1406
      %v3084 = vpop.f32.mrb[0].mxu0
      %v3085 = vadd.f32 0.0, %v3084
      %v3086 = vpop.f32.mrb[0].mxu0
      %v3087 = vpop.f32.mrb[0].mxu0
      %v3088 = vadd.f32 0.0, %v3087
      %v3089 = vpop.f32.mrb[0].mxu0
      %3090 = vmatprep.mubr.bf16.mxu0 0
      %3091 = vmatmul.mubr.bf16.gmra.mrb[0].mxu0 %v1409
      %v3092 = vpop.f32.mrb[0].mxu0
      %v3093 = vadd.f32 0.0, %v3092
      %v3094 = vpop.f32.mrb[0].mxu0
      %v3095 = vpop.f32.mrb[0].mxu0
      %v3096 = vadd.f32 0.0, %v3095
      %v3097 = vpop.f32.mrb[0].mxu0
      %3098 = vmatprep.mubr.bf16.mxu0 0
      %3099 = vmatmul.mubr.bf16.gmra.mrb[0].mxu0 %v1412
      %v3100 = vpop.f32.mrb[0].mxu0
      %v3101 = vadd.f32 0.0, %v3100
      %v3102 = vpop.f32.mrb[0].mxu0
      %v3103 = vpop.f32.mrb[0].mxu0
      %v3104 = vadd.f32 0.0, %v3103
      %v3105 = vpop.f32.mrb[0].mxu0
      %3106 = vmatprep.mubr.bf16.mxu0 0
      %3107 = vmatmul.mubr.bf16.gmra.mrb[0].mxu0 %v1415
      %v3108 = vpop.f32.mrb[0].mxu0
      %v3109 = vadd.f32 0.0, %v3108
      %v3110 = vpop.f32.mrb[0].mxu0
      %v3111 = vpop.f32.mrb[0].mxu0
      %v3112 = vadd.f32 0.0, %v3111
      %v3113 = vpop.f32.mrb[0].mxu0
      %3114 = vmatprep.mubr.bf16.mxu0 0
      %3115 = vmatmul.mubr.bf16.gmra.mrb[0].mxu0 %v1418
      %v3116 = vpop.f32.mrb[0].mxu0
      %v3117 = vadd.f32 0.0, %v3116
      %v3118 = vpop.f32.mrb[0].mxu0
      %v3119 = vpop.f32.mrb[0].mxu0
      %v3120 = vadd.f32 0.0, %v3119
      %v3121 = vpop.f32.mrb[0].mxu0
      %3122 = vmatprep.mubr.bf16.mxu0 0
      %3123 = vmatmul.mubr.bf16.gmra.mrb[0].mxu0 %v1421
      %v3124 = vpop.f32.mrb[0].mxu0
      %v3125 = vadd.f32 0.0, %v3124
      %v3126 = vpop.f32.mrb[0].mxu0
      %v3127 = vpop.f32.mrb[0].mxu0
      %v3128 = vadd.f32 0.0, %v3127
      %v3129 = vpop.f32.mrb[0].mxu0
      %3130 = vmatprep.mubr.bf16.mxu0 0
      %3131 = vmatmul.mubr.bf16.gmra.mrb[0].mxu0 %v1424
      %v3132 = vpop.f32.mrb[0].mxu0
      %v3133 = vadd.f32 0.0, %v3132
      %v3134 = vpop.f32.mrb[0].mxu0
      %v3135 = vpop.f32.mrb[0].mxu0
      %v3136 = vadd.f32 0.0, %v3135
      %v3137 = vpop.f32.mrb[0].mxu0
      %3138 = vmatprep.mubr.bf16.mxu0 0
      %3139 = vmatmul.mubr.bf16.gmra.mrb[0].mxu0 %v1427
      %v3140 = vpop.f32.mrb[0].mxu0
      %v3141 = vadd.f32 0.0, %v3140
      %v3142 = vpop.f32.mrb[0].mxu0
      %v3143 = vpop.f32.mrb[0].mxu0
      %v3144 = vadd.f32 0.0, %v3143
      %v3145 = vpop.f32.mrb[0].mxu0
      %3146 = vmatprep.mubr.bf16.mxu0 0
      %3147 = vmatmul.mubr.bf16.gmra.mrb[0].mxu0 %v2265
      %v3148 = vpop.f32.mrb[0].mxu0
      %v3149 = vadd.f32 0.0, %v3148
      %v3150 = vpop.f32.mrb[0].mxu0
      %v3151 = vpop.f32.mrb[0].mxu0
      %v3152 = vadd.f32 0.0, %v3151
      %v3153 = vpop.f32.mrb[0].mxu0
      %3154 = vmatprep.mubr.bf16.mxu0 0
      %3155 = vmatmul.mubr.bf16.gmra.mrb[0].mxu0 %v2997
      %v3156 = vpop.f32.mrb[0].mxu0
      %v3157 = vadd.f32 0.0, %v3156
      %v3158 = vpop.f32.mrb[0].mxu0
      %v3159 = vpop.f32.mrb[0].mxu0
      %v3160 = vadd.f32 0.0, %v3159
      %v3161 = vpop.f32.mrb[0].mxu0
      %3162 = vdwg.mxu0
      %v3163 = vadd.f32 %v2915, %v3037
      %v3164 = vadd.f32 %v2916, %v3040
      %v3165 = vadd.f32 %v2917, %v3045
      %v3166 = vadd.f32 %v2918, %v3048
      %v3167 = vadd.f32 %v2919, %v3053
      %v3168 = vadd.f32 %v2920, %v3056
      %v3169 = vadd.f32 %v2921, %v3061
      %v3170 = vadd.f32 %v2922, %v3064
      %v3171 = vadd.f32 %v2923, %v3069
      %v3172 = vadd.f32 %v2924, %v3072
      %v3173 = vadd.f32 %v2925, %v3077
      %v3174 = vadd.f32 %v2926, %v3080
      %v3175 = vadd.f32 %v2927, %v3085
      %v3176 = vadd.f32 %v2928, %v3088
      %v3177 = vadd.f32 %v2929, %v3093
      %v3178 = vadd.f32 %v2930, %v3096
      %v3179 = vadd.f32 %v2931, %v3101
      %v3180 = vadd.f32 %v2932, %v3104
      %v3181 = vadd.f32 %v2933, %v3109
      %v3182 = vadd.f32 %v2934, %v3112
      %v3183 = vadd.f32 %v2935, %v3117
      %v3184 = vadd.f32 %v2936, %v3120
      %v3185 = vadd.f32 %v2937, %v3125
      %v3186 = vadd.f32 %v2938, %v3128
      %v3187 = vadd.f32 %v2939, %v3133
      %v3188 = vadd.f32 %v2940, %v3136
      %v3189 = vadd.f32 %v2941, %v3141
      %v3190 = vadd.f32 %v2942, %v3144
      %v3191 = vadd.f32 %v2943, %v3149
      %v3192 = vadd.f32 %v2944, %v3152
      %v3193 = vadd.f32 %v2945, %v3157
      %v3194 = vadd.f32 %v2946, %v3160
      %v3195 = vrot.slane %v374, 2
      %v3196 = vrot.slane %v375, 2
      %v3197 = vsel %vm1625, %v3195, %v3196
      %v3198 = vrot.slane %v376, 2
      %v3199 = vsel %vm1625, %v3196, %v3198
      %v3202 = vadd.f32 %v2957, %v1638
      %v3203 = vadd.f32 %v2958, %v1640
      %v3204 = vadd.f32 %v2959, %v1643
      %v3205 = vadd.f32 %v2960, %v1645
      %v3206 = vadd.f32 %v2961, %v1648
      %v3207 = vadd.f32 %v2962, %v1650
      %v3208 = vadd.f32 %v2963, %v1653
      %v3209 = vadd.f32 %v2964, %v1655
      %v3210 = vadd.f32 %v2965, %v1658
      %v3211 = vadd.f32 %v2966, %v1660
      %v3212 = vadd.f32 %v2967, %v1663
      %v3213 = vadd.f32 %v2968, %v1665
      %v3214 = vadd.f32 %v2969, %v1668
      %v3215 = vadd.f32 %v2970, %v1670
      %v3216 = vadd.f32 %v2971, %v1673
      %v3217 = vadd.f32 %v2972, %v1675
      %v3218 = vadd.f32 %v2973, %v1678
      %v3219 = vadd.f32 %v2974, %v1680
      %v3220 = vadd.f32 %v2975, %v1683
      %v3221 = vadd.f32 %v2976, %v1685
      %v3222 = vadd.f32 %v2977, %v1688
      %v3223 = vadd.f32 %v2978, %v1690
      %v3224 = vadd.f32 %v2979, %v1693
      %v3225 = vadd.f32 %v2980, %v1695
      %v3226 = vadd.f32 %v2981, %v1698
      %v3227 = vadd.f32 %v2982, %v1700
      %v3228 = vadd.f32 %v2983, %v1703
      %v3229 = vadd.f32 %v2984, %v1705
      %v3230 = vadd.f32 %v2985, %v2465
      %v3231 = vadd.f32 %v2986, %v2467
      %v3232 = vadd.f32 %v2987, %v3197
      %v3233 = vadd.f32 %v2988, %v3199
      %v3234 = vsel %vm695, %v3202, 0.0
      %3235 = vadd.xlane.f32.xlu0 %v3234
      %v3236 = vpop.xlane.xlu0 %3235
      %v3237 = vsel %vm695, %v3203, 0.0
      %3238 = vadd.xlane.f32.xlu0 %v3237
      %v3239 = vpop.xlane.xlu0 %3238
      %v3240 = vsel %vm695, %v3204, 0.0
      %3241 = vadd.xlane.f32.xlu0 %v3240
      %v3242 = vpop.xlane.xlu0 %3241
      %v3243 = vsel %vm695, %v3205, 0.0
      %3244 = vadd.xlane.f32.xlu0 %v3243
      %v3245 = vpop.xlane.xlu0 %3244
      %v3246 = vsel %vm695, %v3206, 0.0
      %3247 = vadd.xlane.f32.xlu0 %v3246
      %v3248 = vpop.xlane.xlu0 %3247
      %v3249 = vsel %vm695, %v3207, 0.0
      %3250 = vadd.xlane.f32.xlu0 %v3249
      %v3251 = vpop.xlane.xlu0 %3250
      %v3252 = vsel %vm695, %v3208, 0.0
      %3253 = vadd.xlane.f32.xlu0 %v3252
      %v3254 = vpop.xlane.xlu0 %3253
      %v3255 = vsel %vm695, %v3209, 0.0
      %3256 = vadd.xlane.f32.xlu0 %v3255
      %v3257 = vpop.xlane.xlu0 %3256
      %v3258 = vsel %vm695, %v3210, 0.0
      %3259 = vadd.xlane.f32.xlu0 %v3258
      %v3260 = vpop.xlane.xlu0 %3259
      %v3261 = vsel %vm695, %v3211, 0.0
      %3262 = vadd.xlane.f32.xlu0 %v3261
      %v3263 = vpop.xlane.xlu0 %3262
      %v3264 = vsel %vm695, %v3212, 0.0
      %3265 = vadd.xlane.f32.xlu0 %v3264
      %v3266 = vpop.xlane.xlu0 %3265
      %v3267 = vsel %vm695, %v3213, 0.0
      %3268 = vadd.xlane.f32.xlu0 %v3267
      %v3269 = vpop.xlane.xlu0 %3268
      %v3270 = vsel %vm695, %v3214, 0.0
      %3271 = vadd.xlane.f32.xlu0 %v3270
      %v3272 = vpop.xlane.xlu0 %3271
      %v3273 = vsel %vm695, %v3215, 0.0
      %3274 = vadd.xlane.f32.xlu0 %v3273
      %v3275 = vpop.xlane.xlu0 %3274
      %v3276 = vsel %vm695, %v3216, 0.0
      %3277 = vadd.xlane.f32.xlu0 %v3276
      %v3278 = vpop.xlane.xlu0 %3277
      %v3279 = vsel %vm695, %v3217, 0.0
      %3280 = vadd.xlane.f32.xlu0 %v3279
      %v3281 = vpop.xlane.xlu0 %3280
      %v3282 = vsel %vm695, %v3218, 0.0
      %3283 = vadd.xlane.f32.xlu0 %v3282
      %v3284 = vpop.xlane.xlu0 %3283
      %v3285 = vsel %vm695, %v3219, 0.0
      %3286 = vadd.xlane.f32.xlu0 %v3285
      %v3287 = vpop.xlane.xlu0 %3286
      %v3288 = vsel %vm695, %v3220, 0.0
      %3289 = vadd.xlane.f32.xlu0 %v3288
      %v3290 = vpop.xlane.xlu0 %3289
      %v3291 = vsel %vm695, %v3221, 0.0
      %3292 = vadd.xlane.f32.xlu0 %v3291
      %v3293 = vpop.xlane.xlu0 %3292
      %v3294 = vsel %vm695, %v3222, 0.0
      %3295 = vadd.xlane.f32.xlu0 %v3294
      %v3296 = vpop.xlane.xlu0 %3295
      %v3297 = vsel %vm695, %v3223, 0.0
      %3298 = vadd.xlane.f32.xlu0 %v3297
      %v3299 = vpop.xlane.xlu0 %3298
      %v3300 = vsel %vm695, %v3224, 0.0
      %3301 = vadd.xlane.f32.xlu0 %v3300
      %v3302 = vpop.xlane.xlu0 %3301
      %v3303 = vsel %vm695, %v3225, 0.0
      %3304 = vadd.xlane.f32.xlu0 %v3303
      %v3305 = vpop.xlane.xlu0 %3304
      %v3306 = vsel %vm695, %v3226, 0.0
      %3307 = vadd.xlane.f32.xlu0 %v3306
      %v3308 = vpop.xlane.xlu0 %3307
      %v3309 = vsel %vm695, %v3227, 0.0
      %3310 = vadd.xlane.f32.xlu0 %v3309
      %v3311 = vpop.xlane.xlu0 %3310
      %v3312 = vsel %vm695, %v3228, 0.0
      %3313 = vadd.xlane.f32.xlu0 %v3312
      %v3314 = vpop.xlane.xlu0 %3313
      %v3315 = vsel %vm695, %v3229, 0.0
      %3316 = vadd.xlane.f32.xlu0 %v3315
      %v3317 = vpop.xlane.xlu0 %3316
      %v3318 = vsel %vm695, %v3230, 0.0
      %3319 = vadd.xlane.f32.xlu0 %v3318
      %v3320 = vpop.xlane.xlu0 %3319
      %v3321 = vsel %vm695, %v3231, 0.0
      %3322 = vadd.xlane.f32.xlu0 %v3321
      %v3323 = vpop.xlane.xlu0 %3322
      %v3324 = vsel %vm695, %v3232, 0.0
      %3325 = vadd.xlane.f32.xlu0 %v3324
      %v3326 = vpop.xlane.xlu0 %3325
      %v3327 = vsel %vm695, %v3233, 0.0
      %3328 = vadd.xlane.f32.xlu0 %v3327
      %v3329 = vpop.xlane.xlu0 %3328
      %v3330 = vmax.f32 %v3236, 0.0
      %v3331 = vmax.f32 %v3239, 0.0
      %v3332 = vmax.f32 %v3242, 0.0
      %v3333 = vmax.f32 %v3245, 0.0
      %v3334 = vmax.f32 %v3248, 0.0
      %v3335 = vmax.f32 %v3251, 0.0
      %v3336 = vmax.f32 %v3254, 0.0
      %v3337 = vmax.f32 %v3257, 0.0
      %v3338 = vmax.f32 %v3260, 0.0
      %v3339 = vmax.f32 %v3263, 0.0
      %v3340 = vmax.f32 %v3266, 0.0
      %v3341 = vmax.f32 %v3269, 0.0
      %v3342 = vmax.f32 %v3272, 0.0
      %v3343 = vmax.f32 %v3275, 0.0
      %v3344 = vmax.f32 %v3278, 0.0
      %v3345 = vmax.f32 %v3281, 0.0
      %v3346 = vmax.f32 %v3284, 0.0
      %v3347 = vmax.f32 %v3287, 0.0
      %v3348 = vmax.f32 %v3290, 0.0
      %v3349 = vmax.f32 %v3293, 0.0
      %v3350 = vmax.f32 %v3296, 0.0
      %v3351 = vmax.f32 %v3299, 0.0
      %v3352 = vmax.f32 %v3302, 0.0
      %v3353 = vmax.f32 %v3305, 0.0
      %v3354 = vmax.f32 %v3308, 0.0
      %v3355 = vmax.f32 %v3311, 0.0
      %v3356 = vmax.f32 %v3314, 0.0
      %v3357 = vmax.f32 %v3317, 0.0
      %v3358 = vmax.f32 %v3320, 0.0
      %v3359 = vmax.f32 %v3323, 0.0
      %v3360 = vmax.f32 %v3326, 0.0
      %v3361 = vmax.f32 %v3329, 0.0
      %v3362 = vmin.f32 %v3330, 1.0
      %v3363 = vmin.f32 %v3331, 1.0
      %v3364 = vmin.f32 %v3332, 1.0
      %v3365 = vmin.f32 %v3333, 1.0
      %v3366 = vmin.f32 %v3334, 1.0
      %v3367 = vmin.f32 %v3335, 1.0
      %v3368 = vmin.f32 %v3336, 1.0
      %v3369 = vmin.f32 %v3337, 1.0
      %v3370 = vmin.f32 %v3338, 1.0
      %v3371 = vmin.f32 %v3339, 1.0
      %v3372 = vmin.f32 %v3340, 1.0
      %v3373 = vmin.f32 %v3341, 1.0
      %v3374 = vmin.f32 %v3342, 1.0
      %v3375 = vmin.f32 %v3343, 1.0
      %v3376 = vmin.f32 %v3344, 1.0
      %v3377 = vmin.f32 %v3345, 1.0
      %v3378 = vmin.f32 %v3346, 1.0
      %v3379 = vmin.f32 %v3347, 1.0
      %v3380 = vmin.f32 %v3348, 1.0
      %v3381 = vmin.f32 %v3349, 1.0
      %v3382 = vmin.f32 %v3350, 1.0
      %v3383 = vmin.f32 %v3351, 1.0
      %v3384 = vmin.f32 %v3352, 1.0
      %v3385 = vmin.f32 %v3353, 1.0
      %v3386 = vmin.f32 %v3354, 1.0
      %v3387 = vmin.f32 %v3355, 1.0
      %v3388 = vmin.f32 %v3356, 1.0
      %v3389 = vmin.f32 %v3357, 1.0
      %v3390 = vmin.f32 %v3358, 1.0
      %v3391 = vmin.f32 %v3359, 1.0
      %v3392 = vmin.f32 %v3360, 1.0
      %v3393 = vmin.f32 %v3361, 1.0
      %v3394 = vadd.f32 %v3236, 1e-08
      %v3395 = vadd.f32 %v3239, 1e-08
      %v3396 = vadd.f32 %v3242, 1e-08
      %v3397 = vadd.f32 %v3245, 1e-08
      %v3398 = vadd.f32 %v3248, 1e-08
      %v3399 = vadd.f32 %v3251, 1e-08
      %v3400 = vadd.f32 %v3254, 1e-08
      %v3401 = vadd.f32 %v3257, 1e-08
      %v3402 = vadd.f32 %v3260, 1e-08
      %v3403 = vadd.f32 %v3263, 1e-08
      %v3404 = vadd.f32 %v3266, 1e-08
      %v3405 = vadd.f32 %v3269, 1e-08
      %v3406 = vadd.f32 %v3272, 1e-08
      %v3407 = vadd.f32 %v3275, 1e-08
      %v3408 = vadd.f32 %v3278, 1e-08
      %v3409 = vadd.f32 %v3281, 1e-08
      %v3410 = vadd.f32 %v3284, 1e-08
      %v3411 = vadd.f32 %v3287, 1e-08
      %v3412 = vadd.f32 %v3290, 1e-08
      %v3413 = vadd.f32 %v3293, 1e-08
      %v3414 = vadd.f32 %v3296, 1e-08
      %v3415 = vadd.f32 %v3299, 1e-08
      %v3416 = vadd.f32 %v3302, 1e-08
      %v3417 = vadd.f32 %v3305, 1e-08
      %v3418 = vadd.f32 %v3308, 1e-08
      %v3419 = vadd.f32 %v3311, 1e-08
      %v3420 = vadd.f32 %v3314, 1e-08
      %v3421 = vadd.f32 %v3317, 1e-08
      %v3422 = vadd.f32 %v3320, 1e-08
      %v3423 = vadd.f32 %v3323, 1e-08
      %v3424 = vadd.f32 %v3326, 1e-08
      %v3425 = vadd.f32 %v3329, 1e-08
      %v3426 = vrcp.pop %v3394
      %v3427 = vrcp.pop %v3395
      %v3428 = vrcp.pop %v3396
      %v3429 = vrcp.pop %v3397
      %v3430 = vrcp.pop %v3398
      %v3431 = vrcp.pop %v3399
      %v3432 = vrcp.pop %v3400
      %v3433 = vrcp.pop %v3401
      %v3434 = vrcp.pop %v3402
      %v3435 = vrcp.pop %v3403
      %v3436 = vrcp.pop %v3404
      %v3437 = vrcp.pop %v3405
      %v3438 = vrcp.pop %v3406
      %v3439 = vrcp.pop %v3407
      %v3440 = vrcp.pop %v3408
      %v3441 = vrcp.pop %v3409
      %v3442 = vrcp.pop %v3410
      %v3443 = vrcp.pop %v3411
      %v3444 = vrcp.pop %v3412
      %v3445 = vrcp.pop %v3413
      %v3446 = vrcp.pop %v3414
      %v3447 = vrcp.pop %v3415
      %v3448 = vrcp.pop %v3416
      %v3449 = vrcp.pop %v3417
      %v3450 = vrcp.pop %v3418
      %v3451 = vrcp.pop %v3419
      %v3452 = vrcp.pop %v3420
      %v3453 = vrcp.pop %v3421
      %v3454 = vrcp.pop %v3422
      %v3455 = vrcp.pop %v3423
      %v3456 = vrcp.pop %v3424
      %v3457 = vrcp.pop %v3425
      %v3458 = vmul.f32 %v3426, 36.0
      %v3459 = vmul.f32 %v3427, 36.0
      %v3460 = vmul.f32 %v3428, 36.0
      %v3461 = vmul.f32 %v3429, 36.0
      %v3462 = vmul.f32 %v3430, 36.0
      %v3463 = vmul.f32 %v3431, 36.0
      %v3464 = vmul.f32 %v3432, 36.0
      %v3465 = vmul.f32 %v3433, 36.0
      %v3466 = vmul.f32 %v3434, 36.0
      %v3467 = vmul.f32 %v3435, 36.0
      %v3468 = vmul.f32 %v3436, 36.0
      %v3469 = vmul.f32 %v3437, 36.0
      %v3470 = vmul.f32 %v3438, 36.0
      %v3471 = vmul.f32 %v3439, 36.0
      %v3472 = vmul.f32 %v3440, 36.0
      %v3473 = vmul.f32 %v3441, 36.0
      %v3474 = vmul.f32 %v3442, 36.0
      %v3475 = vmul.f32 %v3443, 36.0
      %v3476 = vmul.f32 %v3444, 36.0
      %v3477 = vmul.f32 %v3445, 36.0
      %v3478 = vmul.f32 %v3446, 36.0
      %v3479 = vmul.f32 %v3447, 36.0
      %v3480 = vmul.f32 %v3448, 36.0
      %v3481 = vmul.f32 %v3449, 36.0
      %v3482 = vmul.f32 %v3450, 36.0
      %v3483 = vmul.f32 %v3451, 36.0
      %v3484 = vmul.f32 %v3452, 36.0
      %v3485 = vmul.f32 %v3453, 36.0
      %v3486 = vmul.f32 %v3454, 36.0
      %v3487 = vmul.f32 %v3455, 36.0
      %v3488 = vmul.f32 %v3456, 36.0
      %v3489 = vmul.f32 %v3457, 36.0
      %v3490 = vmul.f32 %v3458, %v3362
      %v3491 = vmul.f32 %v3459, %v3363
      %v3492 = vmul.f32 %v3460, %v3364
      %v3493 = vmul.f32 %v3461, %v3365
      %v3494 = vmul.f32 %v3462, %v3366
      %v3495 = vmul.f32 %v3463, %v3367
      %v3496 = vmul.f32 %v3464, %v3368
      %v3497 = vmul.f32 %v3465, %v3369
      %v3498 = vmul.f32 %v3466, %v3370
      %v3499 = vmul.f32 %v3467, %v3371
      %v3500 = vmul.f32 %v3468, %v3372
      %v3501 = vmul.f32 %v3469, %v3373
      %v3502 = vmul.f32 %v3470, %v3374
      %v3503 = vmul.f32 %v3471, %v3375
      %v3504 = vmul.f32 %v3472, %v3376
      %v3505 = vmul.f32 %v3473, %v3377
      %v3506 = vmul.f32 %v3474, %v3378
      %v3507 = vmul.f32 %v3475, %v3379
      %v3508 = vmul.f32 %v3476, %v3380
      %v3509 = vmul.f32 %v3477, %v3381
      %v3510 = vmul.f32 %v3478, %v3382
      %v3511 = vmul.f32 %v3479, %v3383
      %v3512 = vmul.f32 %v3480, %v3384
      %v3513 = vmul.f32 %v3481, %v3385
      %v3514 = vmul.f32 %v3482, %v3386
      %v3515 = vmul.f32 %v3483, %v3387
      %v3516 = vmul.f32 %v3484, %v3388
      %v3517 = vmul.f32 %v3485, %v3389
      %v3518 = vmul.f32 %v3486, %v3390
      %v3519 = vmul.f32 %v3487, %v3391
      %v3520 = vmul.f32 %v3488, %v3392
      %v3521 = vmul.f32 %v3489, %v3393
      %v3522 = vmul.f32 %v3163, %v3490
      %v3523 = vmul.f32 %v3164, %v3491
      %v3524 = vmul.f32 %v3165, %v3492
      %v3525 = vmul.f32 %v3166, %v3493
      %v3526 = vmul.f32 %v3167, %v3494
      %v3527 = vmul.f32 %v3168, %v3495
      %v3528 = vmul.f32 %v3169, %v3496
      %v3529 = vmul.f32 %v3170, %v3497
      %v3530 = vmul.f32 %v3171, %v3498
      %v3531 = vmul.f32 %v3172, %v3499
      %v3532 = vmul.f32 %v3173, %v3500
      %v3533 = vmul.f32 %v3174, %v3501
      %v3534 = vmul.f32 %v3175, %v3502
      %v3535 = vmul.f32 %v3176, %v3503
      %v3536 = vmul.f32 %v3177, %v3504
      %v3537 = vmul.f32 %v3178, %v3505
      %v3538 = vmul.f32 %v3179, %v3506
      %v3539 = vmul.f32 %v3180, %v3507
      %v3540 = vmul.f32 %v3181, %v3508
      %v3541 = vmul.f32 %v3182, %v3509
      %v3542 = vmul.f32 %v3183, %v3510
      %v3543 = vmul.f32 %v3184, %v3511
      %v3544 = vmul.f32 %v3185, %v3512
      %v3545 = vmul.f32 %v3186, %v3513
      %v3546 = vmul.f32 %v3187, %v3514
      %v3547 = vmul.f32 %v3188, %v3515
      %v3548 = vmul.f32 %v3189, %v3516
      %v3549 = vmul.f32 %v3190, %v3517
      %v3550 = vmul.f32 %v3191, %v3518
      %v3551 = vmul.f32 %v3192, %v3519
      %v3552 = vmul.f32 %v3193, %v3520
      %v3553 = vmul.f32 %v3194, %v3521
      %3554 = vst [vmem:[%s258] sm:$0xff] %v3522
      %3555 = vst [vmem:[%s258 + $0x8] sm:$0xff] %v3523
      %3556 = vst [vmem:[%s258 + $0x10] sm:$0xff] %v3524
      %3557 = vst [vmem:[%s258 + $0x18] sm:$0xff] %v3525
      %3558 = vst [vmem:[%s258 + $0x20] sm:$0xff] %v3526
      %3559 = vst [vmem:[%s258 + $0x28] sm:$0xff] %v3527
      %3560 = vst [vmem:[%s258 + $0x30] sm:$0xff] %v3528
      %3561 = vst [vmem:[%s258 + $0x38] sm:$0xff] %v3529
      %3562 = vst [vmem:[%s258 + $0x40] sm:$0xff] %v3530
      %3563 = vst [vmem:[%s258 + $0x48] sm:$0xff] %v3531
      %3564 = vst [vmem:[%s258 + $0x50] sm:$0xff] %v3532
      %3565 = vst [vmem:[%s258 + $0x58] sm:$0xff] %v3533
      %3566 = vst [vmem:[%s258 + $0x60] sm:$0xff] %v3534
      %3567 = vst [vmem:[%s258 + $0x68] sm:$0xff] %v3535
      %3568 = vst [vmem:[%s258 + $0x70] sm:$0xff] %v3536
      %3569 = vst [vmem:[%s258 + $0x78] sm:$0xff] %v3537
      %3570 = vst [vmem:[%s258 + $0x80] sm:$0xff] %v3538
      %3571 = vst [vmem:[%s258 + $0x88] sm:$0xff] %v3539
      %3572 = vst [vmem:[%s258 + $0x90] sm:$0xff] %v3540
      %3573 = vst [vmem:[%s258 + $0x98] sm:$0xff] %v3541
      %3574 = vst [vmem:[%s258 + $0xa0] sm:$0xff] %v3542
      %3575 = vst [vmem:[%s258 + $0xa8] sm:$0xff] %v3543
      %3576 = vst [vmem:[%s258 + $0xb0] sm:$0xff] %v3544
      %3577 = vst [vmem:[%s258 + $0xb8] sm:$0xff] %v3545
      %3578 = vst [vmem:[%s258 + $0xc0] sm:$0xff] %v3546
      %3579 = vst [vmem:[%s258 + $0xc8] sm:$0xff] %v3547
      %3580 = vst [vmem:[%s258 + $0xd0] sm:$0xff] %v3548
      %3581 = vst [vmem:[%s258 + $0xd8] sm:$0xff] %v3549
      %3582 = vst [vmem:[%s258 + $0xe0] sm:$0xff] %v3550
      %3583 = vst [vmem:[%s258 + $0xe8] sm:$0xff] %v3551
      %3584 = vst [vmem:[%s258 + $0xf0] sm:$0xff] %v3552
      %3585 = vst [vmem:[%s258 + $0xf8] sm:$0xff] %v3553
      %vm3586 = vcmask 7168
      %3587 = vst.msk [vmem:[%s263] sm:$0xff] %vm3586, %v3362
      %3588 = vst.msk [vmem:[%s263 + $0x8] sm:$0xff] %vm3586, %v3363
      %3589 = vst.msk [vmem:[%s263 + $0x10] sm:$0xff] %vm3586, %v3364
      %3590 = vst.msk [vmem:[%s263 + $0x18] sm:$0xff] %vm3586, %v3365
      %3591 = vst.msk [vmem:[%s263 + $0x20] sm:$0xff] %vm3586, %v3366
      %3592 = vst.msk [vmem:[%s263 + $0x28] sm:$0xff] %vm3586, %v3367
      %3593 = vst.msk [vmem:[%s263 + $0x30] sm:$0xff] %vm3586, %v3368
      %3594 = vst.msk [vmem:[%s263 + $0x38] sm:$0xff] %vm3586, %v3369
      %3595 = vst.msk [vmem:[%s263 + $0x40] sm:$0xff] %vm3586, %v3370
      %3596 = vst.msk [vmem:[%s263 + $0x48] sm:$0xff] %vm3586, %v3371
      %3597 = vst.msk [vmem:[%s263 + $0x50] sm:$0xff] %vm3586, %v3372
      %3598 = vst.msk [vmem:[%s263 + $0x58] sm:$0xff] %vm3586, %v3373
      %3599 = vst.msk [vmem:[%s263 + $0x60] sm:$0xff] %vm3586, %v3374
      %3600 = vst.msk [vmem:[%s263 + $0x68] sm:$0xff] %vm3586, %v3375
      %3601 = vst.msk [vmem:[%s263 + $0x70] sm:$0xff] %vm3586, %v3376
      %3602 = vst.msk [vmem:[%s263 + $0x78] sm:$0xff] %vm3586, %v3377
      %3603 = vst.msk [vmem:[%s263 + $0x80] sm:$0xff] %vm3586, %v3378
      %3604 = vst.msk [vmem:[%s263 + $0x88] sm:$0xff] %vm3586, %v3379
      %3605 = vst.msk [vmem:[%s263 + $0x90] sm:$0xff] %vm3586, %v3380
      %3606 = vst.msk [vmem:[%s263 + $0x98] sm:$0xff] %vm3586, %v3381
      %3607 = vst.msk [vmem:[%s263 + $0xa0] sm:$0xff] %vm3586, %v3382
      %3608 = vst.msk [vmem:[%s263 + $0xa8] sm:$0xff] %vm3586, %v3383
      %3609 = vst.msk [vmem:[%s263 + $0xb0] sm:$0xff] %vm3586, %v3384
      %3610 = vst.msk [vmem:[%s263 + $0xb8] sm:$0xff] %vm3586, %v3385
      %3611 = vst.msk [vmem:[%s263 + $0xc0] sm:$0xff] %vm3586, %v3386
      %3612 = vst.msk [vmem:[%s263 + $0xc8] sm:$0xff] %vm3586, %v3387
      %3613 = vst.msk [vmem:[%s263 + $0xd0] sm:$0xff] %vm3586, %v3388
      %3614 = vst.msk [vmem:[%s263 + $0xd8] sm:$0xff] %vm3586, %v3389
      %3615 = vst.msk [vmem:[%s263 + $0xe0] sm:$0xff] %vm3586, %v3390
      %3616 = vst.msk [vmem:[%s263 + $0xe8] sm:$0xff] %vm3586, %v3391
      %3617 = vst.msk [vmem:[%s263 + $0xf0] sm:$0xff] %vm3586, %v3392
      %3618 = vst.msk [vmem:[%s263 + $0xf8] sm:$0xff] %vm3586, %v3393
      %v3619 = vadd.f32 %v3522, %v3523
      %v3620 = vadd.f32 %v3619, %v3524
      %v3621 = vadd.f32 %v3620, %v3525
      %v3622 = vadd.f32 %v3621, %v3526
      %v3623 = vadd.f32 %v3622, %v3527
      %v3624 = vadd.f32 %v3623, %v3528
      %v3625 = vadd.f32 %v3624, %v3529
      %v3626 = vadd.f32 %v3625, %v3530
      %v3627 = vadd.f32 %v3626, %v3531
      %v3628 = vadd.f32 %v3627, %v3532
      %v3629 = vadd.f32 %v3628, %v3533
      %v3630 = vadd.f32 %v3629, %v3534
      %v3631 = vadd.f32 %v3630, %v3535
      %v3632 = vadd.f32 %v3631, %v3536
      %v3633 = vadd.f32 %v3632, %v3537
      %v3634 = vadd.f32 %v3633, %v3538
      %v3635 = vadd.f32 %v3634, %v3539
      %v3636 = vadd.f32 %v3635, %v3540
      %v3637 = vadd.f32 %v3636, %v3541
      %v3638 = vadd.f32 %v3637, %v3542
      %v3639 = vadd.f32 %v3638, %v3543
      %v3640 = vadd.f32 %v3639, %v3544
      %v3641 = vadd.f32 %v3640, %v3545
      %v3642 = vadd.f32 %v3641, %v3546
      %v3643 = vadd.f32 %v3642, %v3547
      %v3644 = vadd.f32 %v3643, %v3548
      %v3645 = vadd.f32 %v3644, %v3549
      %v3646 = vadd.f32 %v3645, %v3550
      %v3647 = vadd.f32 %v3646, %v3551
      %v3648 = vadd.f32 %v3647, %v3552
      %v3649 = vadd.f32 %v3648, %v3553
      %v3650 = vrot.slane %v3649, 4
      %v3651 = vadd.f32 %v3649, %v3650
      %v3652 = vrot.slane %v3651, 2
      %v3653 = vadd.f32 %v3651, %v3652
      %v3654 = vrot.slane %v3653, 1
      %v3655 = vadd.f32 %v3653, %v3654
      %v3656 = vmul.f32 %v3522, %v3522
      %v3657 = vmul.f32 %v3523, %v3523
      %v3658 = vmul.f32 %v3524, %v3524
      %v3659 = vmul.f32 %v3525, %v3525
      %v3660 = vmul.f32 %v3526, %v3526
      %v3661 = vmul.f32 %v3527, %v3527
      %v3662 = vmul.f32 %v3528, %v3528
      %v3663 = vmul.f32 %v3529, %v3529
      %v3664 = vmul.f32 %v3530, %v3530
      %v3665 = vmul.f32 %v3531, %v3531
      %v3666 = vmul.f32 %v3532, %v3532
      %v3667 = vmul.f32 %v3533, %v3533
      %v3668 = vmul.f32 %v3534, %v3534
      %v3669 = vmul.f32 %v3535, %v3535
      %v3670 = vmul.f32 %v3536, %v3536
      %v3671 = vmul.f32 %v3537, %v3537
      %v3672 = vmul.f32 %v3538, %v3538
      %v3673 = vmul.f32 %v3539, %v3539
      %v3674 = vmul.f32 %v3540, %v3540
      %v3675 = vmul.f32 %v3541, %v3541
      %v3676 = vmul.f32 %v3542, %v3542
      %v3677 = vmul.f32 %v3543, %v3543
      %v3678 = vmul.f32 %v3544, %v3544
      %v3679 = vmul.f32 %v3545, %v3545
      %v3680 = vmul.f32 %v3546, %v3546
      %v3681 = vmul.f32 %v3547, %v3547
      %v3682 = vmul.f32 %v3548, %v3548
      %v3683 = vmul.f32 %v3549, %v3549
      %v3684 = vmul.f32 %v3550, %v3550
      %v3685 = vmul.f32 %v3551, %v3551
      %v3686 = vmul.f32 %v3552, %v3552
      %v3687 = vmul.f32 %v3553, %v3553
      %v3688 = vadd.f32 %v3656, %v3657
      %v3689 = vadd.f32 %v3688, %v3658
      %v3690 = vadd.f32 %v3689, %v3659
      %v3691 = vadd.f32 %v3690, %v3660
      %v3692 = vadd.f32 %v3691, %v3661
      %v3693 = vadd.f32 %v3692, %v3662
      %v3694 = vadd.f32 %v3693, %v3663
      %v3695 = vadd.f32 %v3694, %v3664
      %v3696 = vadd.f32 %v3695, %v3665
      %v3697 = vadd.f32 %v3696, %v3666
      %v3698 = vadd.f32 %v3697, %v3667
      %v3699 = vadd.f32 %v3698, %v3668
      %v3700 = vadd.f32 %v3699, %v3669
      %v3701 = vadd.f32 %v3700, %v3670
      %v3702 = vadd.f32 %v3701, %v3671
      %v3703 = vadd.f32 %v3702, %v3672
      %v3704 = vadd.f32 %v3703, %v3673
      %v3705 = vadd.f32 %v3704, %v3674
      %v3706 = vadd.f32 %v3705, %v3675
      %v3707 = vadd.f32 %v3706, %v3676
      %v3708 = vadd.f32 %v3707, %v3677
      %v3709 = vadd.f32 %v3708, %v3678
      %v3710 = vadd.f32 %v3709, %v3679
      %v3711 = vadd.f32 %v3710, %v3680
      %v3712 = vadd.f32 %v3711, %v3681
      %v3713 = vadd.f32 %v3712, %v3682
      %v3714 = vadd.f32 %v3713, %v3683
      %v3715 = vadd.f32 %v3714, %v3684
      %v3716 = vadd.f32 %v3715, %v3685
      %v3717 = vadd.f32 %v3716, %v3686
      %v3718 = vadd.f32 %v3717, %v3687
      %v3719 = vrot.slane %v3718, 4
      %v3720 = vadd.f32 %v3718, %v3719
      %v3721 = vrot.slane %v3720, 2
      %v3722 = vadd.f32 %v3720, %v3721
      %v3723 = vrot.slane %v3722, 1
      %v3724 = vadd.f32 %v3722, %v3723
      %vm3725 = vcmask 1040384
      %v3726 = vsel %vm3725, %v3655, %v3724
      %v3727 = vsel %vm744, %v3726, 0.0
      %3728 = vst [vmem:[%s267] sm:$0xff] %v3727
      %p3729 = scmp.lt.s32.totalorder %s17, 1
      %s3730 = scalar_select %p3729, %s17, 1
      %s3731 = smul.addr %s3730, 32
      %s3732 = smul.addr %s3731, 8
      %s3733 = scalar_lea.vmem %s3, %s3732
      %p3734 = scmp.lt.s32.totalorder %s17, 1
      %s3735 = scalar_select %p3734, %s17, 1
      %s3736 = smul.addr %s3735, 32
      %s3737 = smul.addr %s3736, 8
      %s3738 = scalar_lea.vmem %s4, %s3737
      %p3739 = scmp.lt.s32.totalorder %s17, 1
      %s3740 = scalar_select %p3739, %s17, 1
      %s3741 = smul.addr %s3740, 8
      %s3742 = scalar_lea.vmem %s5, %s3741
      // Predicated region
      $region33: #{pconv_bn_activ.2} parent=31 // pred_check
        %p3743 = pneg %p108
      $region34: #{pconv_bn_activ.2} parent=31 // pred_check_branch
        %3745 = sbr.rel (%p3743) target = $region36
      $region35: #{pconv_bn_activ.2} parent=31 // pred_region
        _
      $region36: #{pconv_bn_activ.2} parent=31 // pred_fallthru
        _
      // Predicated region
      $region37: #{pconv_bn_activ.2} parent=31 // pred_check
        %p3746 = pneg %p134
      $region38: #{pconv_bn_activ.2} parent=31 // pred_check_branch
        %3748 = sbr.rel (%p3746) target = $region40
      $region39: #{pconv_bn_activ.2} parent=31 // pred_region
        _
      $region40: #{pconv_bn_activ.2} parent=31 // pred_fallthru
        _
      // Predicated region
      $region41: #{pconv_bn_activ.2} parent=31 // pred_check
        %p3749 = pneg %p160
      $region42: #{pconv_bn_activ.2} parent=31 // pred_check_branch
        %3751 = sbr.rel (%p3749) target = $region44
      $region43: #{pconv_bn_activ.2} parent=31 // pred_region
        _
      $region44: #{pconv_bn_activ.2} parent=31 // pred_fallthru
        _
    $region32: #{pconv_bn_activ.2} parent=5 // pred_fallthru
      _
    %p3752 = scmp.le.s32.totalorder 2, %s12
    // Predicated region
    $region45: #{pconv_bn_activ.2} parent=5 // pred_check
      %p3753 = pneg %p3752
    $region46: #{pconv_bn_activ.2} parent=5 // pred_check_branch
      %3755 = sbr.rel (%p3753) target = $region48
    $region47: #{pconv_bn_activ.2} parent=5 // pred_region
      %s3756 = ssub.s32 %s12, 2
      // Predicated region
      $region49: #{pconv_bn_activ.2} parent=47 // pred_check
        %p3757 = pneg %p114
      $region50: #{pconv_bn_activ.2} parent=47 // pred_check_branch
        %3759 = sbr.rel (%p3757) target = $region52
      $region51: #{pconv_bn_activ.2} parent=47 // pred_region
        %p3760 = scmp.lt.s32.totalorder %s18, 1
        %s3761 = scalar_select %p3760, %s18, 1
        %s3762 = smul.addr %s3761, 32
        %s3763 = smul.addr %s3762, 8
        %s3764 = scalar_lea.vmem %s3, %s3763
      $region52: #{pconv_bn_activ.2} parent=47 // pred_fallthru
        _
      // Predicated region
      $region53: #{pconv_bn_activ.2} parent=47 // pred_check
        %p3765 = pneg %p140
      $region54: #{pconv_bn_activ.2} parent=47 // pred_check_branch
        %3767 = sbr.rel (%p3765) target = $region56
      $region55: #{pconv_bn_activ.2} parent=47 // pred_region
        %p3768 = scmp.lt.s32.totalorder %s18, 1
        %s3769 = scalar_select %p3768, %s18, 1
        %s3770 = smul.addr %s3769, 32
        %s3771 = smul.addr %s3770, 8
        %s3772 = scalar_lea.vmem %s4, %s3771
      $region56: #{pconv_bn_activ.2} parent=47 // pred_fallthru
        _
      // Predicated region
      $region57: #{pconv_bn_activ.2} parent=47 // pred_check
        %p3773 = pneg %p166
      $region58: #{pconv_bn_activ.2} parent=47 // pred_check_branch
        %3775 = sbr.rel (%p3773) target = $region60
      $region59: #{pconv_bn_activ.2} parent=47 // pred_region
        %p3776 = scmp.lt.s32.totalorder %s18, 1
        %s3777 = scalar_select %p3776, %s18, 1
        %s3778 = smul.addr %s3777, 8
        %s3779 = scalar_lea.vmem %s5, %s3778
      $region60: #{pconv_bn_activ.2} parent=47 // pred_fallthru
        _
    $region48: #{pconv_bn_activ.2} parent=5 // pred_fallthru
      _
  $region6: #{pconv_bn_activ.2} parent=0 // loop_footer
    %s16 = sadd.s32 1, %s12
  $region7: #{pconv_bn_activ.2} parent=0 // loop_footer_branch
    %11 = sbr.rel target = $region3
  $region8: #{pconv_bn_activ.2} parent=0 // loop_exit
    _

</llo_original>
